<compile_context>
chip_gen: v7x
topology: tpu7x:2x2x1
jax: 0.10.0
libtpu: 0.0.40
codegen_flags: <defaults>
</compile_context>

<pallas_src>
import math

import jax
import jax.numpy as jnp
import numpy as np
from jax import lax
from jax.experimental import pallas as pl
from jax.experimental.pallas import tpu as pltpu

# Small, module-consistent sizes.
HEADS = 4
KD = 8                       # keys_dimension
VD = 8                       # values_dimension (== KD so concat width == model dim)
D = HEADS * KD               # model_dimension = 32
HID = 4 * D                  # feed-forward hidden = 128
N = 8                        # sequence length (decoder == encoder)
B = 4                        # batch of independent sequences (grid axis)
EPS = 1e-5


def decoder_layer_kernel(x_ref, enc_ref,
                         wq_ref, bq_ref, wk_ref, bk_ref, wv_ref, bv_ref,
                         wo_ref, bo_ref, w1_ref, b1_ref, w2_ref, b2_ref,
                         out_ref):
    x = x_ref[0]              # (N, D)
    enc = enc_ref[0]          # (N, D)

    wq = wq_ref[...]; bq = bq_ref[...]
    wk = wk_ref[...]; bk = bk_ref[...]
    wv = wv_ref[...]; bv = bv_ref[...]
    wo = wo_ref[...]; bo = bo_ref[...]

    # LookAheadMask (words=1, square scores): -1e9 at the bottom-right corner.
    # Built ONCE and shared by both attention calls (compile-time constant).
    row = lax.broadcasted_iota(jnp.int32, (N, N), 0)
    col = lax.broadcasted_iota(jnp.int32, (N, N), 1)
    neg_mask = jnp.where((row == N - 1) & (col == N - 1),
                         jnp.float32(-1e9), jnp.float32(0.0))[None]    # (1, N, N)

    inv_sqrt_kd = jnp.float32(1.0 / math.sqrt(KD))

    def mha(q_in, k_in, v_in):
        n, m = q_in.shape[0], k_in.shape[0]
        # Head-batched projections: one batched dot_general each (no per-head loop).
        qb = jnp.broadcast_to(q_in[None], (HEADS, n, D))
        kb = jnp.broadcast_to(k_in[None], (HEADS, m, D))
        vb = jnp.broadcast_to(v_in[None], (HEADS, m, D))
        q = jnp.einsum('hnd,hdk->hnk', qb, wq,
                       preferred_element_type=jnp.float32) + bq        # (H, n, KD)
        k = jnp.einsum('hmd,hdk->hmk', kb, wk,
                       preferred_element_type=jnp.float32) + bk        # (H, m, KD)
        v = jnp.einsum('hmd,hdv->hmv', vb, wv,
                       preferred_element_type=jnp.float32) + bv        # (H, m, VD)
        # All head scores with one batched matmul, then masked softmax (dim=1).
        s = jnp.einsum('hnk,hmk->hnm', q, k,
                       preferred_element_type=jnp.float32) * inv_sqrt_kd
        s = s + neg_mask
        s = s - jnp.max(s, axis=2, keepdims=True)
        p = jnp.exp(s)
        p = p * pl.reciprocal(jnp.sum(p, axis=2, keepdims=True), approx=True)
        o = jnp.einsum('hnm,hmv->hnv', p, v,
                       preferred_element_type=jnp.float32)             # (H, n, VD)
        # concat(heads) @ Wo  ==  sum_h head_h @ Wo[h]
        proj = jnp.einsum('hnv,hvd->hnd', o, wo,
                          preferred_element_type=jnp.float32)          # (H, n, D)
        return jnp.sum(proj, axis=0) + bo                              # (n, D)

    def full_layer_norm(t):
        # torch layer_norm with normalized_shape == t.shape (no affine, eps=1e-5).
        # Single pass over the tensor: var = E[t^2] - E[t]^2.
        inv_cnt = jnp.float32(1.0 / (t.shape[0] * t.shape[1]))
        mu = jnp.sum(t, keepdims=True) * inv_cnt                       # (1, 1)
        ex2 = jnp.sum(t * t, keepdims=True) * inv_cnt                  # (1, 1)
        var = ex2 - mu * mu
        return (t - mu) * lax.rsqrt(var + EPS)

    # Masked self-attention + add & norm
    a1 = full_layer_norm(mha(x, x, x) + x)
    # Cross attention (same shared, still-masked attention module) + add & norm
    a2 = full_layer_norm(mha(a1, enc, enc) + a1)
    # Feed-forward + add & norm
    h1 = jnp.maximum(jnp.dot(a2, w1_ref[...], preferred_element_type=jnp.float32)
                     + b1_ref[...], 0.0)
    r3 = jnp.dot(h1, w2_ref[...], preferred_element_type=jnp.float32) + b2_ref[...]
    out_ref[0] = full_layer_norm(r3 + a2)


def decoder_layer(x, enc, params):
    args = (x, enc,
            params["wq"], params["bq"], params["wk"], params["bk"],
            params["wv"], params["bv"], params["wo"], params["bo"],
            params["w1"], params["b1"], params["w2"], params["b2"])

    def seq_spec():
        return pl.BlockSpec((1, N, D), lambda b: (b, 0, 0))

    def resident(a):
        # Full-array block + constant index_map: weight stays resident in VMEM
        # across all batch grid steps (no re-DMA).
        if a.ndim == 2:
            return pl.BlockSpec(a.shape, lambda b: (0, 0))
        return pl.BlockSpec(a.shape, lambda b: (0, 0, 0))

    in_specs = [seq_spec(), seq_spec()] + [resident(a) for a in args[2:]]

    return pl.pallas_call(
        decoder_layer_kernel,
        out_shape=jax.ShapeDtypeStruct((x.shape[0], N, D), jnp.float32),
        grid_spec=pltpu.PrefetchScalarGridSpec(
            num_scalar_prefetch=0,
            grid=(x.shape[0],),
            in_specs=in_specs,
            out_specs=seq_spec(),
        ),
        compiler_params=pltpu.CompilerParams(
            dimension_semantics=("parallel",)),
    )(*args)


# ----------------------- pure-JAX reference (for checking) -----------------------
def reference_single(x, enc, p):
    def mha(q_in, k_in, v_in):
        n, m = q_in.shape[0], k_in.shape[0]
        mask = np.rot90(np.triu(np.ones((n, m), np.float32), n - 1), -1).copy()
        heads = []
        for h in range(HEADS):
            qh = q_in @ p["wq"][h] + p["bq"][h]
            kh = k_in @ p["wk"][h] + p["bk"][h]
            vh = v_in @ p["wv"][h] + p["bv"][h]
            s = qh @ kh.T / math.sqrt(KD) - 1e9 * mask
            s = s - jnp.max(s, axis=1, keepdims=True)
            pr = jnp.exp(s)
            pr = pr / jnp.sum(pr, axis=1, keepdims=True)
            heads.append(pr @ vh)
        concat = jnp.concatenate(heads, axis=1)                  # (n, H*VD)
        return concat @ p["wo"].reshape(HEADS * VD, D) + p["bo"]

    def ln(t):
        mu = jnp.mean(t)
        var = jnp.mean((t - mu) ** 2)
        return (t - mu) / jnp.sqrt(var + EPS)

    a1 = ln(mha(x, x, x) + x)
    a2 = ln(mha(a1, enc, enc) + a1)
    h1 = jnp.maximum(a2 @ p["w1"] + p["b1"], 0.0)
    r3 = h1 @ p["w2"] + p["b2"]
    return ln(r3 + a2)


if __name__ == "__main__":
    key = jax.random.PRNGKey(0)
    ks = jax.random.split(key, 16)

    def init(k, shape, scale=0.1):
        return (scale * jax.random.normal(k, shape)).astype(jnp.float32)

    params = dict(
        wq=init(ks[0], (HEADS, D, KD)),  bq=init(ks[1], (HEADS, 1, KD)),
        wk=init(ks[2], (HEADS, D, KD)),  bk=init(ks[3], (HEADS, 1, KD)),
        wv=init(ks[4], (HEADS, D, VD)),  bv=init(ks[5], (HEADS, 1, VD)),
        wo=init(ks[6], (HEADS, VD, D)),  bo=init(ks[7], (1, D)),
        w1=init(ks[8], (D, HID)),        b1=init(ks[9], (1, HID)),
        w2=init(ks[10], (HID, D)),       b2=init(ks[11], (1, D)),
    )
    x = init(ks[12], (B, N, D), scale=1.0)
    enc = init(ks[13], (B, N, D), scale=1.0)

    out = decoder_layer(x, enc, params)
    out = jax.block_until_ready(out)

    ref = jnp.stack([reference_single(x[b], enc[b], params) for b in range(B)])
    # approx=True reciprocal in the kernel softmax -> slightly looser tolerance
    # than exact-f32 agreement.
    np.testing.assert_allclose(np.asarray(out), np.asarray(ref), rtol=2e-3, atol=2e-3)

    print("KERNEL_OK")
</pallas_src>

<mosaic_0001>
module attributes {stable_mosaic.version = 11 : i64} {
  func.func @decoder_layer_kernel(%arg0: i32, %arg1: memref<1x8x32xf32, #tpu.memory_space<vmem>>, %arg2: memref<1x8x32xf32, #tpu.memory_space<vmem>>, %arg3: memref<4x32x8xf32, #tpu.memory_space<vmem>>, %arg4: memref<4x1x8xf32, #tpu.memory_space<vmem>>, %arg5: memref<4x32x8xf32, #tpu.memory_space<vmem>>, %arg6: memref<4x1x8xf32, #tpu.memory_space<vmem>>, %arg7: memref<4x32x8xf32, #tpu.memory_space<vmem>>, %arg8: memref<4x1x8xf32, #tpu.memory_space<vmem>>, %arg9: memref<4x8x32xf32, #tpu.memory_space<vmem>>, %arg10: memref<1x32xf32, #tpu.memory_space<vmem>>, %arg11: memref<32x128xf32, #tpu.memory_space<vmem>>, %arg12: memref<1x128xf32, #tpu.memory_space<vmem>>, %arg13: memref<128x32xf32, #tpu.memory_space<vmem>>, %arg14: memref<1x32xf32, #tpu.memory_space<vmem>>, %arg15: memref<1x8x32xf32, #tpu.memory_space<vmem>>) attributes {dimension_semantics = [#tpu.dimension_semantics<parallel>], iteration_bounds = array<i64: 4>, scalar_prefetch = 0 : i64, scratch_operands = 0 : i64, tpu.core_type = #tpu.core_type<tc>, window_params = [{transform_indices = @transform_0, window_bounds = array<i64: 1, 8, 32>}, {transform_indices = @transform_1, window_bounds = array<i64: 1, 8, 32>}, {pipeline_mode = #tpu.pipeline_mode<synchronous>, transform_indices = @transform_2, window_bounds = array<i64: 4, 32, 8>}, {pipeline_mode = #tpu.pipeline_mode<synchronous>, transform_indices = @transform_3, window_bounds = array<i64: 4, 1, 8>}, {pipeline_mode = #tpu.pipeline_mode<synchronous>, transform_indices = @transform_4, window_bounds = array<i64: 4, 32, 8>}, {pipeline_mode = #tpu.pipeline_mode<synchronous>, transform_indices = @transform_5, window_bounds = array<i64: 4, 1, 8>}, {pipeline_mode = #tpu.pipeline_mode<synchronous>, transform_indices = @transform_6, window_bounds = array<i64: 4, 32, 8>}, {pipeline_mode = #tpu.pipeline_mode<synchronous>, transform_indices = @transform_7, window_bounds = array<i64: 4, 1, 8>}, {pipeline_mode = #tpu.pipeline_mode<synchronous>, transform_indices = @transform_8, window_bounds = array<i64: 4, 8, 32>}, {pipeline_mode = #tpu.pipeline_mode<synchronous>, transform_indices = @transform_9, window_bounds = array<i64: 1, 32>}, {pipeline_mode = #tpu.pipeline_mode<synchronous>, transform_indices = @transform_10, window_bounds = array<i64: 32, 128>}, {pipeline_mode = #tpu.pipeline_mode<synchronous>, transform_indices = @transform_11, window_bounds = array<i64: 1, 128>}, {pipeline_mode = #tpu.pipeline_mode<synchronous>, transform_indices = @transform_12, window_bounds = array<i64: 128, 32>}, {pipeline_mode = #tpu.pipeline_mode<synchronous>, transform_indices = @transform_13, window_bounds = array<i64: 1, 32>}, {transform_indices = @transform_14, window_bounds = array<i64: 1, 8, 32>}]} {
    %c0 = arith.constant 0 : index
    %c0_0 = arith.constant 0 : index
    %c0_1 = arith.constant 0 : index
    %0 = vector.load %arg1[%c0, %c0_0, %c0_1] : memref<1x8x32xf32, #tpu.memory_space<vmem>>, vector<1x8x32xf32>
    %1 = vector.shape_cast %0 : vector<1x8x32xf32> to vector<8x32xf32>
    %c0_2 = arith.constant 0 : index
    %c0_3 = arith.constant 0 : index
    %c0_4 = arith.constant 0 : index
    %2 = vector.load %arg2[%c0_2, %c0_3, %c0_4] : memref<1x8x32xf32, #tpu.memory_space<vmem>>, vector<1x8x32xf32>
    %3 = vector.shape_cast %2 : vector<1x8x32xf32> to vector<8x32xf32>
    %c0_5 = arith.constant 0 : index
    %c0_6 = arith.constant 0 : index
    %c0_7 = arith.constant 0 : index
    %4 = vector.load %arg3[%c0_5, %c0_6, %c0_7] : memref<4x32x8xf32, #tpu.memory_space<vmem>>, vector<4x32x8xf32>
    %c0_8 = arith.constant 0 : index
    %c0_9 = arith.constant 0 : index
    %c0_10 = arith.constant 0 : index
    %5 = vector.load %arg4[%c0_8, %c0_9, %c0_10] : memref<4x1x8xf32, #tpu.memory_space<vmem>>, vector<4x1x8xf32>
    %c0_11 = arith.constant 0 : index
    %c0_12 = arith.constant 0 : index
    %c0_13 = arith.constant 0 : index
    %6 = vector.load %arg5[%c0_11, %c0_12, %c0_13] : memref<4x32x8xf32, #tpu.memory_space<vmem>>, vector<4x32x8xf32>
    %c0_14 = arith.constant 0 : index
    %c0_15 = arith.constant 0 : index
    %c0_16 = arith.constant 0 : index
    %7 = vector.load %arg6[%c0_14, %c0_15, %c0_16] : memref<4x1x8xf32, #tpu.memory_space<vmem>>, vector<4x1x8xf32>
    %c0_17 = arith.constant 0 : index
    %c0_18 = arith.constant 0 : index
    %c0_19 = arith.constant 0 : index
    %8 = vector.load %arg7[%c0_17, %c0_18, %c0_19] : memref<4x32x8xf32, #tpu.memory_space<vmem>>, vector<4x32x8xf32>
    %c0_20 = arith.constant 0 : index
    %c0_21 = arith.constant 0 : index
    %c0_22 = arith.constant 0 : index
    %9 = vector.load %arg8[%c0_20, %c0_21, %c0_22] : memref<4x1x8xf32, #tpu.memory_space<vmem>>, vector<4x1x8xf32>
    %c0_23 = arith.constant 0 : index
    %c0_24 = arith.constant 0 : index
    %c0_25 = arith.constant 0 : index
    %10 = vector.load %arg9[%c0_23, %c0_24, %c0_25] : memref<4x8x32xf32, #tpu.memory_space<vmem>>, vector<4x8x32xf32>
    %c0_26 = arith.constant 0 : index
    %c0_27 = arith.constant 0 : index
    %11 = vector.load %arg10[%c0_26, %c0_27] : memref<1x32xf32, #tpu.memory_space<vmem>>, vector<1x32xf32>
    %12 = tpu.iota {dimensions = array<i32: 0>} : vector<8x8xi32>
    %13 = tpu.iota {dimensions = array<i32: 1>} : vector<8x8xi32>
    %c7_i32 = arith.constant 7 : i32
    %14 = vector.broadcast %c7_i32 : i32 to vector<8x8xi32>
    %15 = arith.cmpi eq, %12, %14 : vector<8x8xi32>
    %c7_i32_28 = arith.constant 7 : i32
    %16 = vector.broadcast %c7_i32_28 : i32 to vector<8x8xi32>
    %17 = arith.cmpi eq, %13, %16 : vector<8x8xi32>
    %18 = arith.andi %15, %17 : vector<8x8xi1>
    %cst = arith.constant -1.000000e+09 : f32
    %cst_29 = arith.constant 0.000000e+00 : f32
    %19 = vector.broadcast %cst : f32 to vector<8x8xf32>
    %20 = vector.broadcast %cst_29 : f32 to vector<8x8xf32>
    %21 = arith.select %18, %19, %20 : vector<8x8xi1>, vector<8x8xf32>
    %22 = vector.shape_cast %21 : vector<8x8xf32> to vector<1x8x8xf32>
    %23 = vector.shape_cast %1 : vector<8x32xf32> to vector<1x8x32xf32>
    %24 = vector.shape_cast %23 : vector<1x8x32xf32> to vector<1x8x32xf32>
    %25 = vector.broadcast %24 : vector<1x8x32xf32> to vector<4x8x32xf32>
    %26 = vector.shape_cast %1 : vector<8x32xf32> to vector<1x8x32xf32>
    %27 = vector.shape_cast %26 : vector<1x8x32xf32> to vector<1x8x32xf32>
    %28 = vector.broadcast %27 : vector<1x8x32xf32> to vector<4x8x32xf32>
    %29 = vector.shape_cast %1 : vector<8x32xf32> to vector<1x8x32xf32>
    %30 = vector.shape_cast %29 : vector<1x8x32xf32> to vector<1x8x32xf32>
    %31 = vector.broadcast %30 : vector<1x8x32xf32> to vector<4x8x32xf32>
    "tpu.trace_start"() <{level = 10 : i32, message = "hnd,hdk->hnk"}> : () -> ()
    %cst_30 = arith.constant dense<0.000000e+00> : vector<4x8x8xf32>
    %32 = tpu.matmul %25, %4, %cst_30 {dimension_numbers = #tpu.dot_dimension_numbers<[2], [1], [1], [2], [0, 0, 0, 1, 1, 2], [0], [0]>} : vector<4x8x32xf32>, vector<4x32x8xf32>, vector<4x8x8xf32> -> vector<4x8x8xf32>
    "tpu.trace_stop"() : () -> ()
    %33 = vector.broadcast %5 : vector<4x1x8xf32> to vector<4x8x8xf32>
    %34 = arith.addf %32, %33 : vector<4x8x8xf32>
    "tpu.trace_start"() <{level = 10 : i32, message = "hmd,hdk->hmk"}> : () -> ()
    %cst_31 = arith.constant dense<0.000000e+00> : vector<4x8x8xf32>
    %35 = tpu.matmul %28, %6, %cst_31 {dimension_numbers = #tpu.dot_dimension_numbers<[2], [1], [1], [2], [0, 0, 0, 1, 1, 2], [0], [0]>} : vector<4x8x32xf32>, vector<4x32x8xf32>, vector<4x8x8xf32> -> vector<4x8x8xf32>
    "tpu.trace_stop"() : () -> ()
    %36 = vector.broadcast %7 : vector<4x1x8xf32> to vector<4x8x8xf32>
    %37 = arith.addf %35, %36 : vector<4x8x8xf32>
    "tpu.trace_start"() <{level = 10 : i32, message = "hmd,hdv->hmv"}> : () -> ()
    %cst_32 = arith.constant dense<0.000000e+00> : vector<4x8x8xf32>
    %38 = tpu.matmul %31, %8, %cst_32 {dimension_numbers = #tpu.dot_dimension_numbers<[2], [1], [1], [2], [0, 0, 0, 1, 1, 2], [0], [0]>} : vector<4x8x32xf32>, vector<4x32x8xf32>, vector<4x8x8xf32> -> vector<4x8x8xf32>
    "tpu.trace_stop"() : () -> ()
    %39 = vector.broadcast %9 : vector<4x1x8xf32> to vector<4x8x8xf32>
    %40 = arith.addf %38, %39 : vector<4x8x8xf32>
    "tpu.trace_start"() <{level = 10 : i32, message = "hnk,hmk->hnm"}> : () -> ()
    %cst_33 = arith.constant dense<0.000000e+00> : vector<4x8x8xf32>
    %41 = tpu.matmul %34, %37, %cst_33 {dimension_numbers = #tpu.dot_dimension_numbers<[2], [2], [1], [1], [0, 0, 0, 1, 1, 1], [0], [0]>} : vector<4x8x8xf32>, vector<4x8x8xf32>, vector<4x8x8xf32> -> vector<4x8x8xf32>
    "tpu.trace_stop"() : () -> ()
    %cst_34 = arith.constant 0.353553385 : f32
    %42 = vector.broadcast %cst_34 : f32 to vector<4x8x8xf32>
    %43 = arith.mulf %41, %42 : vector<4x8x8xf32>
    %44 = vector.broadcast %22 : vector<1x8x8xf32> to vector<4x8x8xf32>
    %45 = arith.addf %43, %44 : vector<4x8x8xf32>
    %cst_35 = arith.constant dense<0xFF800000> : vector<4x8xf32>
    %46 = vector.multi_reduction <maximumf>, %45, %cst_35 [2] : vector<4x8x8xf32> to vector<4x8xf32>
    %47 = vector.shape_cast %46 : vector<4x8xf32> to vector<4x8x1xf32>
    %48 = vector.broadcast %47 : vector<4x8x1xf32> to vector<4x8x8xf32>
    %49 = arith.subf %45, %48 : vector<4x8x8xf32>
    %50 = math.exp %49 : vector<4x8x8xf32>
    %cst_36 = arith.constant dense<0.000000e+00> : vector<4x8xf32>
    %51 = vector.multi_reduction <add>, %50, %cst_36 [2] : vector<4x8x8xf32> to vector<4x8xf32>
    %52 = vector.shape_cast %51 : vector<4x8xf32> to vector<4x8x1xf32>
    %53 = tpu.reciprocal %52 {approx = true} : vector<4x8x1xf32> -> vector<4x8x1xf32>
    %54 = vector.broadcast %53 : vector<4x8x1xf32> to vector<4x8x8xf32>
    %55 = arith.mulf %50, %54 : vector<4x8x8xf32>
    "tpu.trace_start"() <{level = 10 : i32, message = "hnm,hmv->hnv"}> : () -> ()
    %cst_37 = arith.constant dense<0.000000e+00> : vector<4x8x8xf32>
    %56 = tpu.matmul %55, %40, %cst_37 {dimension_numbers = #tpu.dot_dimension_numbers<[2], [1], [1], [2], [0, 0, 0, 1, 1, 2], [0], [0]>} : vector<4x8x8xf32>, vector<4x8x8xf32>, vector<4x8x8xf32> -> vector<4x8x8xf32>
    "tpu.trace_stop"() : () -> ()
    "tpu.trace_start"() <{level = 10 : i32, message = "hnv,hvd->hnd"}> : () -> ()
    %cst_38 = arith.constant dense<0.000000e+00> : vector<4x8x32xf32>
    %57 = tpu.matmul %56, %10, %cst_38 {dimension_numbers = #tpu.dot_dimension_numbers<[2], [1], [1], [2], [0, 0, 0, 1, 1, 2], [0], [0]>} : vector<4x8x8xf32>, vector<4x8x32xf32>, vector<4x8x32xf32> -> vector<4x8x32xf32>
    "tpu.trace_stop"() : () -> ()
    %cst_39 = arith.constant dense<0.000000e+00> : vector<8x32xf32>
    %58 = vector.multi_reduction <add>, %57, %cst_39 [0] : vector<4x8x32xf32> to vector<8x32xf32>
    %59 = vector.broadcast %11 : vector<1x32xf32> to vector<8x32xf32>
    %60 = arith.addf %58, %59 : vector<8x32xf32>
    %61 = arith.addf %60, %1 : vector<8x32xf32>
    %62 = vector.shape_cast %61 : vector<8x32xf32> to vector<1x8x32xf32>
    %cst_40 = arith.constant dense<0.000000e+00> : vector<1xf32>
    %63 = vector.multi_reduction <add>, %62, %cst_40 [1, 2] : vector<1x8x32xf32> to vector<1xf32>
    %64 = vector.shape_cast %63 : vector<1xf32> to vector<1x1x1xf32>
    %65 = vector.extract %64[0, 0, 0] : f32 from vector<1x1x1xf32>
    %66 = vector.broadcast %65 : f32 to vector<1x1xf32>
    %cst_41 = arith.constant 3.906250e-03 : f32
    %67 = vector.broadcast %cst_41 : f32 to vector<1x1xf32>
    %68 = arith.mulf %66, %67 : vector<1x1xf32>
    %69 = arith.mulf %61, %61 : vector<8x32xf32>
    %70 = vector.shape_cast %69 : vector<8x32xf32> to vector<1x8x32xf32>
    %cst_42 = arith.constant dense<0.000000e+00> : vector<1xf32>
    %71 = vector.multi_reduction <add>, %70, %cst_42 [1, 2] : vector<1x8x32xf32> to vector<1xf32>
    %72 = vector.shape_cast %71 : vector<1xf32> to vector<1x1x1xf32>
    %73 = vector.extract %72[0, 0, 0] : f32 from vector<1x1x1xf32>
    %74 = vector.broadcast %73 : f32 to vector<1x1xf32>
    %cst_43 = arith.constant 3.906250e-03 : f32
    %75 = vector.broadcast %cst_43 : f32 to vector<1x1xf32>
    %76 = arith.mulf %74, %75 : vector<1x1xf32>
    %77 = arith.mulf %68, %68 : vector<1x1xf32>
    %78 = arith.subf %76, %77 : vector<1x1xf32>
    %79 = vector.broadcast %68 : vector<1x1xf32> to vector<8x32xf32>
    %80 = arith.subf %61, %79 : vector<8x32xf32>
    %cst_44 = arith.constant 9.99999974E-6 : f32
    %81 = vector.broadcast %cst_44 : f32 to vector<1x1xf32>
    %82 = arith.addf %78, %81 : vector<1x1xf32>
    %83 = math.rsqrt %82 : vector<1x1xf32>
    %84 = vector.broadcast %83 : vector<1x1xf32> to vector<8x32xf32>
    %85 = arith.mulf %80, %84 : vector<8x32xf32>
    %86 = vector.shape_cast %85 : vector<8x32xf32> to vector<1x8x32xf32>
    %87 = vector.shape_cast %86 : vector<1x8x32xf32> to vector<1x8x32xf32>
    %88 = vector.broadcast %87 : vector<1x8x32xf32> to vector<4x8x32xf32>
    %89 = vector.shape_cast %3 : vector<8x32xf32> to vector<1x8x32xf32>
    %90 = vector.shape_cast %89 : vector<1x8x32xf32> to vector<1x8x32xf32>
    %91 = vector.broadcast %90 : vector<1x8x32xf32> to vector<4x8x32xf32>
    %92 = vector.shape_cast %3 : vector<8x32xf32> to vector<1x8x32xf32>
    %93 = vector.shape_cast %92 : vector<1x8x32xf32> to vector<1x8x32xf32>
    %94 = vector.broadcast %93 : vector<1x8x32xf32> to vector<4x8x32xf32>
    "tpu.trace_start"() <{level = 10 : i32, message = "hnd,hdk->hnk"}> : () -> ()
    %cst_45 = arith.constant dense<0.000000e+00> : vector<4x8x8xf32>
    %95 = tpu.matmul %88, %4, %cst_45 {dimension_numbers = #tpu.dot_dimension_numbers<[2], [1], [1], [2], [0, 0, 0, 1, 1, 2], [0], [0]>} : vector<4x8x32xf32>, vector<4x32x8xf32>, vector<4x8x8xf32> -> vector<4x8x8xf32>
    "tpu.trace_stop"() : () -> ()
    %96 = vector.broadcast %5 : vector<4x1x8xf32> to vector<4x8x8xf32>
    %97 = arith.addf %95, %96 : vector<4x8x8xf32>
    "tpu.trace_start"() <{level = 10 : i32, message = "hmd,hdk->hmk"}> : () -> ()
    %cst_46 = arith.constant dense<0.000000e+00> : vector<4x8x8xf32>
    %98 = tpu.matmul %91, %6, %cst_46 {dimension_numbers = #tpu.dot_dimension_numbers<[2], [1], [1], [2], [0, 0, 0, 1, 1, 2], [0], [0]>} : vector<4x8x32xf32>, vector<4x32x8xf32>, vector<4x8x8xf32> -> vector<4x8x8xf32>
    "tpu.trace_stop"() : () -> ()
    %99 = vector.broadcast %7 : vector<4x1x8xf32> to vector<4x8x8xf32>
    %100 = arith.addf %98, %99 : vector<4x8x8xf32>
    "tpu.trace_start"() <{level = 10 : i32, message = "hmd,hdv->hmv"}> : () -> ()
    %cst_47 = arith.constant dense<0.000000e+00> : vector<4x8x8xf32>
    %101 = tpu.matmul %94, %8, %cst_47 {dimension_numbers = #tpu.dot_dimension_numbers<[2], [1], [1], [2], [0, 0, 0, 1, 1, 2], [0], [0]>} : vector<4x8x32xf32>, vector<4x32x8xf32>, vector<4x8x8xf32> -> vector<4x8x8xf32>
    "tpu.trace_stop"() : () -> ()
    %102 = vector.broadcast %9 : vector<4x1x8xf32> to vector<4x8x8xf32>
    %103 = arith.addf %101, %102 : vector<4x8x8xf32>
    "tpu.trace_start"() <{level = 10 : i32, message = "hnk,hmk->hnm"}> : () -> ()
    %cst_48 = arith.constant dense<0.000000e+00> : vector<4x8x8xf32>
    %104 = tpu.matmul %97, %100, %cst_48 {dimension_numbers = #tpu.dot_dimension_numbers<[2], [2], [1], [1], [0, 0, 0, 1, 1, 1], [0], [0]>} : vector<4x8x8xf32>, vector<4x8x8xf32>, vector<4x8x8xf32> -> vector<4x8x8xf32>
    "tpu.trace_stop"() : () -> ()
    %cst_49 = arith.constant 0.353553385 : f32
    %105 = vector.broadcast %cst_49 : f32 to vector<4x8x8xf32>
    %106 = arith.mulf %104, %105 : vector<4x8x8xf32>
    %107 = vector.broadcast %22 : vector<1x8x8xf32> to vector<4x8x8xf32>
    %108 = arith.addf %106, %107 : vector<4x8x8xf32>
    %cst_50 = arith.constant dense<0xFF800000> : vector<4x8xf32>
    %109 = vector.multi_reduction <maximumf>, %108, %cst_50 [2] : vector<4x8x8xf32> to vector<4x8xf32>
    %110 = vector.shape_cast %109 : vector<4x8xf32> to vector<4x8x1xf32>
    %111 = vector.broadcast %110 : vector<4x8x1xf32> to vector<4x8x8xf32>
    %112 = arith.subf %108, %111 : vector<4x8x8xf32>
    %113 = math.exp %112 : vector<4x8x8xf32>
    %cst_51 = arith.constant dense<0.000000e+00> : vector<4x8xf32>
    %114 = vector.multi_reduction <add>, %113, %cst_51 [2] : vector<4x8x8xf32> to vector<4x8xf32>
    %115 = vector.shape_cast %114 : vector<4x8xf32> to vector<4x8x1xf32>
    %116 = tpu.reciprocal %115 {approx = true} : vector<4x8x1xf32> -> vector<4x8x1xf32>
    %117 = vector.broadcast %116 : vector<4x8x1xf32> to vector<4x8x8xf32>
    %118 = arith.mulf %113, %117 : vector<4x8x8xf32>
    "tpu.trace_start"() <{level = 10 : i32, message = "hnm,hmv->hnv"}> : () -> ()
    %cst_52 = arith.constant dense<0.000000e+00> : vector<4x8x8xf32>
    %119 = tpu.matmul %118, %103, %cst_52 {dimension_numbers = #tpu.dot_dimension_numbers<[2], [1], [1], [2], [0, 0, 0, 1, 1, 2], [0], [0]>} : vector<4x8x8xf32>, vector<4x8x8xf32>, vector<4x8x8xf32> -> vector<4x8x8xf32>
    "tpu.trace_stop"() : () -> ()
    "tpu.trace_start"() <{level = 10 : i32, message = "hnv,hvd->hnd"}> : () -> ()
    %cst_53 = arith.constant dense<0.000000e+00> : vector<4x8x32xf32>
    %120 = tpu.matmul %119, %10, %cst_53 {dimension_numbers = #tpu.dot_dimension_numbers<[2], [1], [1], [2], [0, 0, 0, 1, 1, 2], [0], [0]>} : vector<4x8x8xf32>, vector<4x8x32xf32>, vector<4x8x32xf32> -> vector<4x8x32xf32>
    "tpu.trace_stop"() : () -> ()
    %cst_54 = arith.constant dense<0.000000e+00> : vector<8x32xf32>
    %121 = vector.multi_reduction <add>, %120, %cst_54 [0] : vector<4x8x32xf32> to vector<8x32xf32>
    %122 = vector.broadcast %11 : vector<1x32xf32> to vector<8x32xf32>
    %123 = arith.addf %121, %122 : vector<8x32xf32>
    %124 = arith.addf %123, %85 : vector<8x32xf32>
    %125 = vector.shape_cast %124 : vector<8x32xf32> to vector<1x8x32xf32>
    %cst_55 = arith.constant dense<0.000000e+00> : vector<1xf32>
    %126 = vector.multi_reduction <add>, %125, %cst_55 [1, 2] : vector<1x8x32xf32> to vector<1xf32>
    %127 = vector.shape_cast %126 : vector<1xf32> to vector<1x1x1xf32>
    %128 = vector.extract %127[0, 0, 0] : f32 from vector<1x1x1xf32>
    %129 = vector.broadcast %128 : f32 to vector<1x1xf32>
    %cst_56 = arith.constant 3.906250e-03 : f32
    %130 = vector.broadcast %cst_56 : f32 to vector<1x1xf32>
    %131 = arith.mulf %129, %130 : vector<1x1xf32>
    %132 = arith.mulf %124, %124 : vector<8x32xf32>
    %133 = vector.shape_cast %132 : vector<8x32xf32> to vector<1x8x32xf32>
    %cst_57 = arith.constant dense<0.000000e+00> : vector<1xf32>
    %134 = vector.multi_reduction <add>, %133, %cst_57 [1, 2] : vector<1x8x32xf32> to vector<1xf32>
    %135 = vector.shape_cast %134 : vector<1xf32> to vector<1x1x1xf32>
    %136 = vector.extract %135[0, 0, 0] : f32 from vector<1x1x1xf32>
    %137 = vector.broadcast %136 : f32 to vector<1x1xf32>
    %cst_58 = arith.constant 3.906250e-03 : f32
    %138 = vector.broadcast %cst_58 : f32 to vector<1x1xf32>
    %139 = arith.mulf %137, %138 : vector<1x1xf32>
    %140 = arith.mulf %131, %131 : vector<1x1xf32>
    %141 = arith.subf %139, %140 : vector<1x1xf32>
    %142 = vector.broadcast %131 : vector<1x1xf32> to vector<8x32xf32>
    %143 = arith.subf %124, %142 : vector<8x32xf32>
    %cst_59 = arith.constant 9.99999974E-6 : f32
    %144 = vector.broadcast %cst_59 : f32 to vector<1x1xf32>
    %145 = arith.addf %141, %144 : vector<1x1xf32>
    %146 = math.rsqrt %145 : vector<1x1xf32>
    %147 = vector.broadcast %146 : vector<1x1xf32> to vector<8x32xf32>
    %148 = arith.mulf %143, %147 : vector<8x32xf32>
    %c0_60 = arith.constant 0 : index
    %c0_61 = arith.constant 0 : index
    %149 = vector.load %arg11[%c0_60, %c0_61] : memref<32x128xf32, #tpu.memory_space<vmem>>, vector<32x128xf32>
    %cst_62 = arith.constant dense<0.000000e+00> : vector<8x128xf32>
    %150 = tpu.matmul %148, %149, %cst_62 {dimension_numbers = #tpu.dot_dimension_numbers<[1], [0], [0], [1], [0, 0, 1, 1], [], []>} : vector<8x32xf32>, vector<32x128xf32>, vector<8x128xf32> -> vector<8x128xf32>
    %c0_63 = arith.constant 0 : index
    %c0_64 = arith.constant 0 : index
    %151 = vector.load %arg12[%c0_63, %c0_64] : memref<1x128xf32, #tpu.memory_space<vmem>>, vector<1x128xf32>
    %152 = vector.broadcast %151 : vector<1x128xf32> to vector<8x128xf32>
    %153 = arith.addf %150, %152 : vector<8x128xf32>
    %cst_65 = arith.constant 0.000000e+00 : f32
    %154 = vector.broadcast %cst_65 : f32 to vector<8x128xf32>
    %155 = arith.maximumf %153, %154 : vector<8x128xf32>
    %c0_66 = arith.constant 0 : index
    %c0_67 = arith.constant 0 : index
    %156 = vector.load %arg13[%c0_66, %c0_67] : memref<128x32xf32, #tpu.memory_space<vmem>>, vector<128x32xf32>
    %cst_68 = arith.constant dense<0.000000e+00> : vector<8x32xf32>
    %157 = tpu.matmul %155, %156, %cst_68 {dimension_numbers = #tpu.dot_dimension_numbers<[1], [0], [0], [1], [0, 0, 1, 1], [], []>} : vector<8x128xf32>, vector<128x32xf32>, vector<8x32xf32> -> vector<8x32xf32>
    %c0_69 = arith.constant 0 : index
    %c0_70 = arith.constant 0 : index
    %158 = vector.load %arg14[%c0_69, %c0_70] : memref<1x32xf32, #tpu.memory_space<vmem>>, vector<1x32xf32>
    %159 = vector.broadcast %158 : vector<1x32xf32> to vector<8x32xf32>
    %160 = arith.addf %157, %159 : vector<8x32xf32>
    %161 = arith.addf %160, %148 : vector<8x32xf32>
    %162 = vector.shape_cast %161 : vector<8x32xf32> to vector<1x8x32xf32>
    %cst_71 = arith.constant dense<0.000000e+00> : vector<1xf32>
    %163 = vector.multi_reduction <add>, %162, %cst_71 [1, 2] : vector<1x8x32xf32> to vector<1xf32>
    %164 = vector.shape_cast %163 : vector<1xf32> to vector<1x1x1xf32>
    %165 = vector.extract %164[0, 0, 0] : f32 from vector<1x1x1xf32>
    %166 = vector.broadcast %165 : f32 to vector<1x1xf32>
    %cst_72 = arith.constant 3.906250e-03 : f32
    %167 = vector.broadcast %cst_72 : f32 to vector<1x1xf32>
    %168 = arith.mulf %166, %167 : vector<1x1xf32>
    %169 = arith.mulf %161, %161 : vector<8x32xf32>
    %170 = vector.shape_cast %169 : vector<8x32xf32> to vector<1x8x32xf32>
    %cst_73 = arith.constant dense<0.000000e+00> : vector<1xf32>
    %171 = vector.multi_reduction <add>, %170, %cst_73 [1, 2] : vector<1x8x32xf32> to vector<1xf32>
    %172 = vector.shape_cast %171 : vector<1xf32> to vector<1x1x1xf32>
    %173 = vector.extract %172[0, 0, 0] : f32 from vector<1x1x1xf32>
    %174 = vector.broadcast %173 : f32 to vector<1x1xf32>
    %cst_74 = arith.constant 3.906250e-03 : f32
    %175 = vector.broadcast %cst_74 : f32 to vector<1x1xf32>
    %176 = arith.mulf %174, %175 : vector<1x1xf32>
    %177 = arith.mulf %168, %168 : vector<1x1xf32>
    %178 = arith.subf %176, %177 : vector<1x1xf32>
    %179 = vector.broadcast %168 : vector<1x1xf32> to vector<8x32xf32>
    %180 = arith.subf %161, %179 : vector<8x32xf32>
    %cst_75 = arith.constant 9.99999974E-6 : f32
    %181 = vector.broadcast %cst_75 : f32 to vector<1x1xf32>
    %182 = arith.addf %178, %181 : vector<1x1xf32>
    %183 = math.rsqrt %182 : vector<1x1xf32>
    %184 = vector.broadcast %183 : vector<1x1xf32> to vector<8x32xf32>
    %185 = arith.mulf %180, %184 : vector<8x32xf32>
    %c0_76 = arith.constant 0 : index
    %c0_77 = arith.constant 0 : index
    %c0_78 = arith.constant 0 : index
    %186 = vector.load %arg15[%c0_76, %c0_77, %c0_78] : memref<1x8x32xf32, #tpu.memory_space<vmem>>, vector<1x8x32xf32>
    %187 = vector.shape_cast %186 : vector<1x8x32xf32> to vector<8x32xf32>
    %188 = vector.shape_cast %185 : vector<8x32xf32> to vector<1x8x32xf32>
    tpu.vector_store %arg15[%c0_76, %c0_77, %c0_78], %188 {strides = array<i32>} : memref<1x8x32xf32, #tpu.memory_space<vmem>>, vector<1x8x32xf32>,
    return
  }
  func.func @transform_0(%arg0: i32) -> (i32, i32, i32) {
    %c0_i32 = arith.constant 0 : i32
    %c0_i32_0 = arith.constant 0 : i32
    %c0_i32_1 = arith.constant 0 : i32
    return %arg0, %c0_i32, %c0_i32_0 : i32, i32, i32
  }
  func.func @transform_1(%arg0: i32) -> (i32, i32, i32) {
    %c0_i32 = arith.constant 0 : i32
    %c0_i32_0 = arith.constant 0 : i32
    %c0_i32_1 = arith.constant 0 : i32
    return %arg0, %c0_i32, %c0_i32_0 : i32, i32, i32
  }
  func.func @transform_2(%arg0: i32) -> (i32, i32, i32) {
    %c0_i32 = arith.constant 0 : i32
    %c0_i32_0 = arith.constant 0 : i32
    %c0_i32_1 = arith.constant 0 : i32
    %c0_i32_2 = arith.constant 0 : i32
    return %c0_i32, %c0_i32_0, %c0_i32_1 : i32, i32, i32
  }
  func.func @transform_3(%arg0: i32) -> (i32, i32, i32) {
    %c0_i32 = arith.constant 0 : i32
    %c0_i32_0 = arith.constant 0 : i32
    %c0_i32_1 = arith.constant 0 : i32
    %c0_i32_2 = arith.constant 0 : i32
    return %c0_i32, %c0_i32_0, %c0_i32_1 : i32, i32, i32
  }
  func.func @transform_4(%arg0: i32) -> (i32, i32, i32) {
    %c0_i32 = arith.constant 0 : i32
    %c0_i32_0 = arith.constant 0 : i32
    %c0_i32_1 = arith.constant 0 : i32
    %c0_i32_2 = arith.constant 0 : i32
    return %c0_i32, %c0_i32_0, %c0_i32_1 : i32, i32, i32
  }
  func.func @transform_5(%arg0: i32) -> (i32, i32, i32) {
    %c0_i32 = arith.constant 0 : i32
    %c0_i32_0 = arith.constant 0 : i32
    %c0_i32_1 = arith.constant 0 : i32
    %c0_i32_2 = arith.constant 0 : i32
    return %c0_i32, %c0_i32_0, %c0_i32_1 : i32, i32, i32
  }
  func.func @transform_6(%arg0: i32) -> (i32, i32, i32) {
    %c0_i32 = arith.constant 0 : i32
    %c0_i32_0 = arith.constant 0 : i32
    %c0_i32_1 = arith.constant 0 : i32
    %c0_i32_2 = arith.constant 0 : i32
    return %c0_i32, %c0_i32_0, %c0_i32_1 : i32, i32, i32
  }
  func.func @transform_7(%arg0: i32) -> (i32, i32, i32) {
    %c0_i32 = arith.constant 0 : i32
    %c0_i32_0 = arith.constant 0 : i32
    %c0_i32_1 = arith.constant 0 : i32
    %c0_i32_2 = arith.constant 0 : i32
    return %c0_i32, %c0_i32_0, %c0_i32_1 : i32, i32, i32
  }
  func.func @transform_8(%arg0: i32) -> (i32, i32, i32) {
    %c0_i32 = arith.constant 0 : i32
    %c0_i32_0 = arith.constant 0 : i32
    %c0_i32_1 = arith.constant 0 : i32
    %c0_i32_2 = arith.constant 0 : i32
    return %c0_i32, %c0_i32_0, %c0_i32_1 : i32, i32, i32
  }
  func.func @transform_9(%arg0: i32) -> (i32, i32) {
    %c0_i32 = arith.constant 0 : i32
    %c0_i32_0 = arith.constant 0 : i32
    %c0_i32_1 = arith.constant 0 : i32
    return %c0_i32, %c0_i32_0 : i32, i32
  }
  func.func @transform_10(%arg0: i32) -> (i32, i32) {
    %c0_i32 = arith.constant 0 : i32
    %c0_i32_0 = arith.constant 0 : i32
    %c0_i32_1 = arith.constant 0 : i32
    return %c0_i32, %c0_i32_0 : i32, i32
  }
  func.func @transform_11(%arg0: i32) -> (i32, i32) {
    %c0_i32 = arith.constant 0 : i32
    %c0_i32_0 = arith.constant 0 : i32
    %c0_i32_1 = arith.constant 0 : i32
    return %c0_i32, %c0_i32_0 : i32, i32
  }
  func.func @transform_12(%arg0: i32) -> (i32, i32) {
    %c0_i32 = arith.constant 0 : i32
    %c0_i32_0 = arith.constant 0 : i32
    %c0_i32_1 = arith.constant 0 : i32
    return %c0_i32, %c0_i32_0 : i32, i32
  }
  func.func @transform_13(%arg0: i32) -> (i32, i32) {
    %c0_i32 = arith.constant 0 : i32
    %c0_i32_0 = arith.constant 0 : i32
    %c0_i32_1 = arith.constant 0 : i32
    return %c0_i32, %c0_i32_0 : i32, i32
  }
  func.func @transform_14(%arg0: i32) -> (i32, i32, i32) {
    %c0_i32 = arith.constant 0 : i32
    %c0_i32_0 = arith.constant 0 : i32
    %c0_i32_1 = arith.constant 0 : i32
    return %arg0, %c0_i32, %c0_i32_0 : i32, i32, i32
  }
}

</mosaic_0001>

<llo_original>
// kernel: tpu_custom_call.1
$region0: #{tpu_custom_call.1}
  #allocation0 [shape = 'u32[]', space=smem, size = 0x4, offset = 0x4, fixed_abs, tag = 'smem constant byte address 0x4 - core index']
  #allocation1 [shape = 'u32[144,128]{1,0:T(1,128)}', space=vmem, size = 0x12000, scoped, tag = 'internal scratch']
  %s0 = inlined_call_operand.vmem [shape: f32[4,8,32], index: 0, kind: input, shape index: {}]
  %s1 = inlined_call_operand.vmem [shape: f32[4,8,32], index: 1, kind: input, shape index: {}]
  %s2 = inlined_call_operand.vmem [shape: f32[4,32,8], index: 2, kind: input, shape index: {}]
  %s3 = inlined_call_operand.vmem [shape: f32[4,1,8], index: 3, kind: input, shape index: {}]
  %s4 = inlined_call_operand.vmem [shape: f32[4,32,8], index: 4, kind: input, shape index: {}]
  %s5 = inlined_call_operand.vmem [shape: f32[4,1,8], index: 5, kind: input, shape index: {}]
  %s6 = inlined_call_operand.vmem [shape: f32[4,32,8], index: 6, kind: input, shape index: {}]
  %s7 = inlined_call_operand.vmem [shape: f32[4,1,8], index: 7, kind: input, shape index: {}]
  %s8 = inlined_call_operand.vmem [shape: f32[4,8,32], index: 8, kind: input, shape index: {}]
  %s9 = inlined_call_operand.vmem [shape: f32[1,32], index: 9, kind: input, shape index: {}]
  %s10 = inlined_call_operand.vmem [shape: f32[32,128], index: 10, kind: input, shape index: {}]
  %s11 = inlined_call_operand.vmem [shape: f32[1,128], index: 11, kind: input, shape index: {}]
  %s12 = inlined_call_operand.vmem [shape: f32[128,32], index: 12, kind: input, shape index: {}]
  %s13 = inlined_call_operand.vmem [shape: f32[1,32], index: 13, kind: input, shape index: {}]
  %s14 = inlined_call_operand.hbm [shape: f32[4,8,32], index: 14, kind: output, shape index: {}]
  %s15 = sld [smem:[#allocation0]]
  $region89: #{tpu_custom_call.1} parent=0
    _
  %s17 = ssub.s32 1, %s15
  %s18 = scalar_select 0, %s17, %s15
  $region1: #{tpu_custom_call.1} parent=0
    #allocation2 [shape = 'u8[8192]{0}', space=vmem, size = 0x2000, scoped, tag = 'output window, operand 0']
    #allocation3 [shape = 's32[2]{0}', space=sflag, size = 0x8, scoped, tag = 'scoped memory for tpu_custom_call.1']
    %19 = vsyncpa [#allocation3], 0
    %s20 = scalar_lea.sflag [#allocation3], 1
    %21 = vsyncpa %s20, 0
    loop: start=0, step=1, limit=6
    $region2: #{tpu_custom_call.1} parent=1 // loop_pre_header
      _
    $region3: #{tpu_custom_call.1} parent=1 // loop_header
      %s23 = sphi 0, %s27
      %p24 = scmp.ge.s32.totalorder %s23, 6
      %s33 = sphi 0, %s35
      %s36 = sphi 0, %s33
      %s37 = sphi 0, %s36
      %s53 = sphi 0, %s37
      %s59 = sphi 0, %s61
      %s62 = sphi 0, %s59
      %s63 = sphi 0, %s62
      %s79 = sphi 0, %s63
      %s83 = sphi 0, %s83
      %s85 = sphi 0, %s83
      %s86 = sphi 0, %s85
      %s100 = sphi 0, %s86
      %s104 = sphi 0, %s104
      %s106 = sphi 0, %s104
      %s107 = sphi 0, %s106
      %s121 = sphi 0, %s107
      %s125 = sphi 0, %s125
      %s127 = sphi 0, %s125
      %s128 = sphi 0, %s127
      %s142 = sphi 0, %s128
      %s146 = sphi 0, %s146
      %s148 = sphi 0, %s146
      %s149 = sphi 0, %s148
      %s163 = sphi 0, %s149
      %s167 = sphi 0, %s167
      %s169 = sphi 0, %s167
      %s170 = sphi 0, %s169
      %s184 = sphi 0, %s170
      %s188 = sphi 0, %s188
      %s190 = sphi 0, %s188
      %s191 = sphi 0, %s190
      %s205 = sphi 0, %s191
      %s209 = sphi 0, %s209
      %s211 = sphi 0, %s209
      %s212 = sphi 0, %s211
      %s226 = sphi 0, %s212
      %s230 = sphi 0, %s230
      %s232 = sphi 0, %s230
      %s233 = sphi 0, %s232
      %s247 = sphi 0, %s233
      %s251 = sphi 0, %s251
      %s253 = sphi 0, %s251
      %s254 = sphi 0, %s253
      %s268 = sphi 0, %s254
      %s272 = sphi 0, %s272
      %s274 = sphi 0, %s272
      %s275 = sphi 0, %s274
      %s289 = sphi 0, %s275
      %s293 = sphi 0, %s293
      %s295 = sphi 0, %s293
      %s296 = sphi 0, %s295
      %s310 = sphi 0, %s296
      %s314 = sphi 0, %s314
      %s316 = sphi 0, %s314
      %s317 = sphi 0, %s316
      %s331 = sphi 0, %s317
      %s337 = sphi 0, %s339
      %s340 = sphi 0, %s337
      %s341 = sphi 0, %s340
      %s357 = sphi 0, %s341
    $region4: #{tpu_custom_call.1} parent=1 // loop_header_branch
      %26 = sbr.rel (%p24) target = $region8
    $region5: #{tpu_custom_call.1} parent=1 // loop_body
      %s28 = ssub.s32 %s23, 1
      %s29 = ssub.s32 %s23, 2
      %s30 = sadd.s32 %s23, 1
      %s31 = ssub.s32 %s23, %s30
      %p32 = scmp.eq.s32.totalorder %s31, 0
      %s34 = sadd.s32 %s33, 1
      %s35 = scalar_select %p32, %s33, %s34
      %p38 = pneg %p32
      %p39 = scmp.eq.s32.totalorder %s23, 3
      %p40 = por %p38, %p39
      %p41 = scmp.ne.s32.totalorder %s33, %s36
      %p42 = scmp.eq.s32.totalorder %s23, 0
      %p43 = por %p41, %p42
      %p44 = scmp.ne.s32.totalorder %s33, %s36
      %p45 = scmp.eq.s32.totalorder %s28, 3
      %p46 = por %p44, %p45
      %p47 = scmp.ne.s32.totalorder %s36, %s37
      %p48 = scmp.eq.s32.totalorder %s28, 0
      %p49 = por %p47, %p48
      %p50 = scmp.ne.s32.totalorder %s36, %s37
      %p51 = scmp.eq.s32.totalorder %s29, 3
      %p52 = por %p50, %p51
      %p54 = scmp.ne.s32.totalorder %s37, %s53
      %p55 = scmp.eq.s32.totalorder %s29, 0
      %p56 = por %p54, %p55
      %s57 = ssub.s32 %s23, %s30
      %p58 = scmp.eq.s32.totalorder %s57, 0
      %s60 = sadd.s32 %s59, 1
      %s61 = scalar_select %p58, %s59, %s60
      %p64 = pneg %p58
      %p65 = scmp.eq.s32.totalorder %s23, 3
      %p66 = por %p64, %p65
      %p67 = scmp.ne.s32.totalorder %s59, %s62
      %p68 = scmp.eq.s32.totalorder %s23, 0
      %p69 = por %p67, %p68
      %p70 = scmp.ne.s32.totalorder %s59, %s62
      %p71 = scmp.eq.s32.totalorder %s28, 3
      %p72 = por %p70, %p71
      %p73 = scmp.ne.s32.totalorder %s62, %s63
      %p74 = scmp.eq.s32.totalorder %s28, 0
      %p75 = por %p73, %p74
      %p76 = scmp.ne.s32.totalorder %s62, %s63
      %p77 = scmp.eq.s32.totalorder %s29, 3
      %p78 = por %p76, %p77
      %p80 = scmp.ne.s32.totalorder %s63, %s79
      %p81 = scmp.eq.s32.totalorder %s29, 0
      %p82 = por %p80, %p81
      %s84 = sadd.s32 %s83, 1
      %p87 = scmp.eq.s32.totalorder %s23, 3
      %p88 = scmp.ne.s32.totalorder %s83, %s85
      %p89 = scmp.eq.s32.totalorder %s23, 0
      %p90 = por %p88, %p89
      %p91 = scmp.ne.s32.totalorder %s83, %s85
      %p92 = scmp.eq.s32.totalorder %s28, 3
      %p93 = por %p91, %p92
      %p94 = scmp.ne.s32.totalorder %s85, %s86
      %p95 = scmp.eq.s32.totalorder %s28, 0
      %p96 = por %p94, %p95
      %p97 = scmp.ne.s32.totalorder %s85, %s86
      %p98 = scmp.eq.s32.totalorder %s29, 3
      %p99 = por %p97, %p98
      %p101 = scmp.ne.s32.totalorder %s86, %s100
      %p102 = scmp.eq.s32.totalorder %s29, 0
      %p103 = por %p101, %p102
      %s105 = sadd.s32 %s104, 1
      %p108 = scmp.eq.s32.totalorder %s23, 3
      %p109 = scmp.ne.s32.totalorder %s104, %s106
      %p110 = scmp.eq.s32.totalorder %s23, 0
      %p111 = por %p109, %p110
      %p112 = scmp.ne.s32.totalorder %s104, %s106
      %p113 = scmp.eq.s32.totalorder %s28, 3
      %p114 = por %p112, %p113
      %p115 = scmp.ne.s32.totalorder %s106, %s107
      %p116 = scmp.eq.s32.totalorder %s28, 0
      %p117 = por %p115, %p116
      %p118 = scmp.ne.s32.totalorder %s106, %s107
      %p119 = scmp.eq.s32.totalorder %s29, 3
      %p120 = por %p118, %p119
      %p122 = scmp.ne.s32.totalorder %s107, %s121
      %p123 = scmp.eq.s32.totalorder %s29, 0
      %p124 = por %p122, %p123
      %s126 = sadd.s32 %s125, 1
      %p129 = scmp.eq.s32.totalorder %s23, 3
      %p130 = scmp.ne.s32.totalorder %s125, %s127
      %p131 = scmp.eq.s32.totalorder %s23, 0
      %p132 = por %p130, %p131
      %p133 = scmp.ne.s32.totalorder %s125, %s127
      %p134 = scmp.eq.s32.totalorder %s28, 3
      %p135 = por %p133, %p134
      %p136 = scmp.ne.s32.totalorder %s127, %s128
      %p137 = scmp.eq.s32.totalorder %s28, 0
      %p138 = por %p136, %p137
      %p139 = scmp.ne.s32.totalorder %s127, %s128
      %p140 = scmp.eq.s32.totalorder %s29, 3
      %p141 = por %p139, %p140
      %p143 = scmp.ne.s32.totalorder %s128, %s142
      %p144 = scmp.eq.s32.totalorder %s29, 0
      %p145 = por %p143, %p144
      %s147 = sadd.s32 %s146, 1
      %p150 = scmp.eq.s32.totalorder %s23, 3
      %p151 = scmp.ne.s32.totalorder %s146, %s148
      %p152 = scmp.eq.s32.totalorder %s23, 0
      %p153 = por %p151, %p152
      %p154 = scmp.ne.s32.totalorder %s146, %s148
      %p155 = scmp.eq.s32.totalorder %s28, 3
      %p156 = por %p154, %p155
      %p157 = scmp.ne.s32.totalorder %s148, %s149
      %p158 = scmp.eq.s32.totalorder %s28, 0
      %p159 = por %p157, %p158
      %p160 = scmp.ne.s32.totalorder %s148, %s149
      %p161 = scmp.eq.s32.totalorder %s29, 3
      %p162 = por %p160, %p161
      %p164 = scmp.ne.s32.totalorder %s149, %s163
      %p165 = scmp.eq.s32.totalorder %s29, 0
      %p166 = por %p164, %p165
      %s168 = sadd.s32 %s167, 1
      %p171 = scmp.eq.s32.totalorder %s23, 3
      %p172 = scmp.ne.s32.totalorder %s167, %s169
      %p173 = scmp.eq.s32.totalorder %s23, 0
      %p174 = por %p172, %p173
      %p175 = scmp.ne.s32.totalorder %s167, %s169
      %p176 = scmp.eq.s32.totalorder %s28, 3
      %p177 = por %p175, %p176
      %p178 = scmp.ne.s32.totalorder %s169, %s170
      %p179 = scmp.eq.s32.totalorder %s28, 0
      %p180 = por %p178, %p179
      %p181 = scmp.ne.s32.totalorder %s169, %s170
      %p182 = scmp.eq.s32.totalorder %s29, 3
      %p183 = por %p181, %p182
      %p185 = scmp.ne.s32.totalorder %s170, %s184
      %p186 = scmp.eq.s32.totalorder %s29, 0
      %p187 = por %p185, %p186
      %s189 = sadd.s32 %s188, 1
      %p192 = scmp.eq.s32.totalorder %s23, 3
      %p193 = scmp.ne.s32.totalorder %s188, %s190
      %p194 = scmp.eq.s32.totalorder %s23, 0
      %p195 = por %p193, %p194
      %p196 = scmp.ne.s32.totalorder %s188, %s190
      %p197 = scmp.eq.s32.totalorder %s28, 3
      %p198 = por %p196, %p197
      %p199 = scmp.ne.s32.totalorder %s190, %s191
      %p200 = scmp.eq.s32.totalorder %s28, 0
      %p201 = por %p199, %p200
      %p202 = scmp.ne.s32.totalorder %s190, %s191
      %p203 = scmp.eq.s32.totalorder %s29, 3
      %p204 = por %p202, %p203
      %p206 = scmp.ne.s32.totalorder %s191, %s205
      %p207 = scmp.eq.s32.totalorder %s29, 0
      %p208 = por %p206, %p207
      %s210 = sadd.s32 %s209, 1
      %p213 = scmp.eq.s32.totalorder %s23, 3
      %p214 = scmp.ne.s32.totalorder %s209, %s211
      %p215 = scmp.eq.s32.totalorder %s23, 0
      %p216 = por %p214, %p215
      %p217 = scmp.ne.s32.totalorder %s209, %s211
      %p218 = scmp.eq.s32.totalorder %s28, 3
      %p219 = por %p217, %p218
      %p220 = scmp.ne.s32.totalorder %s211, %s212
      %p221 = scmp.eq.s32.totalorder %s28, 0
      %p222 = por %p220, %p221
      %p223 = scmp.ne.s32.totalorder %s211, %s212
      %p224 = scmp.eq.s32.totalorder %s29, 3
      %p225 = por %p223, %p224
      %p227 = scmp.ne.s32.totalorder %s212, %s226
      %p228 = scmp.eq.s32.totalorder %s29, 0
      %p229 = por %p227, %p228
      %s231 = sadd.s32 %s230, 1
      %p234 = scmp.eq.s32.totalorder %s23, 3
      %p235 = scmp.ne.s32.totalorder %s230, %s232
      %p236 = scmp.eq.s32.totalorder %s23, 0
      %p237 = por %p235, %p236
      %p238 = scmp.ne.s32.totalorder %s230, %s232
      %p239 = scmp.eq.s32.totalorder %s28, 3
      %p240 = por %p238, %p239
      %p241 = scmp.ne.s32.totalorder %s232, %s233
      %p242 = scmp.eq.s32.totalorder %s28, 0
      %p243 = por %p241, %p242
      %p244 = scmp.ne.s32.totalorder %s232, %s233
      %p245 = scmp.eq.s32.totalorder %s29, 3
      %p246 = por %p244, %p245
      %p248 = scmp.ne.s32.totalorder %s233, %s247
      %p249 = scmp.eq.s32.totalorder %s29, 0
      %p250 = por %p248, %p249
      %s252 = sadd.s32 %s251, 1
      %p255 = scmp.eq.s32.totalorder %s23, 3
      %p256 = scmp.ne.s32.totalorder %s251, %s253
      %p257 = scmp.eq.s32.totalorder %s23, 0
      %p258 = por %p256, %p257
      %p259 = scmp.ne.s32.totalorder %s251, %s253
      %p260 = scmp.eq.s32.totalorder %s28, 3
      %p261 = por %p259, %p260
      %p262 = scmp.ne.s32.totalorder %s253, %s254
      %p263 = scmp.eq.s32.totalorder %s28, 0
      %p264 = por %p262, %p263
      %p265 = scmp.ne.s32.totalorder %s253, %s254
      %p266 = scmp.eq.s32.totalorder %s29, 3
      %p267 = por %p265, %p266
      %p269 = scmp.ne.s32.totalorder %s254, %s268
      %p270 = scmp.eq.s32.totalorder %s29, 0
      %p271 = por %p269, %p270
      %s273 = sadd.s32 %s272, 1
      %p276 = scmp.eq.s32.totalorder %s23, 3
      %p277 = scmp.ne.s32.totalorder %s272, %s274
      %p278 = scmp.eq.s32.totalorder %s23, 0
      %p279 = por %p277, %p278
      %p280 = scmp.ne.s32.totalorder %s272, %s274
      %p281 = scmp.eq.s32.totalorder %s28, 3
      %p282 = por %p280, %p281
      %p283 = scmp.ne.s32.totalorder %s274, %s275
      %p284 = scmp.eq.s32.totalorder %s28, 0
      %p285 = por %p283, %p284
      %p286 = scmp.ne.s32.totalorder %s274, %s275
      %p287 = scmp.eq.s32.totalorder %s29, 3
      %p288 = por %p286, %p287
      %p290 = scmp.ne.s32.totalorder %s275, %s289
      %p291 = scmp.eq.s32.totalorder %s29, 0
      %p292 = por %p290, %p291
      %s294 = sadd.s32 %s293, 1
      %p297 = scmp.eq.s32.totalorder %s23, 3
      %p298 = scmp.ne.s32.totalorder %s293, %s295
      %p299 = scmp.eq.s32.totalorder %s23, 0
      %p300 = por %p298, %p299
      %p301 = scmp.ne.s32.totalorder %s293, %s295
      %p302 = scmp.eq.s32.totalorder %s28, 3
      %p303 = por %p301, %p302
      %p304 = scmp.ne.s32.totalorder %s295, %s296
      %p305 = scmp.eq.s32.totalorder %s28, 0
      %p306 = por %p304, %p305
      %p307 = scmp.ne.s32.totalorder %s295, %s296
      %p308 = scmp.eq.s32.totalorder %s29, 3
      %p309 = por %p307, %p308
      %p311 = scmp.ne.s32.totalorder %s296, %s310
      %p312 = scmp.eq.s32.totalorder %s29, 0
      %p313 = por %p311, %p312
      %s315 = sadd.s32 %s314, 1
      %p318 = scmp.eq.s32.totalorder %s23, 3
      %p319 = scmp.ne.s32.totalorder %s314, %s316
      %p320 = scmp.eq.s32.totalorder %s23, 0
      %p321 = por %p319, %p320
      %p322 = scmp.ne.s32.totalorder %s314, %s316
      %p323 = scmp.eq.s32.totalorder %s28, 3
      %p324 = por %p322, %p323
      %p325 = scmp.ne.s32.totalorder %s316, %s317
      %p326 = scmp.eq.s32.totalorder %s28, 0
      %p327 = por %p325, %p326
      %p328 = scmp.ne.s32.totalorder %s316, %s317
      %p329 = scmp.eq.s32.totalorder %s29, 3
      %p330 = por %p328, %p329
      %p332 = scmp.ne.s32.totalorder %s317, %s331
      %p333 = scmp.eq.s32.totalorder %s29, 0
      %p334 = por %p332, %p333
      %s335 = ssub.s32 %s23, %s30
      %p336 = scmp.eq.s32.totalorder %s335, 0
      %s338 = sadd.s32 %s337, 1
      %s339 = scalar_select %p336, %s337, %s338
      %p342 = pneg %p336
      %p343 = scmp.eq.s32.totalorder %s23, 3
      %p344 = por %p342, %p343
      %p345 = scmp.ne.s32.totalorder %s337, %s340
      %p346 = scmp.eq.s32.totalorder %s23, 0
      %p347 = por %p345, %p346
      %p348 = scmp.ne.s32.totalorder %s337, %s340
      %p349 = scmp.eq.s32.totalorder %s28, 3
      %p350 = por %p348, %p349
      %p351 = scmp.ne.s32.totalorder %s340, %s341
      %p352 = scmp.eq.s32.totalorder %s28, 0
      %p353 = por %p351, %p352
      %p354 = scmp.ne.s32.totalorder %s340, %s341
      %p355 = scmp.eq.s32.totalorder %s29, 3
      %p356 = por %p354, %p355
      %p358 = scmp.ne.s32.totalorder %s341, %s357
      %p359 = scmp.eq.s32.totalorder %s29, 0
      %p360 = por %p358, %p359
      %p361 = scmp.le.s32.totalorder 1, %s23
      %p362 = scmp.lt.s32.totalorder %s23, 5
      %p363 = pnand %p361, %p362
      %p364 = pneg %p363
      // Predicated region
      $region9: #{tpu_custom_call.1} parent=5 // pred_check
        _
      $region10: #{tpu_custom_call.1} parent=5 // pred_check_branch
        %366 = sbr.rel (%p363) target = $region12
      $region11: #{tpu_custom_call.1} parent=5 // pred_region
        %s367 = ssub.s32 %s23, 1
        // Predicated region
        $region13: #{tpu_custom_call.1} parent=11 // pred_check
          %p368 = pneg %p96
        $region14: #{tpu_custom_call.1} parent=11 // pred_check_branch
          %370 = sbr.rel (%p368) target = $region16
        $region15: #{tpu_custom_call.1} parent=11 // pred_region
          _
        $region16: #{tpu_custom_call.1} parent=11 // pred_fallthru
          _
        // Predicated region
        $region17: #{tpu_custom_call.1} parent=11 // pred_check
          %p371 = pneg %p117
        $region18: #{tpu_custom_call.1} parent=11 // pred_check_branch
          %373 = sbr.rel (%p371) target = $region20
        $region19: #{tpu_custom_call.1} parent=11 // pred_region
          _
        $region20: #{tpu_custom_call.1} parent=11 // pred_fallthru
          _
        // Predicated region
        $region21: #{tpu_custom_call.1} parent=11 // pred_check
          %p374 = pneg %p138
        $region22: #{tpu_custom_call.1} parent=11 // pred_check_branch
          %376 = sbr.rel (%p374) target = $region24
        $region23: #{tpu_custom_call.1} parent=11 // pred_region
          _
        $region24: #{tpu_custom_call.1} parent=11 // pred_fallthru
          _
        // Predicated region
        $region25: #{tpu_custom_call.1} parent=11 // pred_check
          %p377 = pneg %p159
        $region26: #{tpu_custom_call.1} parent=11 // pred_check_branch
          %379 = sbr.rel (%p377) target = $region28
        $region27: #{tpu_custom_call.1} parent=11 // pred_region
          _
        $region28: #{tpu_custom_call.1} parent=11 // pred_fallthru
          _
        // Predicated region
        $region29: #{tpu_custom_call.1} parent=11 // pred_check
          %p380 = pneg %p180
        $region30: #{tpu_custom_call.1} parent=11 // pred_check_branch
          %382 = sbr.rel (%p380) target = $region32
        $region31: #{tpu_custom_call.1} parent=11 // pred_region
          _
        $region32: #{tpu_custom_call.1} parent=11 // pred_fallthru
          _
        // Predicated region
        $region33: #{tpu_custom_call.1} parent=11 // pred_check
          %p383 = pneg %p201
        $region34: #{tpu_custom_call.1} parent=11 // pred_check_branch
          %385 = sbr.rel (%p383) target = $region36
        $region35: #{tpu_custom_call.1} parent=11 // pred_region
          _
        $region36: #{tpu_custom_call.1} parent=11 // pred_fallthru
          _
        // Predicated region
        $region37: #{tpu_custom_call.1} parent=11 // pred_check
          %p386 = pneg %p222
        $region38: #{tpu_custom_call.1} parent=11 // pred_check_branch
          %388 = sbr.rel (%p386) target = $region40
        $region39: #{tpu_custom_call.1} parent=11 // pred_region
          _
        $region40: #{tpu_custom_call.1} parent=11 // pred_fallthru
          _
        // Predicated region
        $region41: #{tpu_custom_call.1} parent=11 // pred_check
          %p389 = pneg %p243
        $region42: #{tpu_custom_call.1} parent=11 // pred_check_branch
          %391 = sbr.rel (%p389) target = $region44
        $region43: #{tpu_custom_call.1} parent=11 // pred_region
          _
        $region44: #{tpu_custom_call.1} parent=11 // pred_fallthru
          _
        // Predicated region
        $region45: #{tpu_custom_call.1} parent=11 // pred_check
          %p392 = pneg %p264
        $region46: #{tpu_custom_call.1} parent=11 // pred_check_branch
          %394 = sbr.rel (%p392) target = $region48
        $region47: #{tpu_custom_call.1} parent=11 // pred_region
          _
        $region48: #{tpu_custom_call.1} parent=11 // pred_fallthru
          _
        // Predicated region
        $region49: #{tpu_custom_call.1} parent=11 // pred_check
          %p395 = pneg %p285
        $region50: #{tpu_custom_call.1} parent=11 // pred_check_branch
          %397 = sbr.rel (%p395) target = $region52
        $region51: #{tpu_custom_call.1} parent=11 // pred_region
          _
        $region52: #{tpu_custom_call.1} parent=11 // pred_fallthru
          _
        // Predicated region
        $region53: #{tpu_custom_call.1} parent=11 // pred_check
          %p398 = pneg %p306
        $region54: #{tpu_custom_call.1} parent=11 // pred_check_branch
          %400 = sbr.rel (%p398) target = $region56
        $region55: #{tpu_custom_call.1} parent=11 // pred_region
          _
        $region56: #{tpu_custom_call.1} parent=11 // pred_fallthru
          _
        // Predicated region
        $region57: #{tpu_custom_call.1} parent=11 // pred_check
          %p401 = pneg %p327
        $region58: #{tpu_custom_call.1} parent=11 // pred_check_branch
          %403 = sbr.rel (%p401) target = $region60
        $region59: #{tpu_custom_call.1} parent=11 // pred_region
          _
        $region60: #{tpu_custom_call.1} parent=11 // pred_fallthru
          _
      $region12: #{tpu_custom_call.1} parent=5 // pred_fallthru
        _
      %p404 = scmp.lt.s32.totalorder %s23, 4
      // Predicated region
      $region61: #{tpu_custom_call.1} parent=5 // pred_check
        %p405 = pneg %p404
      $region62: #{tpu_custom_call.1} parent=5 // pred_check_branch
        %407 = sbr.rel (%p405) target = $region64
      $region63: #{tpu_custom_call.1} parent=5 // pred_region
        // Predicated region
        $region65: #{tpu_custom_call.1} parent=63 // pred_check
          %p408 = pneg %p43
        $region66: #{tpu_custom_call.1} parent=63 // pred_check_branch
          %410 = sbr.rel (%p408) target = $region68
        $region67: #{tpu_custom_call.1} parent=63 // pred_region
          %p411 = scmp.lt.s32.totalorder %s23, 3
          %s412 = scalar_select %p411, %s23, 3
          %s413 = smul.addr %s412, 8
          %s414 = scalar_lea.vmem %s0, %s413
        $region68: #{tpu_custom_call.1} parent=63 // pred_fallthru
          _
        // Predicated region
        $region69: #{tpu_custom_call.1} parent=63 // pred_check
          %p415 = pneg %p69
        $region70: #{tpu_custom_call.1} parent=63 // pred_check_branch
          %417 = sbr.rel (%p415) target = $region72
        $region71: #{tpu_custom_call.1} parent=63 // pred_region
          %p418 = scmp.lt.s32.totalorder %s23, 3
          %s419 = scalar_select %p418, %s23, 3
          %s420 = smul.addr %s419, 8
          %s421 = scalar_lea.vmem %s1, %s420
        $region72: #{tpu_custom_call.1} parent=63 // pred_fallthru
          _
      $region64: #{tpu_custom_call.1} parent=5 // pred_fallthru
        _
      %p422 = scmp.le.s32.totalorder 1, %s23
      %p423 = scmp.lt.s32.totalorder %s23, 5
      %p424 = pnand %p422, %p423
      %p425 = pneg %p424
      // Predicated region
      $region73: #{tpu_custom_call.1} parent=5 // pred_check
        _
      $region74: #{tpu_custom_call.1} parent=5 // pred_check_branch
        %427 = sbr.rel (%p424) target = $region76
      $region75: #{tpu_custom_call.1} parent=5 // pred_region
        %s428 = ssub.s32 %s23, 1
        %p429 = scmp.lt.s32.totalorder %s28, 3
        %s430 = scalar_select %p429, %s28, 3
        %s431 = smul.addr %s430, 8
        %s432 = scalar_lea.vmem %s0, %s431
        %p433 = pneg %p49
        %p434 = pneg %p46
        %p435 = scmp.lt.s32.totalorder %s28, 3
        %s436 = scalar_select %p435, %s28, 3
        %s437 = smul.addr %s436, 8
        %s438 = scalar_lea.vmem %s1, %s437
        %p439 = pneg %p75
        %p440 = pneg %p72
        %p441 = pneg %p96
        %p442 = pneg %p93
        %p443 = pneg %p117
        %p444 = pneg %p114
        %p445 = pneg %p138
        %p446 = pneg %p135
        %p447 = pneg %p159
        %p448 = pneg %p156
        %p449 = pneg %p180
        %p450 = pneg %p177
        %p451 = pneg %p201
        %p452 = pneg %p198
        %p453 = pneg %p222
        %p454 = pneg %p219
        %p455 = pneg %p243
        %p456 = pneg %p240
        %p457 = pneg %p264
        %p458 = pneg %p261
        %p459 = pneg %p285
        %p460 = pneg %p282
        %p461 = pneg %p306
        %p462 = pneg %p303
        %p463 = pneg %p327
        %p464 = pneg %p324
        %p465 = pneg %p353
        %p466 = pneg %p350
        %s467 = sand.u32 %s340, 1
        %s468 = scalar_lea.sflag [#allocation3], %s467
        %s469 = sand.u32 %s340, 1
        %s470 = smul.addr %s469, 8
        %s471 = scalar_lea.vmem [#allocation2], %s470
        %p472 = scmp.lt.s32.totalorder %s28, 3
        %s473 = scalar_select %p472, %s28, 3
        %s474 = smul.addr %s473, 8
        %s475 = scalar_lea.vmem %s0, %s474
        %p476 = scmp.lt.s32.totalorder %s28, 3
        %s477 = scalar_select %p476, %s28, 3
        %s478 = smul.addr %s477, 8
        %s479 = scalar_lea.vmem %s1, %s478
        %v480 = vld [vmem:[%s475] sm:$0xff]
        %v481 = vld [vmem:[%s479] sm:$0xff]
        %v482 = vld [vmem:[%s2] sm:$0xff]
        %v483 = vld [vmem:[%s2 + $0x8] sm:$0xff]
        %v484 = vld [vmem:[%s2 + $0x10] sm:$0xff]
        %v485 = vld [vmem:[%s2 + $0x18] sm:$0xff]
        %v486 = vld [vmem:[%s2 + $0x20] sm:$0xff]
        %v487 = vld [vmem:[%s2 + $0x28] sm:$0xff]
        %v488 = vld [vmem:[%s2 + $0x30] sm:$0xff]
        %v489 = vld [vmem:[%s2 + $0x38] sm:$0xff]
        %v490 = vld [vmem:[%s2 + $0x40] sm:$0xff]
        %v491 = vld [vmem:[%s2 + $0x48] sm:$0xff]
        %v492 = vld [vmem:[%s2 + $0x50] sm:$0xff]
        %v493 = vld [vmem:[%s2 + $0x58] sm:$0xff]
        %v494 = vld [vmem:[%s2 + $0x60] sm:$0xff]
        %v495 = vld [vmem:[%s2 + $0x68] sm:$0xff]
        %v496 = vld [vmem:[%s2 + $0x70] sm:$0xff]
        %v497 = vld [vmem:[%s2 + $0x78] sm:$0xff]
        %v498 = vld [vmem:[%s3] sm:$0x1]
        %v499 = vld [vmem:[%s3 + $0x1] sm:$0x1]
        %v500 = vld [vmem:[%s3 + $0x2] sm:$0x1]
        %v501 = vld [vmem:[%s3 + $0x3] sm:$0x1]
        %v502 = vld [vmem:[%s4] sm:$0xff]
        %v503 = vld [vmem:[%s4 + $0x8] sm:$0xff]
        %v504 = vld [vmem:[%s4 + $0x10] sm:$0xff]
        %v505 = vld [vmem:[%s4 + $0x18] sm:$0xff]
        %v506 = vld [vmem:[%s4 + $0x20] sm:$0xff]
        %v507 = vld [vmem:[%s4 + $0x28] sm:$0xff]
        %v508 = vld [vmem:[%s4 + $0x30] sm:$0xff]
        %v509 = vld [vmem:[%s4 + $0x38] sm:$0xff]
        %v510 = vld [vmem:[%s4 + $0x40] sm:$0xff]
        %v511 = vld [vmem:[%s4 + $0x48] sm:$0xff]
        %v512 = vld [vmem:[%s4 + $0x50] sm:$0xff]
        %v513 = vld [vmem:[%s4 + $0x58] sm:$0xff]
        %v514 = vld [vmem:[%s4 + $0x60] sm:$0xff]
        %v515 = vld [vmem:[%s4 + $0x68] sm:$0xff]
        %v516 = vld [vmem:[%s4 + $0x70] sm:$0xff]
        %v517 = vld [vmem:[%s4 + $0x78] sm:$0xff]
        %v518 = vld [vmem:[%s5] sm:$0x1]
        %v519 = vld [vmem:[%s5 + $0x1] sm:$0x1]
        %v520 = vld [vmem:[%s5 + $0x2] sm:$0x1]
        %v521 = vld [vmem:[%s5 + $0x3] sm:$0x1]
        %v522 = vld [vmem:[%s6] sm:$0xff]
        %v523 = vld [vmem:[%s6 + $0x8] sm:$0xff]
        %v524 = vld [vmem:[%s6 + $0x10] sm:$0xff]
        %v525 = vld [vmem:[%s6 + $0x18] sm:$0xff]
        %v526 = vld [vmem:[%s6 + $0x20] sm:$0xff]
        %v527 = vld [vmem:[%s6 + $0x28] sm:$0xff]
        %v528 = vld [vmem:[%s6 + $0x30] sm:$0xff]
        %v529 = vld [vmem:[%s6 + $0x38] sm:$0xff]
        %v530 = vld [vmem:[%s6 + $0x40] sm:$0xff]
        %v531 = vld [vmem:[%s6 + $0x48] sm:$0xff]
        %v532 = vld [vmem:[%s6 + $0x50] sm:$0xff]
        %v533 = vld [vmem:[%s6 + $0x58] sm:$0xff]
        %v534 = vld [vmem:[%s6 + $0x60] sm:$0xff]
        %v535 = vld [vmem:[%s6 + $0x68] sm:$0xff]
        %v536 = vld [vmem:[%s6 + $0x70] sm:$0xff]
        %v537 = vld [vmem:[%s6 + $0x78] sm:$0xff]
        %v538 = vld [vmem:[%s7] sm:$0x1]
        %v539 = vld [vmem:[%s7 + $0x1] sm:$0x1]
        %v540 = vld [vmem:[%s7 + $0x2] sm:$0x1]
        %v541 = vld [vmem:[%s7 + $0x3] sm:$0x1]
        %v542 = vld [vmem:[%s8] sm:$0xff]
        %v543 = vld [vmem:[%s8 + $0x8] sm:$0xff]
        %v544 = vld [vmem:[%s8 + $0x10] sm:$0xff]
        %v545 = vld [vmem:[%s8 + $0x18] sm:$0xff]
        %v546 = vld [vmem:[%s9] sm:$0x1]
        %v547 = vlaneseq
        %v548 = vshrl.u32 %v547, 7
        %v549 = vlaneseq
        %v550 = vand.u32 %v549, 127
        %vm551 = vcmp.eq.s32.totalorder %v548, 7
        %vm552 = vcmp.eq.s32.totalorder %v550, 7
        %vm553 = vmand %vm551, %vm552
        %v554 = vsel %vm553, -1e+09, 0.0
        %v559 = vlaneseq
        %v560 = vshrl.u32 %v559, 7
        %v561 = vsub.s32 0, %v560
        %v562 = vrot.slane %v498, %v561
        %v563 = vlaneseq
        %v564 = vshrl.u32 %v563, 7
        %v565 = vsub.s32 0, %v564
        %v566 = vrot.slane %v499, %v565
        %v567 = vlaneseq
        %v568 = vshrl.u32 %v567, 7
        %v569 = vsub.s32 0, %v568
        %v570 = vrot.slane %v500, %v569
        %v571 = vlaneseq
        %v572 = vshrl.u32 %v571, 7
        %v573 = vsub.s32 0, %v572
        %v574 = vrot.slane %v501, %v573
        %vm579 = vcmask 261120
        %v581 = vsel %vm579, %v480, 0
        %583 = vmatprep.subr.mxu0 0.0
        %584 = vmatpush1.msra.mxu0 %v482
        %585 = vmatprep.subr.mxu0 0.0
        %586 = vmatpush1.msra.mxu0 %v483
        %587 = vmatprep.subr.mxu0 0.0
        %588 = vmatpush1.msra.mxu0 %v484
        %589 = vmatprep.subr.mxu0 0.0
        %590 = vmatpush1.msra.mxu0 %v485
        %591 = vmatprep.subr.mxu0 0.0
        %592 = vmatpush1.msra.mxu0 0.0
        %593 = vmatprep.subr.mxu0 0.0
        %594 = vmatpush1.msra.mxu0 0.0
        %595 = vmatprep.subr.mxu0 0.0
        %596 = vmatpush1.msra.mxu0 0.0
        %597 = vmatprep.subr.mxu0 0.0
        %598 = vmatpush1.msra.mxu0 0.0
        %599 = vmatprep.subr.mxu0 0.0
        %600 = vmatpush1.msra.mxu0 0.0
        %601 = vmatprep.subr.mxu0 0.0
        %602 = vmatpush1.msra.mxu0 0.0
        %603 = vmatprep.subr.mxu0 0.0
        %604 = vmatpush1.msra.mxu0 0.0
        %605 = vmatprep.subr.mxu0 0.0
        %606 = vmatpush1.msra.mxu0 0.0
        %607 = vmatprep.subr.mxu0 0.0
        %608 = vmatpush1.msra.mxu0 0.0
        %609 = vmatprep.subr.mxu0 0.0
        %610 = vmatpush1.msra.mxu0 0.0
        %611 = vmatprep.subr.mxu0 0.0
        %612 = vmatpush1.msra.mxu0 0.0
        %613 = vmatprep.subr.mxu0 0.0
        %614 = vmatpush1.msra.mxu0 0.0
        %615 = vmatprep.subr.mxu0 0.0
        %616 = vmatpush1.msra.mxu0 0.0
        %617 = vmatprep.subr.mxu0 0.0
        %618 = vmatpush1.msra.mxu0 0.0
        %619 = vmatprep.subr.mxu0 0.0
        %620 = vmatpush1.msra.mxu0 0.0
        %621 = vmatprep.subr.mxu0 0.0
        %622 = vmatpush1.msra.mxu0 0.0
        %623 = vmatprep.subr.mxu0 0.0
        %624 = vmatpush1.msra.mxu0 0.0
        %625 = vmatprep.subr.mxu0 0.0
        %626 = vmatpush1.msra.mxu0 0.0
        %627 = vmatprep.subr.mxu0 0.0
        %628 = vmatpush1.msra.mxu0 0.0
        %629 = vmatprep.subr.mxu0 0.0
        %630 = vmatpush1.msra.mxu0 0.0
        %631 = vmatprep.subr.mxu0 0.0
        %632 = vmatpush1.msra.mxu0 0.0
        %633 = vmatprep.subr.mxu0 0.0
        %634 = vmatpush1.msra.mxu0 0.0
        %635 = vmatprep.subr.mxu0 0.0
        %636 = vmatpush1.msra.mxu0 0.0
        %637 = vmatprep.subr.mxu0 0.0
        %638 = vmatpush1.msra.mxu0 0.0
        %639 = vmatprep.subr.mxu0 0.0
        %640 = vmatpush1.msra.mxu0 0.0
        %641 = vmatprep.subr.mxu0 0.0
        %642 = vmatpush1.msra.mxu0 0.0
        %643 = vmatprep.subr.mxu0 0.0
        %644 = vmatpush1.msra.mxu0 0.0
        %645 = vmatprep.subr.mxu0 0.0
        %646 = vmatpush1.msra.mxu0 0.0
        %647 = vmatprep.mubr.f32.mxu0 0.0
        %648 = vmatmul.mubr.f32.gmra.mrb[0].mxu0 %v581
        %v649 = vpop.f32.mrb[0].mxu0
        %v650 = vadd.f32 %v562, %v649
        %v651 = vpop.f32.mrb[0].mxu0
        %652 = vdwg.mxu0
        %653 = vmatprep.subr.mxu0 0.0
        %654 = vmatpush1.msra.mxu0 %v486
        %655 = vmatprep.subr.mxu0 0.0
        %656 = vmatpush1.msra.mxu0 %v487
        %657 = vmatprep.subr.mxu0 0.0
        %658 = vmatpush1.msra.mxu0 %v488
        %659 = vmatprep.subr.mxu0 0.0
        %660 = vmatpush1.msra.mxu0 %v489
        %661 = vmatprep.subr.mxu0 0.0
        %662 = vmatpush1.msra.mxu0 0.0
        %663 = vmatprep.subr.mxu0 0.0
        %664 = vmatpush1.msra.mxu0 0.0
        %665 = vmatprep.subr.mxu0 0.0
        %666 = vmatpush1.msra.mxu0 0.0
        %667 = vmatprep.subr.mxu0 0.0
        %668 = vmatpush1.msra.mxu0 0.0
        %669 = vmatprep.subr.mxu0 0.0
        %670 = vmatpush1.msra.mxu0 0.0
        %671 = vmatprep.subr.mxu0 0.0
        %672 = vmatpush1.msra.mxu0 0.0
        %673 = vmatprep.subr.mxu0 0.0
        %674 = vmatpush1.msra.mxu0 0.0
        %675 = vmatprep.subr.mxu0 0.0
        %676 = vmatpush1.msra.mxu0 0.0
        %677 = vmatprep.subr.mxu0 0.0
        %678 = vmatpush1.msra.mxu0 0.0
        %679 = vmatprep.subr.mxu0 0.0
        %680 = vmatpush1.msra.mxu0 0.0
        %681 = vmatprep.subr.mxu0 0.0
        %682 = vmatpush1.msra.mxu0 0.0
        %683 = vmatprep.subr.mxu0 0.0
        %684 = vmatpush1.msra.mxu0 0.0
        %685 = vmatprep.subr.mxu0 0.0
        %686 = vmatpush1.msra.mxu0 0.0
        %687 = vmatprep.subr.mxu0 0.0
        %688 = vmatpush1.msra.mxu0 0.0
        %689 = vmatprep.subr.mxu0 0.0
        %690 = vmatpush1.msra.mxu0 0.0
        %691 = vmatprep.subr.mxu0 0.0
        %692 = vmatpush1.msra.mxu0 0.0
        %693 = vmatprep.subr.mxu0 0.0
        %694 = vmatpush1.msra.mxu0 0.0
        %695 = vmatprep.subr.mxu0 0.0
        %696 = vmatpush1.msra.mxu0 0.0
        %697 = vmatprep.subr.mxu0 0.0
        %698 = vmatpush1.msra.mxu0 0.0
        %699 = vmatprep.subr.mxu0 0.0
        %700 = vmatpush1.msra.mxu0 0.0
        %701 = vmatprep.subr.mxu0 0.0
        %702 = vmatpush1.msra.mxu0 0.0
        %703 = vmatprep.subr.mxu0 0.0
        %704 = vmatpush1.msra.mxu0 0.0
        %705 = vmatprep.subr.mxu0 0.0
        %706 = vmatpush1.msra.mxu0 0.0
        %707 = vmatprep.subr.mxu0 0.0
        %708 = vmatpush1.msra.mxu0 0.0
        %709 = vmatprep.subr.mxu0 0.0
        %710 = vmatpush1.msra.mxu0 0.0
        %711 = vmatprep.subr.mxu0 0.0
        %712 = vmatpush1.msra.mxu0 0.0
        %713 = vmatprep.subr.mxu0 0.0
        %714 = vmatpush1.msra.mxu0 0.0
        %715 = vmatprep.subr.mxu0 0.0
        %716 = vmatpush1.msra.mxu0 0.0
        %717 = vmatprep.mubr.f32.mxu0 0.0
        %718 = vmatmul.mubr.f32.gmra.mrb[0].mxu0 %v581
        %v719 = vpop.f32.mrb[0].mxu0
        %v720 = vadd.f32 %v566, %v719
        %v721 = vpop.f32.mrb[0].mxu0
        %722 = vdwg.mxu0
        %723 = vmatprep.subr.mxu0 0.0
        %724 = vmatpush1.msra.mxu0 %v490
        %725 = vmatprep.subr.mxu0 0.0
        %726 = vmatpush1.msra.mxu0 %v491
        %727 = vmatprep.subr.mxu0 0.0
        %728 = vmatpush1.msra.mxu0 %v492
        %729 = vmatprep.subr.mxu0 0.0
        %730 = vmatpush1.msra.mxu0 %v493
        %731 = vmatprep.subr.mxu0 0.0
        %732 = vmatpush1.msra.mxu0 0.0
        %733 = vmatprep.subr.mxu0 0.0
        %734 = vmatpush1.msra.mxu0 0.0
        %735 = vmatprep.subr.mxu0 0.0
        %736 = vmatpush1.msra.mxu0 0.0
        %737 = vmatprep.subr.mxu0 0.0
        %738 = vmatpush1.msra.mxu0 0.0
        %739 = vmatprep.subr.mxu0 0.0
        %740 = vmatpush1.msra.mxu0 0.0
        %741 = vmatprep.subr.mxu0 0.0
        %742 = vmatpush1.msra.mxu0 0.0
        %743 = vmatprep.subr.mxu0 0.0
        %744 = vmatpush1.msra.mxu0 0.0
        %745 = vmatprep.subr.mxu0 0.0
        %746 = vmatpush1.msra.mxu0 0.0
        %747 = vmatprep.subr.mxu0 0.0
        %748 = vmatpush1.msra.mxu0 0.0
        %749 = vmatprep.subr.mxu0 0.0
        %750 = vmatpush1.msra.mxu0 0.0
        %751 = vmatprep.subr.mxu0 0.0
        %752 = vmatpush1.msra.mxu0 0.0
        %753 = vmatprep.subr.mxu0 0.0
        %754 = vmatpush1.msra.mxu0 0.0
        %755 = vmatprep.subr.mxu0 0.0
        %756 = vmatpush1.msra.mxu0 0.0
        %757 = vmatprep.subr.mxu0 0.0
        %758 = vmatpush1.msra.mxu0 0.0
        %759 = vmatprep.subr.mxu0 0.0
        %760 = vmatpush1.msra.mxu0 0.0
        %761 = vmatprep.subr.mxu0 0.0
        %762 = vmatpush1.msra.mxu0 0.0
        %763 = vmatprep.subr.mxu0 0.0
        %764 = vmatpush1.msra.mxu0 0.0
        %765 = vmatprep.subr.mxu0 0.0
        %766 = vmatpush1.msra.mxu0 0.0
        %767 = vmatprep.subr.mxu0 0.0
        %768 = vmatpush1.msra.mxu0 0.0
        %769 = vmatprep.subr.mxu0 0.0
        %770 = vmatpush1.msra.mxu0 0.0
        %771 = vmatprep.subr.mxu0 0.0
        %772 = vmatpush1.msra.mxu0 0.0
        %773 = vmatprep.subr.mxu0 0.0
        %774 = vmatpush1.msra.mxu0 0.0
        %775 = vmatprep.subr.mxu0 0.0
        %776 = vmatpush1.msra.mxu0 0.0
        %777 = vmatprep.subr.mxu0 0.0
        %778 = vmatpush1.msra.mxu0 0.0
        %779 = vmatprep.subr.mxu0 0.0
        %780 = vmatpush1.msra.mxu0 0.0
        %781 = vmatprep.subr.mxu0 0.0
        %782 = vmatpush1.msra.mxu0 0.0
        %783 = vmatprep.subr.mxu0 0.0
        %784 = vmatpush1.msra.mxu0 0.0
        %785 = vmatprep.subr.mxu0 0.0
        %786 = vmatpush1.msra.mxu0 0.0
        %787 = vmatprep.mubr.f32.mxu0 0.0
        %788 = vmatmul.mubr.f32.gmra.mrb[0].mxu0 %v581
        %v789 = vpop.f32.mrb[0].mxu0
        %v790 = vadd.f32 %v570, %v789
        %v791 = vpop.f32.mrb[0].mxu0
        %792 = vdwg.mxu0
        %793 = vmatprep.subr.mxu0 0.0
        %794 = vmatpush1.msra.mxu0 %v494
        %795 = vmatprep.subr.mxu0 0.0
        %796 = vmatpush1.msra.mxu0 %v495
        %797 = vmatprep.subr.mxu0 0.0
        %798 = vmatpush1.msra.mxu0 %v496
        %799 = vmatprep.subr.mxu0 0.0
        %800 = vmatpush1.msra.mxu0 %v497
        %801 = vmatprep.subr.mxu0 0.0
        %802 = vmatpush1.msra.mxu0 0.0
        %803 = vmatprep.subr.mxu0 0.0
        %804 = vmatpush1.msra.mxu0 0.0
        %805 = vmatprep.subr.mxu0 0.0
        %806 = vmatpush1.msra.mxu0 0.0
        %807 = vmatprep.subr.mxu0 0.0
        %808 = vmatpush1.msra.mxu0 0.0
        %809 = vmatprep.subr.mxu0 0.0
        %810 = vmatpush1.msra.mxu0 0.0
        %811 = vmatprep.subr.mxu0 0.0
        %812 = vmatpush1.msra.mxu0 0.0
        %813 = vmatprep.subr.mxu0 0.0
        %814 = vmatpush1.msra.mxu0 0.0
        %815 = vmatprep.subr.mxu0 0.0
        %816 = vmatpush1.msra.mxu0 0.0
        %817 = vmatprep.subr.mxu0 0.0
        %818 = vmatpush1.msra.mxu0 0.0
        %819 = vmatprep.subr.mxu0 0.0
        %820 = vmatpush1.msra.mxu0 0.0
        %821 = vmatprep.subr.mxu0 0.0
        %822 = vmatpush1.msra.mxu0 0.0
        %823 = vmatprep.subr.mxu0 0.0
        %824 = vmatpush1.msra.mxu0 0.0
        %825 = vmatprep.subr.mxu0 0.0
        %826 = vmatpush1.msra.mxu0 0.0
        %827 = vmatprep.subr.mxu0 0.0
        %828 = vmatpush1.msra.mxu0 0.0
        %829 = vmatprep.subr.mxu0 0.0
        %830 = vmatpush1.msra.mxu0 0.0
        %831 = vmatprep.subr.mxu0 0.0
        %832 = vmatpush1.msra.mxu0 0.0
        %833 = vmatprep.subr.mxu0 0.0
        %834 = vmatpush1.msra.mxu0 0.0
        %835 = vmatprep.subr.mxu0 0.0
        %836 = vmatpush1.msra.mxu0 0.0
        %837 = vmatprep.subr.mxu0 0.0
        %838 = vmatpush1.msra.mxu0 0.0
        %839 = vmatprep.subr.mxu0 0.0
        %840 = vmatpush1.msra.mxu0 0.0
        %841 = vmatprep.subr.mxu0 0.0
        %842 = vmatpush1.msra.mxu0 0.0
        %843 = vmatprep.subr.mxu0 0.0
        %844 = vmatpush1.msra.mxu0 0.0
        %845 = vmatprep.subr.mxu0 0.0
        %846 = vmatpush1.msra.mxu0 0.0
        %847 = vmatprep.subr.mxu0 0.0
        %848 = vmatpush1.msra.mxu0 0.0
        %849 = vmatprep.subr.mxu0 0.0
        %850 = vmatpush1.msra.mxu0 0.0
        %851 = vmatprep.subr.mxu0 0.0
        %852 = vmatpush1.msra.mxu0 0.0
        %853 = vmatprep.subr.mxu0 0.0
        %854 = vmatpush1.msra.mxu0 0.0
        %855 = vmatprep.subr.mxu0 0.0
        %856 = vmatpush1.msra.mxu0 0.0
        %857 = vmatprep.mubr.f32.mxu0 0.0
        %858 = vmatmul.mubr.f32.gmra.mrb[0].mxu0 %v581
        %v859 = vpop.f32.mrb[0].mxu0
        %v860 = vadd.f32 %v574, %v859
        %v861 = vpop.f32.mrb[0].mxu0
        %862 = vdwg.mxu0
        %v867 = vlaneseq
        %v868 = vshrl.u32 %v867, 7
        %v869 = vsub.s32 0, %v868
        %v870 = vrot.slane %v518, %v869
        %v871 = vlaneseq
        %v872 = vshrl.u32 %v871, 7
        %v873 = vsub.s32 0, %v872
        %v874 = vrot.slane %v519, %v873
        %v875 = vlaneseq
        %v876 = vshrl.u32 %v875, 7
        %v877 = vsub.s32 0, %v876
        %v878 = vrot.slane %v520, %v877
        %v879 = vlaneseq
        %v880 = vshrl.u32 %v879, 7
        %v881 = vsub.s32 0, %v880
        %v882 = vrot.slane %v521, %v881
        %887 = vmatprep.subr.mxu0 0.0
        %888 = vmatpush1.msra.mxu0 %v502
        %889 = vmatprep.subr.mxu0 0.0
        %890 = vmatpush1.msra.mxu0 %v503
        %891 = vmatprep.subr.mxu0 0.0
        %892 = vmatpush1.msra.mxu0 %v504
        %893 = vmatprep.subr.mxu0 0.0
        %894 = vmatpush1.msra.mxu0 %v505
        %895 = vmatprep.subr.mxu0 0.0
        %896 = vmatpush1.msra.mxu0 0.0
        %897 = vmatprep.subr.mxu0 0.0
        %898 = vmatpush1.msra.mxu0 0.0
        %899 = vmatprep.subr.mxu0 0.0
        %900 = vmatpush1.msra.mxu0 0.0
        %901 = vmatprep.subr.mxu0 0.0
        %902 = vmatpush1.msra.mxu0 0.0
        %903 = vmatprep.subr.mxu0 0.0
        %904 = vmatpush1.msra.mxu0 0.0
        %905 = vmatprep.subr.mxu0 0.0
        %906 = vmatpush1.msra.mxu0 0.0
        %907 = vmatprep.subr.mxu0 0.0
        %908 = vmatpush1.msra.mxu0 0.0
        %909 = vmatprep.subr.mxu0 0.0
        %910 = vmatpush1.msra.mxu0 0.0
        %911 = vmatprep.subr.mxu0 0.0
        %912 = vmatpush1.msra.mxu0 0.0
        %913 = vmatprep.subr.mxu0 0.0
        %914 = vmatpush1.msra.mxu0 0.0
        %915 = vmatprep.subr.mxu0 0.0
        %916 = vmatpush1.msra.mxu0 0.0
        %917 = vmatprep.subr.mxu0 0.0
        %918 = vmatpush1.msra.mxu0 0.0
        %919 = vmatprep.subr.mxu0 0.0
        %920 = vmatpush1.msra.mxu0 0.0
        %921 = vmatprep.subr.mxu0 0.0
        %922 = vmatpush1.msra.mxu0 0.0
        %923 = vmatprep.subr.mxu0 0.0
        %924 = vmatpush1.msra.mxu0 0.0
        %925 = vmatprep.subr.mxu0 0.0
        %926 = vmatpush1.msra.mxu0 0.0
        %927 = vmatprep.subr.mxu0 0.0
        %928 = vmatpush1.msra.mxu0 0.0
        %929 = vmatprep.subr.mxu0 0.0
        %930 = vmatpush1.msra.mxu0 0.0
        %931 = vmatprep.subr.mxu0 0.0
        %932 = vmatpush1.msra.mxu0 0.0
        %933 = vmatprep.subr.mxu0 0.0
        %934 = vmatpush1.msra.mxu0 0.0
        %935 = vmatprep.subr.mxu0 0.0
        %936 = vmatpush1.msra.mxu0 0.0
        %937 = vmatprep.subr.mxu0 0.0
        %938 = vmatpush1.msra.mxu0 0.0
        %939 = vmatprep.subr.mxu0 0.0
        %940 = vmatpush1.msra.mxu0 0.0
        %941 = vmatprep.subr.mxu0 0.0
        %942 = vmatpush1.msra.mxu0 0.0
        %943 = vmatprep.subr.mxu0 0.0
        %944 = vmatpush1.msra.mxu0 0.0
        %945 = vmatprep.subr.mxu0 0.0
        %946 = vmatpush1.msra.mxu0 0.0
        %947 = vmatprep.subr.mxu0 0.0
        %948 = vmatpush1.msra.mxu0 0.0
        %949 = vmatprep.subr.mxu0 0.0
        %950 = vmatpush1.msra.mxu0 0.0
        %951 = vmatprep.mubr.f32.mxu0 0.0
        %952 = vmatmul.mubr.f32.gmra.mrb[0].mxu0 %v581
        %v953 = vpop.f32.mrb[0].mxu0
        %v954 = vadd.f32 %v870, %v953
        %v955 = vpop.f32.mrb[0].mxu0
        %956 = vdwg.mxu0
        %957 = vmatprep.subr.mxu0 0.0
        %958 = vmatpush1.msra.mxu0 %v506
        %959 = vmatprep.subr.mxu0 0.0
        %960 = vmatpush1.msra.mxu0 %v507
        %961 = vmatprep.subr.mxu0 0.0
        %962 = vmatpush1.msra.mxu0 %v508
        %963 = vmatprep.subr.mxu0 0.0
        %964 = vmatpush1.msra.mxu0 %v509
        %965 = vmatprep.subr.mxu0 0.0
        %966 = vmatpush1.msra.mxu0 0.0
        %967 = vmatprep.subr.mxu0 0.0
        %968 = vmatpush1.msra.mxu0 0.0
        %969 = vmatprep.subr.mxu0 0.0
        %970 = vmatpush1.msra.mxu0 0.0
        %971 = vmatprep.subr.mxu0 0.0
        %972 = vmatpush1.msra.mxu0 0.0
        %973 = vmatprep.subr.mxu0 0.0
        %974 = vmatpush1.msra.mxu0 0.0
        %975 = vmatprep.subr.mxu0 0.0
        %976 = vmatpush1.msra.mxu0 0.0
        %977 = vmatprep.subr.mxu0 0.0
        %978 = vmatpush1.msra.mxu0 0.0
        %979 = vmatprep.subr.mxu0 0.0
        %980 = vmatpush1.msra.mxu0 0.0
        %981 = vmatprep.subr.mxu0 0.0
        %982 = vmatpush1.msra.mxu0 0.0
        %983 = vmatprep.subr.mxu0 0.0
        %984 = vmatpush1.msra.mxu0 0.0
        %985 = vmatprep.subr.mxu0 0.0
        %986 = vmatpush1.msra.mxu0 0.0
        %987 = vmatprep.subr.mxu0 0.0
        %988 = vmatpush1.msra.mxu0 0.0
        %989 = vmatprep.subr.mxu0 0.0
        %990 = vmatpush1.msra.mxu0 0.0
        %991 = vmatprep.subr.mxu0 0.0
        %992 = vmatpush1.msra.mxu0 0.0
        %993 = vmatprep.subr.mxu0 0.0
        %994 = vmatpush1.msra.mxu0 0.0
        %995 = vmatprep.subr.mxu0 0.0
        %996 = vmatpush1.msra.mxu0 0.0
        %997 = vmatprep.subr.mxu0 0.0
        %998 = vmatpush1.msra.mxu0 0.0
        %999 = vmatprep.subr.mxu0 0.0
        %1000 = vmatpush1.msra.mxu0 0.0
        %1001 = vmatprep.subr.mxu0 0.0
        %1002 = vmatpush1.msra.mxu0 0.0
        %1003 = vmatprep.subr.mxu0 0.0
        %1004 = vmatpush1.msra.mxu0 0.0
        %1005 = vmatprep.subr.mxu0 0.0
        %1006 = vmatpush1.msra.mxu0 0.0
        %1007 = vmatprep.subr.mxu0 0.0
        %1008 = vmatpush1.msra.mxu0 0.0
        %1009 = vmatprep.subr.mxu0 0.0
        %1010 = vmatpush1.msra.mxu0 0.0
        %1011 = vmatprep.subr.mxu0 0.0
        %1012 = vmatpush1.msra.mxu0 0.0
        %1013 = vmatprep.subr.mxu0 0.0
        %1014 = vmatpush1.msra.mxu0 0.0
        %1015 = vmatprep.subr.mxu0 0.0
        %1016 = vmatpush1.msra.mxu0 0.0
        %1017 = vmatprep.subr.mxu0 0.0
        %1018 = vmatpush1.msra.mxu0 0.0
        %1019 = vmatprep.subr.mxu0 0.0
        %1020 = vmatpush1.msra.mxu0 0.0
        %1021 = vmatprep.mubr.f32.mxu0 0.0
        %1022 = vmatmul.mubr.f32.gmra.mrb[0].mxu0 %v581
        %v1023 = vpop.f32.mrb[0].mxu0
        %v1024 = vadd.f32 %v874, %v1023
        %v1025 = vpop.f32.mrb[0].mxu0
        %1026 = vdwg.mxu0
        %1027 = vmatprep.subr.mxu0 0.0
        %1028 = vmatpush1.msra.mxu0 %v510
        %1029 = vmatprep.subr.mxu0 0.0
        %1030 = vmatpush1.msra.mxu0 %v511
        %1031 = vmatprep.subr.mxu0 0.0
        %1032 = vmatpush1.msra.mxu0 %v512
        %1033 = vmatprep.subr.mxu0 0.0
        %1034 = vmatpush1.msra.mxu0 %v513
        %1035 = vmatprep.subr.mxu0 0.0
        %1036 = vmatpush1.msra.mxu0 0.0
        %1037 = vmatprep.subr.mxu0 0.0
        %1038 = vmatpush1.msra.mxu0 0.0
        %1039 = vmatprep.subr.mxu0 0.0
        %1040 = vmatpush1.msra.mxu0 0.0
        %1041 = vmatprep.subr.mxu0 0.0
        %1042 = vmatpush1.msra.mxu0 0.0
        %1043 = vmatprep.subr.mxu0 0.0
        %1044 = vmatpush1.msra.mxu0 0.0
        %1045 = vmatprep.subr.mxu0 0.0
        %1046 = vmatpush1.msra.mxu0 0.0
        %1047 = vmatprep.subr.mxu0 0.0
        %1048 = vmatpush1.msra.mxu0 0.0
        %1049 = vmatprep.subr.mxu0 0.0
        %1050 = vmatpush1.msra.mxu0 0.0
        %1051 = vmatprep.subr.mxu0 0.0
        %1052 = vmatpush1.msra.mxu0 0.0
        %1053 = vmatprep.subr.mxu0 0.0
        %1054 = vmatpush1.msra.mxu0 0.0
        %1055 = vmatprep.subr.mxu0 0.0
        %1056 = vmatpush1.msra.mxu0 0.0
        %1057 = vmatprep.subr.mxu0 0.0
        %1058 = vmatpush1.msra.mxu0 0.0
        %1059 = vmatprep.subr.mxu0 0.0
        %1060 = vmatpush1.msra.mxu0 0.0
        %1061 = vmatprep.subr.mxu0 0.0
        %1062 = vmatpush1.msra.mxu0 0.0
        %1063 = vmatprep.subr.mxu0 0.0
        %1064 = vmatpush1.msra.mxu0 0.0
        %1065 = vmatprep.subr.mxu0 0.0
        %1066 = vmatpush1.msra.mxu0 0.0
        %1067 = vmatprep.subr.mxu0 0.0
        %1068 = vmatpush1.msra.mxu0 0.0
        %1069 = vmatprep.subr.mxu0 0.0
        %1070 = vmatpush1.msra.mxu0 0.0
        %1071 = vmatprep.subr.mxu0 0.0
        %1072 = vmatpush1.msra.mxu0 0.0
        %1073 = vmatprep.subr.mxu0 0.0
        %1074 = vmatpush1.msra.mxu0 0.0
        %1075 = vmatprep.subr.mxu0 0.0
        %1076 = vmatpush1.msra.mxu0 0.0
        %1077 = vmatprep.subr.mxu0 0.0
        %1078 = vmatpush1.msra.mxu0 0.0
        %1079 = vmatprep.subr.mxu0 0.0
        %1080 = vmatpush1.msra.mxu0 0.0
        %1081 = vmatprep.subr.mxu0 0.0
        %1082 = vmatpush1.msra.mxu0 0.0
        %1083 = vmatprep.subr.mxu0 0.0
        %1084 = vmatpush1.msra.mxu0 0.0
        %1085 = vmatprep.subr.mxu0 0.0
        %1086 = vmatpush1.msra.mxu0 0.0
        %1087 = vmatprep.subr.mxu0 0.0
        %1088 = vmatpush1.msra.mxu0 0.0
        %1089 = vmatprep.subr.mxu0 0.0
        %1090 = vmatpush1.msra.mxu0 0.0
        %1091 = vmatprep.mubr.f32.mxu0 0.0
        %1092 = vmatmul.mubr.f32.gmra.mrb[0].mxu0 %v581
        %v1093 = vpop.f32.mrb[0].mxu0
        %v1094 = vadd.f32 %v878, %v1093
        %v1095 = vpop.f32.mrb[0].mxu0
        %1096 = vdwg.mxu0
        %1097 = vmatprep.subr.mxu0 0.0
        %1098 = vmatpush1.msra.mxu0 %v514
        %1099 = vmatprep.subr.mxu0 0.0
        %1100 = vmatpush1.msra.mxu0 %v515
        %1101 = vmatprep.subr.mxu0 0.0
        %1102 = vmatpush1.msra.mxu0 %v516
        %1103 = vmatprep.subr.mxu0 0.0
        %1104 = vmatpush1.msra.mxu0 %v517
        %1105 = vmatprep.subr.mxu0 0.0
        %1106 = vmatpush1.msra.mxu0 0.0
        %1107 = vmatprep.subr.mxu0 0.0
        %1108 = vmatpush1.msra.mxu0 0.0
        %1109 = vmatprep.subr.mxu0 0.0
        %1110 = vmatpush1.msra.mxu0 0.0
        %1111 = vmatprep.subr.mxu0 0.0
        %1112 = vmatpush1.msra.mxu0 0.0
        %1113 = vmatprep.subr.mxu0 0.0
        %1114 = vmatpush1.msra.mxu0 0.0
        %1115 = vmatprep.subr.mxu0 0.0
        %1116 = vmatpush1.msra.mxu0 0.0
        %1117 = vmatprep.subr.mxu0 0.0
        %1118 = vmatpush1.msra.mxu0 0.0
        %1119 = vmatprep.subr.mxu0 0.0
        %1120 = vmatpush1.msra.mxu0 0.0
        %1121 = vmatprep.subr.mxu0 0.0
        %1122 = vmatpush1.msra.mxu0 0.0
        %1123 = vmatprep.subr.mxu0 0.0
        %1124 = vmatpush1.msra.mxu0 0.0
        %1125 = vmatprep.subr.mxu0 0.0
        %1126 = vmatpush1.msra.mxu0 0.0
        %1127 = vmatprep.subr.mxu0 0.0
        %1128 = vmatpush1.msra.mxu0 0.0
        %1129 = vmatprep.subr.mxu0 0.0
        %1130 = vmatpush1.msra.mxu0 0.0
        %1131 = vmatprep.subr.mxu0 0.0
        %1132 = vmatpush1.msra.mxu0 0.0
        %1133 = vmatprep.subr.mxu0 0.0
        %1134 = vmatpush1.msra.mxu0 0.0
        %1135 = vmatprep.subr.mxu0 0.0
        %1136 = vmatpush1.msra.mxu0 0.0
        %1137 = vmatprep.subr.mxu0 0.0
        %1138 = vmatpush1.msra.mxu0 0.0
        %1139 = vmatprep.subr.mxu0 0.0
        %1140 = vmatpush1.msra.mxu0 0.0
        %1141 = vmatprep.subr.mxu0 0.0
        %1142 = vmatpush1.msra.mxu0 0.0
        %1143 = vmatprep.subr.mxu0 0.0
        %1144 = vmatpush1.msra.mxu0 0.0
        %1145 = vmatprep.subr.mxu0 0.0
        %1146 = vmatpush1.msra.mxu0 0.0
        %1147 = vmatprep.subr.mxu0 0.0
        %1148 = vmatpush1.msra.mxu0 0.0
        %1149 = vmatprep.subr.mxu0 0.0
        %1150 = vmatpush1.msra.mxu0 0.0
        %1151 = vmatprep.subr.mxu0 0.0
        %1152 = vmatpush1.msra.mxu0 0.0
        %1153 = vmatprep.subr.mxu0 0.0
        %1154 = vmatpush1.msra.mxu0 0.0
        %1155 = vmatprep.subr.mxu0 0.0
        %1156 = vmatpush1.msra.mxu0 0.0
        %1157 = vmatprep.subr.mxu0 0.0
        %1158 = vmatpush1.msra.mxu0 0.0
        %1159 = vmatprep.subr.mxu0 0.0
        %1160 = vmatpush1.msra.mxu0 0.0
        %1161 = vmatprep.mubr.f32.mxu0 0.0
        %1162 = vmatmul.mubr.f32.gmra.mrb[0].mxu0 %v581
        %v1163 = vpop.f32.mrb[0].mxu0
        %v1164 = vadd.f32 %v882, %v1163
        %v1165 = vpop.f32.mrb[0].mxu0
        %1166 = vdwg.mxu0
        %v1171 = vlaneseq
        %v1172 = vshrl.u32 %v1171, 7
        %v1173 = vsub.s32 0, %v1172
        %v1174 = vrot.slane %v538, %v1173
        %v1175 = vlaneseq
        %v1176 = vshrl.u32 %v1175, 7
        %v1177 = vsub.s32 0, %v1176
        %v1178 = vrot.slane %v539, %v1177
        %v1179 = vlaneseq
        %v1180 = vshrl.u32 %v1179, 7
        %v1181 = vsub.s32 0, %v1180
        %v1182 = vrot.slane %v540, %v1181
        %v1183 = vlaneseq
        %v1184 = vshrl.u32 %v1183, 7
        %v1185 = vsub.s32 0, %v1184
        %v1186 = vrot.slane %v541, %v1185
        %1191 = vmatprep.subr.mxu0 0.0
        %1192 = vmatpush1.msra.mxu0 %v522
        %1193 = vmatprep.subr.mxu0 0.0
        %1194 = vmatpush1.msra.mxu0 %v523
        %1195 = vmatprep.subr.mxu0 0.0
        %1196 = vmatpush1.msra.mxu0 %v524
        %1197 = vmatprep.subr.mxu0 0.0
        %1198 = vmatpush1.msra.mxu0 %v525
        %1199 = vmatprep.subr.mxu0 0.0
        %1200 = vmatpush1.msra.mxu0 0.0
        %1201 = vmatprep.subr.mxu0 0.0
        %1202 = vmatpush1.msra.mxu0 0.0
        %1203 = vmatprep.subr.mxu0 0.0
        %1204 = vmatpush1.msra.mxu0 0.0
        %1205 = vmatprep.subr.mxu0 0.0
        %1206 = vmatpush1.msra.mxu0 0.0
        %1207 = vmatprep.subr.mxu0 0.0
        %1208 = vmatpush1.msra.mxu0 0.0
        %1209 = vmatprep.subr.mxu0 0.0
        %1210 = vmatpush1.msra.mxu0 0.0
        %1211 = vmatprep.subr.mxu0 0.0
        %1212 = vmatpush1.msra.mxu0 0.0
        %1213 = vmatprep.subr.mxu0 0.0
        %1214 = vmatpush1.msra.mxu0 0.0
        %1215 = vmatprep.subr.mxu0 0.0
        %1216 = vmatpush1.msra.mxu0 0.0
        %1217 = vmatprep.subr.mxu0 0.0
        %1218 = vmatpush1.msra.mxu0 0.0
        %1219 = vmatprep.subr.mxu0 0.0
        %1220 = vmatpush1.msra.mxu0 0.0
        %1221 = vmatprep.subr.mxu0 0.0
        %1222 = vmatpush1.msra.mxu0 0.0
        %1223 = vmatprep.subr.mxu0 0.0
        %1224 = vmatpush1.msra.mxu0 0.0
        %1225 = vmatprep.subr.mxu0 0.0
        %1226 = vmatpush1.msra.mxu0 0.0
        %1227 = vmatprep.subr.mxu0 0.0
        %1228 = vmatpush1.msra.mxu0 0.0
        %1229 = vmatprep.subr.mxu0 0.0
        %1230 = vmatpush1.msra.mxu0 0.0
        %1231 = vmatprep.subr.mxu0 0.0
        %1232 = vmatpush1.msra.mxu0 0.0
        %1233 = vmatprep.subr.mxu0 0.0
        %1234 = vmatpush1.msra.mxu0 0.0
        %1235 = vmatprep.subr.mxu0 0.0
        %1236 = vmatpush1.msra.mxu0 0.0
        %1237 = vmatprep.subr.mxu0 0.0
        %1238 = vmatpush1.msra.mxu0 0.0
        %1239 = vmatprep.subr.mxu0 0.0
        %1240 = vmatpush1.msra.mxu0 0.0
        %1241 = vmatprep.subr.mxu0 0.0
        %1242 = vmatpush1.msra.mxu0 0.0
        %1243 = vmatprep.subr.mxu0 0.0
        %1244 = vmatpush1.msra.mxu0 0.0
        %1245 = vmatprep.subr.mxu0 0.0
        %1246 = vmatpush1.msra.mxu0 0.0
        %1247 = vmatprep.subr.mxu0 0.0
        %1248 = vmatpush1.msra.mxu0 0.0
        %1249 = vmatprep.subr.mxu0 0.0
        %1250 = vmatpush1.msra.mxu0 0.0
        %1251 = vmatprep.subr.mxu0 0.0
        %1252 = vmatpush1.msra.mxu0 0.0
        %1253 = vmatprep.subr.mxu0 0.0
        %1254 = vmatpush1.msra.mxu0 0.0
        %1255 = vmatprep.mubr.f32.mxu0 0.0
        %1256 = vmatmul.mubr.f32.gmra.mrb[0].mxu0 %v581
        %v1257 = vpop.f32.mrb[0].mxu0
        %v1258 = vadd.f32 %v1174, %v1257
        %v1259 = vpop.f32.mrb[0].mxu0
        %1260 = vdwg.mxu0
        %1261 = vmatprep.subr.mxu0 0.0
        %1262 = vmatpush1.msra.mxu0 %v526
        %1263 = vmatprep.subr.mxu0 0.0
        %1264 = vmatpush1.msra.mxu0 %v527
        %1265 = vmatprep.subr.mxu0 0.0
        %1266 = vmatpush1.msra.mxu0 %v528
        %1267 = vmatprep.subr.mxu0 0.0
        %1268 = vmatpush1.msra.mxu0 %v529
        %1269 = vmatprep.subr.mxu0 0.0
        %1270 = vmatpush1.msra.mxu0 0.0
        %1271 = vmatprep.subr.mxu0 0.0
        %1272 = vmatpush1.msra.mxu0 0.0
        %1273 = vmatprep.subr.mxu0 0.0
        %1274 = vmatpush1.msra.mxu0 0.0
        %1275 = vmatprep.subr.mxu0 0.0
        %1276 = vmatpush1.msra.mxu0 0.0
        %1277 = vmatprep.subr.mxu0 0.0
        %1278 = vmatpush1.msra.mxu0 0.0
        %1279 = vmatprep.subr.mxu0 0.0
        %1280 = vmatpush1.msra.mxu0 0.0
        %1281 = vmatprep.subr.mxu0 0.0
        %1282 = vmatpush1.msra.mxu0 0.0
        %1283 = vmatprep.subr.mxu0 0.0
        %1284 = vmatpush1.msra.mxu0 0.0
        %1285 = vmatprep.subr.mxu0 0.0
        %1286 = vmatpush1.msra.mxu0 0.0
        %1287 = vmatprep.subr.mxu0 0.0
        %1288 = vmatpush1.msra.mxu0 0.0
        %1289 = vmatprep.subr.mxu0 0.0
        %1290 = vmatpush1.msra.mxu0 0.0
        %1291 = vmatprep.subr.mxu0 0.0
        %1292 = vmatpush1.msra.mxu0 0.0
        %1293 = vmatprep.subr.mxu0 0.0
        %1294 = vmatpush1.msra.mxu0 0.0
        %1295 = vmatprep.subr.mxu0 0.0
        %1296 = vmatpush1.msra.mxu0 0.0
        %1297 = vmatprep.subr.mxu0 0.0
        %1298 = vmatpush1.msra.mxu0 0.0
        %1299 = vmatprep.subr.mxu0 0.0
        %1300 = vmatpush1.msra.mxu0 0.0
        %1301 = vmatprep.subr.mxu0 0.0
        %1302 = vmatpush1.msra.mxu0 0.0
        %1303 = vmatprep.subr.mxu0 0.0
        %1304 = vmatpush1.msra.mxu0 0.0
        %1305 = vmatprep.subr.mxu0 0.0
        %1306 = vmatpush1.msra.mxu0 0.0
        %1307 = vmatprep.subr.mxu0 0.0
        %1308 = vmatpush1.msra.mxu0 0.0
        %1309 = vmatprep.subr.mxu0 0.0
        %1310 = vmatpush1.msra.mxu0 0.0
        %1311 = vmatprep.subr.mxu0 0.0
        %1312 = vmatpush1.msra.mxu0 0.0
        %1313 = vmatprep.subr.mxu0 0.0
        %1314 = vmatpush1.msra.mxu0 0.0
        %1315 = vmatprep.subr.mxu0 0.0
        %1316 = vmatpush1.msra.mxu0 0.0
        %1317 = vmatprep.subr.mxu0 0.0
        %1318 = vmatpush1.msra.mxu0 0.0
        %1319 = vmatprep.subr.mxu0 0.0
        %1320 = vmatpush1.msra.mxu0 0.0
        %1321 = vmatprep.subr.mxu0 0.0
        %1322 = vmatpush1.msra.mxu0 0.0
        %1323 = vmatprep.subr.mxu0 0.0
        %1324 = vmatpush1.msra.mxu0 0.0
        %1325 = vmatprep.mubr.f32.mxu0 0.0
        %1326 = vmatmul.mubr.f32.gmra.mrb[0].mxu0 %v581
        %v1327 = vpop.f32.mrb[0].mxu0
        %v1328 = vadd.f32 %v1178, %v1327
        %v1329 = vpop.f32.mrb[0].mxu0
        %1330 = vdwg.mxu0
        %1331 = vmatprep.subr.mxu0 0.0
        %1332 = vmatpush1.msra.mxu0 %v530
        %1333 = vmatprep.subr.mxu0 0.0
        %1334 = vmatpush1.msra.mxu0 %v531
        %1335 = vmatprep.subr.mxu0 0.0
        %1336 = vmatpush1.msra.mxu0 %v532
        %1337 = vmatprep.subr.mxu0 0.0
        %1338 = vmatpush1.msra.mxu0 %v533
        %1339 = vmatprep.subr.mxu0 0.0
        %1340 = vmatpush1.msra.mxu0 0.0
        %1341 = vmatprep.subr.mxu0 0.0
        %1342 = vmatpush1.msra.mxu0 0.0
        %1343 = vmatprep.subr.mxu0 0.0
        %1344 = vmatpush1.msra.mxu0 0.0
        %1345 = vmatprep.subr.mxu0 0.0
        %1346 = vmatpush1.msra.mxu0 0.0
        %1347 = vmatprep.subr.mxu0 0.0
        %1348 = vmatpush1.msra.mxu0 0.0
        %1349 = vmatprep.subr.mxu0 0.0
        %1350 = vmatpush1.msra.mxu0 0.0
        %1351 = vmatprep.subr.mxu0 0.0
        %1352 = vmatpush1.msra.mxu0 0.0
        %1353 = vmatprep.subr.mxu0 0.0
        %1354 = vmatpush1.msra.mxu0 0.0
        %1355 = vmatprep.subr.mxu0 0.0
        %1356 = vmatpush1.msra.mxu0 0.0
        %1357 = vmatprep.subr.mxu0 0.0
        %1358 = vmatpush1.msra.mxu0 0.0
        %1359 = vmatprep.subr.mxu0 0.0
        %1360 = vmatpush1.msra.mxu0 0.0
        %1361 = vmatprep.subr.mxu0 0.0
        %1362 = vmatpush1.msra.mxu0 0.0
        %1363 = vmatprep.subr.mxu0 0.0
        %1364 = vmatpush1.msra.mxu0 0.0
        %1365 = vmatprep.subr.mxu0 0.0
        %1366 = vmatpush1.msra.mxu0 0.0
        %1367 = vmatprep.subr.mxu0 0.0
        %1368 = vmatpush1.msra.mxu0 0.0
        %1369 = vmatprep.subr.mxu0 0.0
        %1370 = vmatpush1.msra.mxu0 0.0
        %1371 = vmatprep.subr.mxu0 0.0
        %1372 = vmatpush1.msra.mxu0 0.0
        %1373 = vmatprep.subr.mxu0 0.0
        %1374 = vmatpush1.msra.mxu0 0.0
        %1375 = vmatprep.subr.mxu0 0.0
        %1376 = vmatpush1.msra.mxu0 0.0
        %1377 = vmatprep.subr.mxu0 0.0
        %1378 = vmatpush1.msra.mxu0 0.0
        %1379 = vmatprep.subr.mxu0 0.0
        %1380 = vmatpush1.msra.mxu0 0.0
        %1381 = vmatprep.subr.mxu0 0.0
        %1382 = vmatpush1.msra.mxu0 0.0
        %1383 = vmatprep.subr.mxu0 0.0
        %1384 = vmatpush1.msra.mxu0 0.0
        %1385 = vmatprep.subr.mxu0 0.0
        %1386 = vmatpush1.msra.mxu0 0.0
        %1387 = vmatprep.subr.mxu0 0.0
        %1388 = vmatpush1.msra.mxu0 0.0
        %1389 = vmatprep.subr.mxu0 0.0
        %1390 = vmatpush1.msra.mxu0 0.0
        %1391 = vmatprep.subr.mxu0 0.0
        %1392 = vmatpush1.msra.mxu0 0.0
        %1393 = vmatprep.subr.mxu0 0.0
        %1394 = vmatpush1.msra.mxu0 0.0
        %1395 = vmatprep.mubr.f32.mxu0 0.0
        %1396 = vmatmul.mubr.f32.gmra.mrb[0].mxu0 %v581
        %v1397 = vpop.f32.mrb[0].mxu0
        %v1398 = vadd.f32 %v1182, %v1397
        %v1399 = vpop.f32.mrb[0].mxu0
        %1400 = vdwg.mxu0
        %1401 = vmatprep.subr.mxu0 0.0
        %1402 = vmatpush1.msra.mxu0 %v534
        %1403 = vmatprep.subr.mxu0 0.0
        %1404 = vmatpush1.msra.mxu0 %v535
        %1405 = vmatprep.subr.mxu0 0.0
        %1406 = vmatpush1.msra.mxu0 %v536
        %1407 = vmatprep.subr.mxu0 0.0
        %1408 = vmatpush1.msra.mxu0 %v537
        %1409 = vmatprep.subr.mxu0 0.0
        %1410 = vmatpush1.msra.mxu0 0.0
        %1411 = vmatprep.subr.mxu0 0.0
        %1412 = vmatpush1.msra.mxu0 0.0
        %1413 = vmatprep.subr.mxu0 0.0
        %1414 = vmatpush1.msra.mxu0 0.0
        %1415 = vmatprep.subr.mxu0 0.0
        %1416 = vmatpush1.msra.mxu0 0.0
        %1417 = vmatprep.subr.mxu0 0.0
        %1418 = vmatpush1.msra.mxu0 0.0
        %1419 = vmatprep.subr.mxu0 0.0
        %1420 = vmatpush1.msra.mxu0 0.0
        %1421 = vmatprep.subr.mxu0 0.0
        %1422 = vmatpush1.msra.mxu0 0.0
        %1423 = vmatprep.subr.mxu0 0.0
        %1424 = vmatpush1.msra.mxu0 0.0
        %1425 = vmatprep.subr.mxu0 0.0
        %1426 = vmatpush1.msra.mxu0 0.0
        %1427 = vmatprep.subr.mxu0 0.0
        %1428 = vmatpush1.msra.mxu0 0.0
        %1429 = vmatprep.subr.mxu0 0.0
        %1430 = vmatpush1.msra.mxu0 0.0
        %1431 = vmatprep.subr.mxu0 0.0
        %1432 = vmatpush1.msra.mxu0 0.0
        %1433 = vmatprep.subr.mxu0 0.0
        %1434 = vmatpush1.msra.mxu0 0.0
        %1435 = vmatprep.subr.mxu0 0.0
        %1436 = vmatpush1.msra.mxu0 0.0
        %1437 = vmatprep.subr.mxu0 0.0
        %1438 = vmatpush1.msra.mxu0 0.0
        %1439 = vmatprep.subr.mxu0 0.0
        %1440 = vmatpush1.msra.mxu0 0.0
        %1441 = vmatprep.subr.mxu0 0.0
        %1442 = vmatpush1.msra.mxu0 0.0
        %1443 = vmatprep.subr.mxu0 0.0
        %1444 = vmatpush1.msra.mxu0 0.0
        %1445 = vmatprep.subr.mxu0 0.0
        %1446 = vmatpush1.msra.mxu0 0.0
        %1447 = vmatprep.subr.mxu0 0.0
        %1448 = vmatpush1.msra.mxu0 0.0
        %1449 = vmatprep.subr.mxu0 0.0
        %1450 = vmatpush1.msra.mxu0 0.0
        %1451 = vmatprep.subr.mxu0 0.0
        %1452 = vmatpush1.msra.mxu0 0.0
        %1453 = vmatprep.subr.mxu0 0.0
        %1454 = vmatpush1.msra.mxu0 0.0
        %1455 = vmatprep.subr.mxu0 0.0
        %1456 = vmatpush1.msra.mxu0 0.0
        %1457 = vmatprep.subr.mxu0 0.0
        %1458 = vmatpush1.msra.mxu0 0.0
        %1459 = vmatprep.subr.mxu0 0.0
        %1460 = vmatpush1.msra.mxu0 0.0
        %1461 = vmatprep.subr.mxu0 0.0
        %1462 = vmatpush1.msra.mxu0 0.0
        %1463 = vmatprep.subr.mxu0 0.0
        %1464 = vmatpush1.msra.mxu0 0.0
        %1465 = vmatprep.mubr.f32.mxu0 0.0
        %1466 = vmatmul.mubr.f32.gmra.mrb[0].mxu0 %v581
        %v1467 = vpop.f32.mrb[0].mxu0
        %v1468 = vadd.f32 %v1186, %v1467
        %v1469 = vpop.f32.mrb[0].mxu0
        %1470 = vdwg.mxu0
        %vm1471 = vcmask 64512
        %v1473 = vsel %vm1471, %v650, 0
        %v1476 = vsel %vm1471, %v954, 0
        %1478 = vmatprep.subr.mxu0 0.0
        %1479 = vmatpush1.xpose.msra.mxu0 %v1476
        %1480 = vmatprep.subr.mxu0 0.0
        %1481 = vmatpush1.xpose.msra.mxu0 0.0
        %1482 = vmatprep.subr.mxu0 0.0
        %1483 = vmatpush1.xpose.msra.mxu0 0.0
        %1484 = vmatprep.subr.mxu0 0.0
        %1485 = vmatpush1.xpose.msra.mxu0 0.0
        %1486 = vmatprep.subr.mxu0 0.0
        %1487 = vmatpush1.xpose.msra.mxu0 0.0
        %1488 = vmatprep.subr.mxu0 0.0
        %1489 = vmatpush1.xpose.msra.mxu0 0.0
        %1490 = vmatprep.subr.mxu0 0.0
        %1491 = vmatpush1.xpose.msra.mxu0 0.0
        %1492 = vmatprep.subr.mxu0 0.0
        %1493 = vmatpush1.xpose.msra.mxu0 0.0
        %1494 = vmatprep.subr.mxu0 0.0
        %1495 = vmatpush1.xpose.msra.mxu0 0.0
        %1496 = vmatprep.subr.mxu0 0.0
        %1497 = vmatpush1.xpose.msra.mxu0 0.0
        %1498 = vmatprep.subr.mxu0 0.0
        %1499 = vmatpush1.xpose.msra.mxu0 0.0
        %1500 = vmatprep.subr.mxu0 0.0
        %1501 = vmatpush1.xpose.msra.mxu0 0.0
        %1502 = vmatprep.subr.mxu0 0.0
        %1503 = vmatpush1.xpose.msra.mxu0 0.0
        %1504 = vmatprep.subr.mxu0 0.0
        %1505 = vmatpush1.xpose.msra.mxu0 0.0
        %1506 = vmatprep.subr.mxu0 0.0
        %1507 = vmatpush1.xpose.msra.mxu0 0.0
        %1508 = vmatprep.subr.mxu0 0.0
        %1509 = vmatpush1.xpose.msra.mxu0 0.0
        %1510 = vmatprep.subr.mxu0 0.0
        %1511 = vmatpush1.xpose.msra.mxu0 0.0
        %1512 = vmatprep.subr.mxu0 0.0
        %1513 = vmatpush1.xpose.msra.mxu0 0.0
        %1514 = vmatprep.subr.mxu0 0.0
        %1515 = vmatpush1.xpose.msra.mxu0 0.0
        %1516 = vmatprep.subr.mxu0 0.0
        %1517 = vmatpush1.xpose.msra.mxu0 0.0
        %1518 = vmatprep.subr.mxu0 0.0
        %1519 = vmatpush1.xpose.msra.mxu0 0.0
        %1520 = vmatprep.subr.mxu0 0.0
        %1521 = vmatpush1.xpose.msra.mxu0 0.0
        %1522 = vmatprep.subr.mxu0 0.0
        %1523 = vmatpush1.xpose.msra.mxu0 0.0
        %1524 = vmatprep.subr.mxu0 0.0
        %1525 = vmatpush1.xpose.msra.mxu0 0.0
        %1526 = vmatprep.subr.mxu0 0.0
        %1527 = vmatpush1.xpose.msra.mxu0 0.0
        %1528 = vmatprep.subr.mxu0 0.0
        %1529 = vmatpush1.xpose.msra.mxu0 0.0
        %1530 = vmatprep.subr.mxu0 0.0
        %1531 = vmatpush1.xpose.msra.mxu0 0.0
        %1532 = vmatprep.subr.mxu0 0.0
        %1533 = vmatpush1.xpose.msra.mxu0 0.0
        %1534 = vmatprep.subr.mxu0 0.0
        %1535 = vmatpush1.xpose.msra.mxu0 0.0
        %1536 = vmatprep.subr.mxu0 0.0
        %1537 = vmatpush1.xpose.msra.mxu0 0.0
        %1538 = vmatprep.subr.mxu0 0.0
        %1539 = vmatpush1.xpose.msra.mxu0 0.0
        %1540 = vmatprep.subr.mxu0 0.0
        %1541 = vmatpush1.xpose.msra.mxu0 0.0
        %1542 = vmatprep.mubr.f32.mxu0 0.0
        %1543 = vmatmul.mubr.f32.gmra.mrb[0].mxu0 %v1473
        %v1544 = vpop.f32.mrb[0].mxu0
        %v1545 = vadd.f32 0.0, %v1544
        %v1546 = vpop.f32.mrb[0].mxu0
        %1547 = vdwg.mxu0
        %v1549 = vsel %vm1471, %v720, 0
        %v1552 = vsel %vm1471, %v1024, 0
        %1554 = vmatprep.subr.mxu0 0.0
        %1555 = vmatpush1.xpose.msra.mxu0 %v1552
        %1556 = vmatprep.subr.mxu0 0.0
        %1557 = vmatpush1.xpose.msra.mxu0 0.0
        %1558 = vmatprep.subr.mxu0 0.0
        %1559 = vmatpush1.xpose.msra.mxu0 0.0
        %1560 = vmatprep.subr.mxu0 0.0
        %1561 = vmatpush1.xpose.msra.mxu0 0.0
        %1562 = vmatprep.subr.mxu0 0.0
        %1563 = vmatpush1.xpose.msra.mxu0 0.0
        %1564 = vmatprep.subr.mxu0 0.0
        %1565 = vmatpush1.xpose.msra.mxu0 0.0
        %1566 = vmatprep.subr.mxu0 0.0
        %1567 = vmatpush1.xpose.msra.mxu0 0.0
        %1568 = vmatprep.subr.mxu0 0.0
        %1569 = vmatpush1.xpose.msra.mxu0 0.0
        %1570 = vmatprep.subr.mxu0 0.0
        %1571 = vmatpush1.xpose.msra.mxu0 0.0
        %1572 = vmatprep.subr.mxu0 0.0
        %1573 = vmatpush1.xpose.msra.mxu0 0.0
        %1574 = vmatprep.subr.mxu0 0.0
        %1575 = vmatpush1.xpose.msra.mxu0 0.0
        %1576 = vmatprep.subr.mxu0 0.0
        %1577 = vmatpush1.xpose.msra.mxu0 0.0
        %1578 = vmatprep.subr.mxu0 0.0
        %1579 = vmatpush1.xpose.msra.mxu0 0.0
        %1580 = vmatprep.subr.mxu0 0.0
        %1581 = vmatpush1.xpose.msra.mxu0 0.0
        %1582 = vmatprep.subr.mxu0 0.0
        %1583 = vmatpush1.xpose.msra.mxu0 0.0
        %1584 = vmatprep.subr.mxu0 0.0
        %1585 = vmatpush1.xpose.msra.mxu0 0.0
        %1586 = vmatprep.subr.mxu0 0.0
        %1587 = vmatpush1.xpose.msra.mxu0 0.0
        %1588 = vmatprep.subr.mxu0 0.0
        %1589 = vmatpush1.xpose.msra.mxu0 0.0
        %1590 = vmatprep.subr.mxu0 0.0
        %1591 = vmatpush1.xpose.msra.mxu0 0.0
        %1592 = vmatprep.subr.mxu0 0.0
        %1593 = vmatpush1.xpose.msra.mxu0 0.0
        %1594 = vmatprep.subr.mxu0 0.0
        %1595 = vmatpush1.xpose.msra.mxu0 0.0
        %1596 = vmatprep.subr.mxu0 0.0
        %1597 = vmatpush1.xpose.msra.mxu0 0.0
        %1598 = vmatprep.subr.mxu0 0.0
        %1599 = vmatpush1.xpose.msra.mxu0 0.0
        %1600 = vmatprep.subr.mxu0 0.0
        %1601 = vmatpush1.xpose.msra.mxu0 0.0
        %1602 = vmatprep.subr.mxu0 0.0
        %1603 = vmatpush1.xpose.msra.mxu0 0.0
        %1604 = vmatprep.subr.mxu0 0.0
        %1605 = vmatpush1.xpose.msra.mxu0 0.0
        %1606 = vmatprep.subr.mxu0 0.0
        %1607 = vmatpush1.xpose.msra.mxu0 0.0
        %1608 = vmatprep.subr.mxu0 0.0
        %1609 = vmatpush1.xpose.msra.mxu0 0.0
        %1610 = vmatprep.subr.mxu0 0.0
        %1611 = vmatpush1.xpose.msra.mxu0 0.0
        %1612 = vmatprep.subr.mxu0 0.0
        %1613 = vmatpush1.xpose.msra.mxu0 0.0
        %1614 = vmatprep.subr.mxu0 0.0
        %1615 = vmatpush1.xpose.msra.mxu0 0.0
        %1616 = vmatprep.subr.mxu0 0.0
        %1617 = vmatpush1.xpose.msra.mxu0 0.0
        %1618 = vmatprep.mubr.f32.mxu0 0.0
        %1619 = vmatmul.mubr.f32.gmra.mrb[0].mxu0 %v1549
        %v1620 = vpop.f32.mrb[0].mxu0
        %v1621 = vadd.f32 0.0, %v1620
        %v1622 = vpop.f32.mrb[0].mxu0
        %1623 = vdwg.mxu0
        %v1625 = vsel %vm1471, %v790, 0
        %v1628 = vsel %vm1471, %v1094, 0
        %1630 = vmatprep.subr.mxu0 0.0
        %1631 = vmatpush1.xpose.msra.mxu0 %v1628
        %1632 = vmatprep.subr.mxu0 0.0
        %1633 = vmatpush1.xpose.msra.mxu0 0.0
        %1634 = vmatprep.subr.mxu0 0.0
        %1635 = vmatpush1.xpose.msra.mxu0 0.0
        %1636 = vmatprep.subr.mxu0 0.0
        %1637 = vmatpush1.xpose.msra.mxu0 0.0
        %1638 = vmatprep.subr.mxu0 0.0
        %1639 = vmatpush1.xpose.msra.mxu0 0.0
        %1640 = vmatprep.subr.mxu0 0.0
        %1641 = vmatpush1.xpose.msra.mxu0 0.0
        %1642 = vmatprep.subr.mxu0 0.0
        %1643 = vmatpush1.xpose.msra.mxu0 0.0
        %1644 = vmatprep.subr.mxu0 0.0
        %1645 = vmatpush1.xpose.msra.mxu0 0.0
        %1646 = vmatprep.subr.mxu0 0.0
        %1647 = vmatpush1.xpose.msra.mxu0 0.0
        %1648 = vmatprep.subr.mxu0 0.0
        %1649 = vmatpush1.xpose.msra.mxu0 0.0
        %1650 = vmatprep.subr.mxu0 0.0
        %1651 = vmatpush1.xpose.msra.mxu0 0.0
        %1652 = vmatprep.subr.mxu0 0.0
        %1653 = vmatpush1.xpose.msra.mxu0 0.0
        %1654 = vmatprep.subr.mxu0 0.0
        %1655 = vmatpush1.xpose.msra.mxu0 0.0
        %1656 = vmatprep.subr.mxu0 0.0
        %1657 = vmatpush1.xpose.msra.mxu0 0.0
        %1658 = vmatprep.subr.mxu0 0.0
        %1659 = vmatpush1.xpose.msra.mxu0 0.0
        %1660 = vmatprep.subr.mxu0 0.0
        %1661 = vmatpush1.xpose.msra.mxu0 0.0
        %1662 = vmatprep.subr.mxu0 0.0
        %1663 = vmatpush1.xpose.msra.mxu0 0.0
        %1664 = vmatprep.subr.mxu0 0.0
        %1665 = vmatpush1.xpose.msra.mxu0 0.0
        %1666 = vmatprep.subr.mxu0 0.0
        %1667 = vmatpush1.xpose.msra.mxu0 0.0
        %1668 = vmatprep.subr.mxu0 0.0
        %1669 = vmatpush1.xpose.msra.mxu0 0.0
        %1670 = vmatprep.subr.mxu0 0.0
        %1671 = vmatpush1.xpose.msra.mxu0 0.0
        %1672 = vmatprep.subr.mxu0 0.0
        %1673 = vmatpush1.xpose.msra.mxu0 0.0
        %1674 = vmatprep.subr.mxu0 0.0
        %1675 = vmatpush1.xpose.msra.mxu0 0.0
        %1676 = vmatprep.subr.mxu0 0.0
        %1677 = vmatpush1.xpose.msra.mxu0 0.0
        %1678 = vmatprep.subr.mxu0 0.0
        %1679 = vmatpush1.xpose.msra.mxu0 0.0
        %1680 = vmatprep.subr.mxu0 0.0
        %1681 = vmatpush1.xpose.msra.mxu0 0.0
        %1682 = vmatprep.subr.mxu0 0.0
        %1683 = vmatpush1.xpose.msra.mxu0 0.0
        %1684 = vmatprep.subr.mxu0 0.0
        %1685 = vmatpush1.xpose.msra.mxu0 0.0
        %1686 = vmatprep.subr.mxu0 0.0
        %1687 = vmatpush1.xpose.msra.mxu0 0.0
        %1688 = vmatprep.subr.mxu0 0.0
        %1689 = vmatpush1.xpose.msra.mxu0 0.0
        %1690 = vmatprep.subr.mxu0 0.0
        %1691 = vmatpush1.xpose.msra.mxu0 0.0
        %1692 = vmatprep.subr.mxu0 0.0
        %1693 = vmatpush1.xpose.msra.mxu0 0.0
        %1694 = vmatprep.mubr.f32.mxu0 0.0
        %1695 = vmatmul.mubr.f32.gmra.mrb[0].mxu0 %v1625
        %v1696 = vpop.f32.mrb[0].mxu0
        %v1697 = vadd.f32 0.0, %v1696
        %v1698 = vpop.f32.mrb[0].mxu0
        %1699 = vdwg.mxu0
        %v1701 = vsel %vm1471, %v860, 0
        %v1704 = vsel %vm1471, %v1164, 0
        %1706 = vmatprep.subr.mxu0 0.0
        %1707 = vmatpush1.xpose.msra.mxu0 %v1704
        %1708 = vmatprep.subr.mxu0 0.0
        %1709 = vmatpush1.xpose.msra.mxu0 0.0
        %1710 = vmatprep.subr.mxu0 0.0
        %1711 = vmatpush1.xpose.msra.mxu0 0.0
        %1712 = vmatprep.subr.mxu0 0.0
        %1713 = vmatpush1.xpose.msra.mxu0 0.0
        %1714 = vmatprep.subr.mxu0 0.0
        %1715 = vmatpush1.xpose.msra.mxu0 0.0
        %1716 = vmatprep.subr.mxu0 0.0
        %1717 = vmatpush1.xpose.msra.mxu0 0.0
        %1718 = vmatprep.subr.mxu0 0.0
        %1719 = vmatpush1.xpose.msra.mxu0 0.0
        %1720 = vmatprep.subr.mxu0 0.0
        %1721 = vmatpush1.xpose.msra.mxu0 0.0
        %1722 = vmatprep.subr.mxu0 0.0
        %1723 = vmatpush1.xpose.msra.mxu0 0.0
        %1724 = vmatprep.subr.mxu0 0.0
        %1725 = vmatpush1.xpose.msra.mxu0 0.0
        %1726 = vmatprep.subr.mxu0 0.0
        %1727 = vmatpush1.xpose.msra.mxu0 0.0
        %1728 = vmatprep.subr.mxu0 0.0
        %1729 = vmatpush1.xpose.msra.mxu0 0.0
        %1730 = vmatprep.subr.mxu0 0.0
        %1731 = vmatpush1.xpose.msra.mxu0 0.0
        %1732 = vmatprep.subr.mxu0 0.0
        %1733 = vmatpush1.xpose.msra.mxu0 0.0
        %1734 = vmatprep.subr.mxu0 0.0
        %1735 = vmatpush1.xpose.msra.mxu0 0.0
        %1736 = vmatprep.subr.mxu0 0.0
        %1737 = vmatpush1.xpose.msra.mxu0 0.0
        %1738 = vmatprep.subr.mxu0 0.0
        %1739 = vmatpush1.xpose.msra.mxu0 0.0
        %1740 = vmatprep.subr.mxu0 0.0
        %1741 = vmatpush1.xpose.msra.mxu0 0.0
        %1742 = vmatprep.subr.mxu0 0.0
        %1743 = vmatpush1.xpose.msra.mxu0 0.0
        %1744 = vmatprep.subr.mxu0 0.0
        %1745 = vmatpush1.xpose.msra.mxu0 0.0
        %1746 = vmatprep.subr.mxu0 0.0
        %1747 = vmatpush1.xpose.msra.mxu0 0.0
        %1748 = vmatprep.subr.mxu0 0.0
        %1749 = vmatpush1.xpose.msra.mxu0 0.0
        %1750 = vmatprep.subr.mxu0 0.0
        %1751 = vmatpush1.xpose.msra.mxu0 0.0
        %1752 = vmatprep.subr.mxu0 0.0
        %1753 = vmatpush1.xpose.msra.mxu0 0.0
        %1754 = vmatprep.subr.mxu0 0.0
        %1755 = vmatpush1.xpose.msra.mxu0 0.0
        %1756 = vmatprep.subr.mxu0 0.0
        %1757 = vmatpush1.xpose.msra.mxu0 0.0
        %1758 = vmatprep.subr.mxu0 0.0
        %1759 = vmatpush1.xpose.msra.mxu0 0.0
        %1760 = vmatprep.subr.mxu0 0.0
        %1761 = vmatpush1.xpose.msra.mxu0 0.0
        %1762 = vmatprep.subr.mxu0 0.0
        %1763 = vmatpush1.xpose.msra.mxu0 0.0
        %1764 = vmatprep.subr.mxu0 0.0
        %1765 = vmatpush1.xpose.msra.mxu0 0.0
        %1766 = vmatprep.subr.mxu0 0.0
        %1767 = vmatpush1.xpose.msra.mxu0 0.0
        %1768 = vmatprep.subr.mxu0 0.0
        %1769 = vmatpush1.xpose.msra.mxu0 0.0
        %1770 = vmatprep.mubr.f32.mxu0 0.0
        %1771 = vmatmul.mubr.f32.gmra.mrb[0].mxu0 %v1701
        %v1772 = vpop.f32.mrb[0].mxu0
        %v1773 = vadd.f32 0.0, %v1772
        %v1774 = vpop.f32.mrb[0].mxu0
        %1775 = vdwg.mxu0
        %v1776 = vmul.f32 %v1545, 0.35355338
        %v1777 = vmul.f32 %v1621, 0.35355338
        %v1778 = vmul.f32 %v1697, 0.35355338
        %v1779 = vmul.f32 %v1773, 0.35355338
        %v1780 = vadd.f32 %v1776, %v554
        %v1781 = vadd.f32 %v1777, %v554
        %v1782 = vadd.f32 %v1778, %v554
        %v1783 = vadd.f32 %v1779, %v554
        %v1784 = vsel %vm1471, %v1780, -inf
        %1785 = vmax.xlane.f32.xlu0 %v1784
        %v1786 = vpop.xlane.xlu0 %1785
        %v1787 = vsel %vm1471, %v1781, -inf
        %1788 = vmax.xlane.f32.xlu0 %v1787
        %v1789 = vpop.xlane.xlu0 %1788
        %v1790 = vsel %vm1471, %v1782, -inf
        %1791 = vmax.xlane.f32.xlu0 %v1790
        %v1792 = vpop.xlane.xlu0 %1791
        %v1793 = vsel %vm1471, %v1783, -inf
        %1794 = vmax.xlane.f32.xlu0 %v1793
        %v1795 = vpop.xlane.xlu0 %1794
        %v1796 = vsub.f32 %v1780, %v1786
        %v1797 = vsub.f32 %v1781, %v1789
        %v1798 = vsub.f32 %v1782, %v1792
        %v1799 = vsub.f32 %v1783, %v1795
        %v1800 = vmul.f32 %v1796, 1.442695
        %v1801 = vpow.pop %v1800
        %v1802 = vmul.f32 %v1797, 1.442695
        %v1803 = vpow.pop %v1802
        %v1804 = vmul.f32 %v1798, 1.442695
        %v1805 = vpow.pop %v1804
        %v1806 = vmul.f32 %v1799, 1.442695
        %v1807 = vpow.pop %v1806
        %v1808 = vsel %vm1471, %v1801, 0.0
        %1809 = vadd.xlane.f32.xlu0 %v1808
        %v1810 = vpop.xlane.xlu0 %1809
        %v1811 = vsel %vm1471, %v1803, 0.0
        %1812 = vadd.xlane.f32.xlu0 %v1811
        %v1813 = vpop.xlane.xlu0 %1812
        %v1814 = vsel %vm1471, %v1805, 0.0
        %1815 = vadd.xlane.f32.xlu0 %v1814
        %v1816 = vpop.xlane.xlu0 %1815
        %v1817 = vsel %vm1471, %v1807, 0.0
        %1818 = vadd.xlane.f32.xlu0 %v1817
        %v1819 = vpop.xlane.xlu0 %1818
        %v1820 = vrcp.pop %v1810
        %v1821 = vrcp.pop %v1813
        %v1822 = vrcp.pop %v1816
        %v1823 = vrcp.pop %v1819
        %v1824 = vmul.f32 %v1801, %v1820
        %v1825 = vmul.f32 %v1803, %v1821
        %v1826 = vmul.f32 %v1805, %v1822
        %v1827 = vmul.f32 %v1807, %v1823
        %v1829 = vsel %vm1471, %v1824, 0
        %1831 = vmatprep.subr.mxu0 0.0
        %1832 = vmatpush1.msra.mxu0 %v1258
        %1833 = vmatprep.subr.mxu0 0.0
        %1834 = vmatpush1.msra.mxu0 0.0
        %1835 = vmatprep.subr.mxu0 0.0
        %1836 = vmatpush1.msra.mxu0 0.0
        %1837 = vmatprep.subr.mxu0 0.0
        %1838 = vmatpush1.msra.mxu0 0.0
        %1839 = vmatprep.subr.mxu0 0.0
        %1840 = vmatpush1.msra.mxu0 0.0
        %1841 = vmatprep.subr.mxu0 0.0
        %1842 = vmatpush1.msra.mxu0 0.0
        %1843 = vmatprep.subr.mxu0 0.0
        %1844 = vmatpush1.msra.mxu0 0.0
        %1845 = vmatprep.subr.mxu0 0.0
        %1846 = vmatpush1.msra.mxu0 0.0
        %1847 = vmatprep.subr.mxu0 0.0
        %1848 = vmatpush1.msra.mxu0 0.0
        %1849 = vmatprep.subr.mxu0 0.0
        %1850 = vmatpush1.msra.mxu0 0.0
        %1851 = vmatprep.subr.mxu0 0.0
        %1852 = vmatpush1.msra.mxu0 0.0
        %1853 = vmatprep.subr.mxu0 0.0
        %1854 = vmatpush1.msra.mxu0 0.0
        %1855 = vmatprep.subr.mxu0 0.0
        %1856 = vmatpush1.msra.mxu0 0.0
        %1857 = vmatprep.subr.mxu0 0.0
        %1858 = vmatpush1.msra.mxu0 0.0
        %1859 = vmatprep.subr.mxu0 0.0
        %1860 = vmatpush1.msra.mxu0 0.0
        %1861 = vmatprep.subr.mxu0 0.0
        %1862 = vmatpush1.msra.mxu0 0.0
        %1863 = vmatprep.subr.mxu0 0.0
        %1864 = vmatpush1.msra.mxu0 0.0
        %1865 = vmatprep.subr.mxu0 0.0
        %1866 = vmatpush1.msra.mxu0 0.0
        %1867 = vmatprep.subr.mxu0 0.0
        %1868 = vmatpush1.msra.mxu0 0.0
        %1869 = vmatprep.subr.mxu0 0.0
        %1870 = vmatpush1.msra.mxu0 0.0
        %1871 = vmatprep.subr.mxu0 0.0
        %1872 = vmatpush1.msra.mxu0 0.0
        %1873 = vmatprep.subr.mxu0 0.0
        %1874 = vmatpush1.msra.mxu0 0.0
        %1875 = vmatprep.subr.mxu0 0.0
        %1876 = vmatpush1.msra.mxu0 0.0
        %1877 = vmatprep.subr.mxu0 0.0
        %1878 = vmatpush1.msra.mxu0 0.0
        %1879 = vmatprep.subr.mxu0 0.0
        %1880 = vmatpush1.msra.mxu0 0.0
        %1881 = vmatprep.subr.mxu0 0.0
        %1882 = vmatpush1.msra.mxu0 0.0
        %1883 = vmatprep.subr.mxu0 0.0
        %1884 = vmatpush1.msra.mxu0 0.0
        %1885 = vmatprep.subr.mxu0 0.0
        %1886 = vmatpush1.msra.mxu0 0.0
        %1887 = vmatprep.subr.mxu0 0.0
        %1888 = vmatpush1.msra.mxu0 0.0
        %1889 = vmatprep.subr.mxu0 0.0
        %1890 = vmatpush1.msra.mxu0 0.0
        %1891 = vmatprep.subr.mxu0 0.0
        %1892 = vmatpush1.msra.mxu0 0.0
        %1893 = vmatprep.subr.mxu0 0.0
        %1894 = vmatpush1.msra.mxu0 0.0
        %1895 = vmatprep.mubr.f32.mxu0 0.0
        %1896 = vmatmul.mubr.f32.gmra.mrb[0].mxu0 %v1829
        %v1897 = vpop.f32.mrb[0].mxu0
        %v1898 = vadd.f32 0.0, %v1897
        %v1899 = vpop.f32.mrb[0].mxu0
        %1900 = vdwg.mxu0
        %v1902 = vsel %vm1471, %v1825, 0
        %1904 = vmatprep.subr.mxu0 0.0
        %1905 = vmatpush1.msra.mxu0 %v1328
        %1906 = vmatprep.subr.mxu0 0.0
        %1907 = vmatpush1.msra.mxu0 0.0
        %1908 = vmatprep.subr.mxu0 0.0
        %1909 = vmatpush1.msra.mxu0 0.0
        %1910 = vmatprep.subr.mxu0 0.0
        %1911 = vmatpush1.msra.mxu0 0.0
        %1912 = vmatprep.subr.mxu0 0.0
        %1913 = vmatpush1.msra.mxu0 0.0
        %1914 = vmatprep.subr.mxu0 0.0
        %1915 = vmatpush1.msra.mxu0 0.0
        %1916 = vmatprep.subr.mxu0 0.0
        %1917 = vmatpush1.msra.mxu0 0.0
        %1918 = vmatprep.subr.mxu0 0.0
        %1919 = vmatpush1.msra.mxu0 0.0
        %1920 = vmatprep.subr.mxu0 0.0
        %1921 = vmatpush1.msra.mxu0 0.0
        %1922 = vmatprep.subr.mxu0 0.0
        %1923 = vmatpush1.msra.mxu0 0.0
        %1924 = vmatprep.subr.mxu0 0.0
        %1925 = vmatpush1.msra.mxu0 0.0
        %1926 = vmatprep.subr.mxu0 0.0
        %1927 = vmatpush1.msra.mxu0 0.0
        %1928 = vmatprep.subr.mxu0 0.0
        %1929 = vmatpush1.msra.mxu0 0.0
        %1930 = vmatprep.subr.mxu0 0.0
        %1931 = vmatpush1.msra.mxu0 0.0
        %1932 = vmatprep.subr.mxu0 0.0
        %1933 = vmatpush1.msra.mxu0 0.0
        %1934 = vmatprep.subr.mxu0 0.0
        %1935 = vmatpush1.msra.mxu0 0.0
        %1936 = vmatprep.subr.mxu0 0.0
        %1937 = vmatpush1.msra.mxu0 0.0
        %1938 = vmatprep.subr.mxu0 0.0
        %1939 = vmatpush1.msra.mxu0 0.0
        %1940 = vmatprep.subr.mxu0 0.0
        %1941 = vmatpush1.msra.mxu0 0.0
        %1942 = vmatprep.subr.mxu0 0.0
        %1943 = vmatpush1.msra.mxu0 0.0
        %1944 = vmatprep.subr.mxu0 0.0
        %1945 = vmatpush1.msra.mxu0 0.0
        %1946 = vmatprep.subr.mxu0 0.0
        %1947 = vmatpush1.msra.mxu0 0.0
        %1948 = vmatprep.subr.mxu0 0.0
        %1949 = vmatpush1.msra.mxu0 0.0
        %1950 = vmatprep.subr.mxu0 0.0
        %1951 = vmatpush1.msra.mxu0 0.0
        %1952 = vmatprep.subr.mxu0 0.0
        %1953 = vmatpush1.msra.mxu0 0.0
        %1954 = vmatprep.subr.mxu0 0.0
        %1955 = vmatpush1.msra.mxu0 0.0
        %1956 = vmatprep.subr.mxu0 0.0
        %1957 = vmatpush1.msra.mxu0 0.0
        %1958 = vmatprep.subr.mxu0 0.0
        %1959 = vmatpush1.msra.mxu0 0.0
        %1960 = vmatprep.subr.mxu0 0.0
        %1961 = vmatpush1.msra.mxu0 0.0
        %1962 = vmatprep.subr.mxu0 0.0
        %1963 = vmatpush1.msra.mxu0 0.0
        %1964 = vmatprep.subr.mxu0 0.0
        %1965 = vmatpush1.msra.mxu0 0.0
        %1966 = vmatprep.subr.mxu0 0.0
        %1967 = vmatpush1.msra.mxu0 0.0
        %1968 = vmatprep.mubr.f32.mxu0 0.0
        %1969 = vmatmul.mubr.f32.gmra.mrb[0].mxu0 %v1902
        %v1970 = vpop.f32.mrb[0].mxu0
        %v1971 = vadd.f32 0.0, %v1970
        %v1972 = vpop.f32.mrb[0].mxu0
        %1973 = vdwg.mxu0
        %v1975 = vsel %vm1471, %v1826, 0
        %1977 = vmatprep.subr.mxu0 0.0
        %1978 = vmatpush1.msra.mxu0 %v1398
        %1979 = vmatprep.subr.mxu0 0.0
        %1980 = vmatpush1.msra.mxu0 0.0
        %1981 = vmatprep.subr.mxu0 0.0
        %1982 = vmatpush1.msra.mxu0 0.0
        %1983 = vmatprep.subr.mxu0 0.0
        %1984 = vmatpush1.msra.mxu0 0.0
        %1985 = vmatprep.subr.mxu0 0.0
        %1986 = vmatpush1.msra.mxu0 0.0
        %1987 = vmatprep.subr.mxu0 0.0
        %1988 = vmatpush1.msra.mxu0 0.0
        %1989 = vmatprep.subr.mxu0 0.0
        %1990 = vmatpush1.msra.mxu0 0.0
        %1991 = vmatprep.subr.mxu0 0.0
        %1992 = vmatpush1.msra.mxu0 0.0
        %1993 = vmatprep.subr.mxu0 0.0
        %1994 = vmatpush1.msra.mxu0 0.0
        %1995 = vmatprep.subr.mxu0 0.0
        %1996 = vmatpush1.msra.mxu0 0.0
        %1997 = vmatprep.subr.mxu0 0.0
        %1998 = vmatpush1.msra.mxu0 0.0
        %1999 = vmatprep.subr.mxu0 0.0
        %2000 = vmatpush1.msra.mxu0 0.0
        %2001 = vmatprep.subr.mxu0 0.0
        %2002 = vmatpush1.msra.mxu0 0.0
        %2003 = vmatprep.subr.mxu0 0.0
        %2004 = vmatpush1.msra.mxu0 0.0
        %2005 = vmatprep.subr.mxu0 0.0
        %2006 = vmatpush1.msra.mxu0 0.0
        %2007 = vmatprep.subr.mxu0 0.0
        %2008 = vmatpush1.msra.mxu0 0.0
        %2009 = vmatprep.subr.mxu0 0.0
        %2010 = vmatpush1.msra.mxu0 0.0
        %2011 = vmatprep.subr.mxu0 0.0
        %2012 = vmatpush1.msra.mxu0 0.0
        %2013 = vmatprep.subr.mxu0 0.0
        %2014 = vmatpush1.msra.mxu0 0.0
        %2015 = vmatprep.subr.mxu0 0.0
        %2016 = vmatpush1.msra.mxu0 0.0
        %2017 = vmatprep.subr.mxu0 0.0
        %2018 = vmatpush1.msra.mxu0 0.0
        %2019 = vmatprep.subr.mxu0 0.0
        %2020 = vmatpush1.msra.mxu0 0.0
        %2021 = vmatprep.subr.mxu0 0.0
        %2022 = vmatpush1.msra.mxu0 0.0
        %2023 = vmatprep.subr.mxu0 0.0
        %2024 = vmatpush1.msra.mxu0 0.0
        %2025 = vmatprep.subr.mxu0 0.0
        %2026 = vmatpush1.msra.mxu0 0.0
        %2027 = vmatprep.subr.mxu0 0.0
        %2028 = vmatpush1.msra.mxu0 0.0
        %2029 = vmatprep.subr.mxu0 0.0
        %2030 = vmatpush1.msra.mxu0 0.0
        %2031 = vmatprep.subr.mxu0 0.0
        %2032 = vmatpush1.msra.mxu0 0.0
        %2033 = vmatprep.subr.mxu0 0.0
        %2034 = vmatpush1.msra.mxu0 0.0
        %2035 = vmatprep.subr.mxu0 0.0
        %2036 = vmatpush1.msra.mxu0 0.0
        %2037 = vmatprep.subr.mxu0 0.0
        %2038 = vmatpush1.msra.mxu0 0.0
        %2039 = vmatprep.subr.mxu0 0.0
        %2040 = vmatpush1.msra.mxu0 0.0
        %2041 = vmatprep.mubr.f32.mxu0 0.0
        %2042 = vmatmul.mubr.f32.gmra.mrb[0].mxu0 %v1975
        %v2043 = vpop.f32.mrb[0].mxu0
        %v2044 = vadd.f32 0.0, %v2043
        %v2045 = vpop.f32.mrb[0].mxu0
        %2046 = vdwg.mxu0
        %v2048 = vsel %vm1471, %v1827, 0
        %2050 = vmatprep.subr.mxu0 0.0
        %2051 = vmatpush1.msra.mxu0 %v1468
        %2052 = vmatprep.subr.mxu0 0.0
        %2053 = vmatpush1.msra.mxu0 0.0
        %2054 = vmatprep.subr.mxu0 0.0
        %2055 = vmatpush1.msra.mxu0 0.0
        %2056 = vmatprep.subr.mxu0 0.0
        %2057 = vmatpush1.msra.mxu0 0.0
        %2058 = vmatprep.subr.mxu0 0.0
        %2059 = vmatpush1.msra.mxu0 0.0
        %2060 = vmatprep.subr.mxu0 0.0
        %2061 = vmatpush1.msra.mxu0 0.0
        %2062 = vmatprep.subr.mxu0 0.0
        %2063 = vmatpush1.msra.mxu0 0.0
        %2064 = vmatprep.subr.mxu0 0.0
        %2065 = vmatpush1.msra.mxu0 0.0
        %2066 = vmatprep.subr.mxu0 0.0
        %2067 = vmatpush1.msra.mxu0 0.0
        %2068 = vmatprep.subr.mxu0 0.0
        %2069 = vmatpush1.msra.mxu0 0.0
        %2070 = vmatprep.subr.mxu0 0.0
        %2071 = vmatpush1.msra.mxu0 0.0
        %2072 = vmatprep.subr.mxu0 0.0
        %2073 = vmatpush1.msra.mxu0 0.0
        %2074 = vmatprep.subr.mxu0 0.0
        %2075 = vmatpush1.msra.mxu0 0.0
        %2076 = vmatprep.subr.mxu0 0.0
        %2077 = vmatpush1.msra.mxu0 0.0
        %2078 = vmatprep.subr.mxu0 0.0
        %2079 = vmatpush1.msra.mxu0 0.0
        %2080 = vmatprep.subr.mxu0 0.0
        %2081 = vmatpush1.msra.mxu0 0.0
        %2082 = vmatprep.subr.mxu0 0.0
        %2083 = vmatpush1.msra.mxu0 0.0
        %2084 = vmatprep.subr.mxu0 0.0
        %2085 = vmatpush1.msra.mxu0 0.0
        %2086 = vmatprep.subr.mxu0 0.0
        %2087 = vmatpush1.msra.mxu0 0.0
        %2088 = vmatprep.subr.mxu0 0.0
        %2089 = vmatpush1.msra.mxu0 0.0
        %2090 = vmatprep.subr.mxu0 0.0
        %2091 = vmatpush1.msra.mxu0 0.0
        %2092 = vmatprep.subr.mxu0 0.0
        %2093 = vmatpush1.msra.mxu0 0.0
        %2094 = vmatprep.subr.mxu0 0.0
        %2095 = vmatpush1.msra.mxu0 0.0
        %2096 = vmatprep.subr.mxu0 0.0
        %2097 = vmatpush1.msra.mxu0 0.0
        %2098 = vmatprep.subr.mxu0 0.0
        %2099 = vmatpush1.msra.mxu0 0.0
        %2100 = vmatprep.subr.mxu0 0.0
        %2101 = vmatpush1.msra.mxu0 0.0
        %2102 = vmatprep.subr.mxu0 0.0
        %2103 = vmatpush1.msra.mxu0 0.0
        %2104 = vmatprep.subr.mxu0 0.0
        %2105 = vmatpush1.msra.mxu0 0.0
        %2106 = vmatprep.subr.mxu0 0.0
        %2107 = vmatpush1.msra.mxu0 0.0
        %2108 = vmatprep.subr.mxu0 0.0
        %2109 = vmatpush1.msra.mxu0 0.0
        %2110 = vmatprep.subr.mxu0 0.0
        %2111 = vmatpush1.msra.mxu0 0.0
        %2112 = vmatprep.subr.mxu0 0.0
        %2113 = vmatpush1.msra.mxu0 0.0
        %2114 = vmatprep.mubr.f32.mxu0 0.0
        %2115 = vmatmul.mubr.f32.gmra.mrb[0].mxu0 %v2048
        %v2116 = vpop.f32.mrb[0].mxu0
        %v2117 = vadd.f32 0.0, %v2116
        %v2118 = vpop.f32.mrb[0].mxu0
        %2119 = vdwg.mxu0
        %v2121 = vsel %vm1471, %v1898, 0
        %2123 = vmatprep.subr.mxu0 0.0
        %2124 = vmatpush1.msra.mxu0 %v542
        %2125 = vmatprep.subr.mxu0 0.0
        %2126 = vmatpush1.msra.mxu0 0.0
        %2127 = vmatprep.subr.mxu0 0.0
        %2128 = vmatpush1.msra.mxu0 0.0
        %2129 = vmatprep.subr.mxu0 0.0
        %2130 = vmatpush1.msra.mxu0 0.0
        %2131 = vmatprep.subr.mxu0 0.0
        %2132 = vmatpush1.msra.mxu0 0.0
        %2133 = vmatprep.subr.mxu0 0.0
        %2134 = vmatpush1.msra.mxu0 0.0
        %2135 = vmatprep.subr.mxu0 0.0
        %2136 = vmatpush1.msra.mxu0 0.0
        %2137 = vmatprep.subr.mxu0 0.0
        %2138 = vmatpush1.msra.mxu0 0.0
        %2139 = vmatprep.subr.mxu0 0.0
        %2140 = vmatpush1.msra.mxu0 0.0
        %2141 = vmatprep.subr.mxu0 0.0
        %2142 = vmatpush1.msra.mxu0 0.0
        %2143 = vmatprep.subr.mxu0 0.0
        %2144 = vmatpush1.msra.mxu0 0.0
        %2145 = vmatprep.subr.mxu0 0.0
        %2146 = vmatpush1.msra.mxu0 0.0
        %2147 = vmatprep.subr.mxu0 0.0
        %2148 = vmatpush1.msra.mxu0 0.0
        %2149 = vmatprep.subr.mxu0 0.0
        %2150 = vmatpush1.msra.mxu0 0.0
        %2151 = vmatprep.subr.mxu0 0.0
        %2152 = vmatpush1.msra.mxu0 0.0
        %2153 = vmatprep.subr.mxu0 0.0
        %2154 = vmatpush1.msra.mxu0 0.0
        %2155 = vmatprep.subr.mxu0 0.0
        %2156 = vmatpush1.msra.mxu0 0.0
        %2157 = vmatprep.subr.mxu0 0.0
        %2158 = vmatpush1.msra.mxu0 0.0
        %2159 = vmatprep.subr.mxu0 0.0
        %2160 = vmatpush1.msra.mxu0 0.0
        %2161 = vmatprep.subr.mxu0 0.0
        %2162 = vmatpush1.msra.mxu0 0.0
        %2163 = vmatprep.subr.mxu0 0.0
        %2164 = vmatpush1.msra.mxu0 0.0
        %2165 = vmatprep.subr.mxu0 0.0
        %2166 = vmatpush1.msra.mxu0 0.0
        %2167 = vmatprep.subr.mxu0 0.0
        %2168 = vmatpush1.msra.mxu0 0.0
        %2169 = vmatprep.subr.mxu0 0.0
        %2170 = vmatpush1.msra.mxu0 0.0
        %2171 = vmatprep.subr.mxu0 0.0
        %2172 = vmatpush1.msra.mxu0 0.0
        %2173 = vmatprep.subr.mxu0 0.0
        %2174 = vmatpush1.msra.mxu0 0.0
        %2175 = vmatprep.subr.mxu0 0.0
        %2176 = vmatpush1.msra.mxu0 0.0
        %2177 = vmatprep.subr.mxu0 0.0
        %2178 = vmatpush1.msra.mxu0 0.0
        %2179 = vmatprep.subr.mxu0 0.0
        %2180 = vmatpush1.msra.mxu0 0.0
        %2181 = vmatprep.subr.mxu0 0.0
        %2182 = vmatpush1.msra.mxu0 0.0
        %2183 = vmatprep.subr.mxu0 0.0
        %2184 = vmatpush1.msra.mxu0 0.0
        %2185 = vmatprep.subr.mxu0 0.0
        %2186 = vmatpush1.msra.mxu0 0.0
        %2187 = vmatprep.mubr.f32.mxu0 0.0
        %2188 = vmatmul.mubr.f32.gmra.mrb[0].mxu0 %v2121
        %v2189 = vpop.f32.mrb[0].mxu0
        %v2190 = vadd.f32 0.0, %v2189
        %v2191 = vpop.f32.mrb[0].mxu0
        %2192 = vdwg.mxu0
        %v2194 = vsel %vm1471, %v1971, 0
        %2196 = vmatprep.subr.mxu0 0.0
        %2197 = vmatpush1.msra.mxu0 %v543
        %2198 = vmatprep.subr.mxu0 0.0
        %2199 = vmatpush1.msra.mxu0 0.0
        %2200 = vmatprep.subr.mxu0 0.0
        %2201 = vmatpush1.msra.mxu0 0.0
        %2202 = vmatprep.subr.mxu0 0.0
        %2203 = vmatpush1.msra.mxu0 0.0
        %2204 = vmatprep.subr.mxu0 0.0
        %2205 = vmatpush1.msra.mxu0 0.0
        %2206 = vmatprep.subr.mxu0 0.0
        %2207 = vmatpush1.msra.mxu0 0.0
        %2208 = vmatprep.subr.mxu0 0.0
        %2209 = vmatpush1.msra.mxu0 0.0
        %2210 = vmatprep.subr.mxu0 0.0
        %2211 = vmatpush1.msra.mxu0 0.0
        %2212 = vmatprep.subr.mxu0 0.0
        %2213 = vmatpush1.msra.mxu0 0.0
        %2214 = vmatprep.subr.mxu0 0.0
        %2215 = vmatpush1.msra.mxu0 0.0
        %2216 = vmatprep.subr.mxu0 0.0
        %2217 = vmatpush1.msra.mxu0 0.0
        %2218 = vmatprep.subr.mxu0 0.0
        %2219 = vmatpush1.msra.mxu0 0.0
        %2220 = vmatprep.subr.mxu0 0.0
        %2221 = vmatpush1.msra.mxu0 0.0
        %2222 = vmatprep.subr.mxu0 0.0
        %2223 = vmatpush1.msra.mxu0 0.0
        %2224 = vmatprep.subr.mxu0 0.0
        %2225 = vmatpush1.msra.mxu0 0.0
        %2226 = vmatprep.subr.mxu0 0.0
        %2227 = vmatpush1.msra.mxu0 0.0
        %2228 = vmatprep.subr.mxu0 0.0
        %2229 = vmatpush1.msra.mxu0 0.0
        %2230 = vmatprep.subr.mxu0 0.0
        %2231 = vmatpush1.msra.mxu0 0.0
        %2232 = vmatprep.subr.mxu0 0.0
        %2233 = vmatpush1.msra.mxu0 0.0
        %2234 = vmatprep.subr.mxu0 0.0
        %2235 = vmatpush1.msra.mxu0 0.0
        %2236 = vmatprep.subr.mxu0 0.0
        %2237 = vmatpush1.msra.mxu0 0.0
        %2238 = vmatprep.subr.mxu0 0.0
        %2239 = vmatpush1.msra.mxu0 0.0
        %2240 = vmatprep.subr.mxu0 0.0
        %2241 = vmatpush1.msra.mxu0 0.0
        %2242 = vmatprep.subr.mxu0 0.0
        %2243 = vmatpush1.msra.mxu0 0.0
        %2244 = vmatprep.subr.mxu0 0.0
        %2245 = vmatpush1.msra.mxu0 0.0
        %2246 = vmatprep.subr.mxu0 0.0
        %2247 = vmatpush1.msra.mxu0 0.0
        %2248 = vmatprep.subr.mxu0 0.0
        %2249 = vmatpush1.msra.mxu0 0.0
        %2250 = vmatprep.subr.mxu0 0.0
        %2251 = vmatpush1.msra.mxu0 0.0
        %2252 = vmatprep.subr.mxu0 0.0
        %2253 = vmatpush1.msra.mxu0 0.0
        %2254 = vmatprep.subr.mxu0 0.0
        %2255 = vmatpush1.msra.mxu0 0.0
        %2256 = vmatprep.subr.mxu0 0.0
        %2257 = vmatpush1.msra.mxu0 0.0
        %2258 = vmatprep.subr.mxu0 0.0
        %2259 = vmatpush1.msra.mxu0 0.0
        %2260 = vmatprep.mubr.f32.mxu0 0.0
        %2261 = vmatmul.mubr.f32.gmra.mrb[0].mxu0 %v2194
        %v2262 = vpop.f32.mrb[0].mxu0
        %v2263 = vadd.f32 0.0, %v2262
        %v2264 = vpop.f32.mrb[0].mxu0
        %2265 = vdwg.mxu0
        %v2267 = vsel %vm1471, %v2044, 0
        %2269 = vmatprep.subr.mxu0 0.0
        %2270 = vmatpush1.msra.mxu0 %v544
        %2271 = vmatprep.subr.mxu0 0.0
        %2272 = vmatpush1.msra.mxu0 0.0
        %2273 = vmatprep.subr.mxu0 0.0
        %2274 = vmatpush1.msra.mxu0 0.0
        %2275 = vmatprep.subr.mxu0 0.0
        %2276 = vmatpush1.msra.mxu0 0.0
        %2277 = vmatprep.subr.mxu0 0.0
        %2278 = vmatpush1.msra.mxu0 0.0
        %2279 = vmatprep.subr.mxu0 0.0
        %2280 = vmatpush1.msra.mxu0 0.0
        %2281 = vmatprep.subr.mxu0 0.0
        %2282 = vmatpush1.msra.mxu0 0.0
        %2283 = vmatprep.subr.mxu0 0.0
        %2284 = vmatpush1.msra.mxu0 0.0
        %2285 = vmatprep.subr.mxu0 0.0
        %2286 = vmatpush1.msra.mxu0 0.0
        %2287 = vmatprep.subr.mxu0 0.0
        %2288 = vmatpush1.msra.mxu0 0.0
        %2289 = vmatprep.subr.mxu0 0.0
        %2290 = vmatpush1.msra.mxu0 0.0
        %2291 = vmatprep.subr.mxu0 0.0
        %2292 = vmatpush1.msra.mxu0 0.0
        %2293 = vmatprep.subr.mxu0 0.0
        %2294 = vmatpush1.msra.mxu0 0.0
        %2295 = vmatprep.subr.mxu0 0.0
        %2296 = vmatpush1.msra.mxu0 0.0
        %2297 = vmatprep.subr.mxu0 0.0
        %2298 = vmatpush1.msra.mxu0 0.0
        %2299 = vmatprep.subr.mxu0 0.0
        %2300 = vmatpush1.msra.mxu0 0.0
        %2301 = vmatprep.subr.mxu0 0.0
        %2302 = vmatpush1.msra.mxu0 0.0
        %2303 = vmatprep.subr.mxu0 0.0
        %2304 = vmatpush1.msra.mxu0 0.0
        %2305 = vmatprep.subr.mxu0 0.0
        %2306 = vmatpush1.msra.mxu0 0.0
        %2307 = vmatprep.subr.mxu0 0.0
        %2308 = vmatpush1.msra.mxu0 0.0
        %2309 = vmatprep.subr.mxu0 0.0
        %2310 = vmatpush1.msra.mxu0 0.0
        %2311 = vmatprep.subr.mxu0 0.0
        %2312 = vmatpush1.msra.mxu0 0.0
        %2313 = vmatprep.subr.mxu0 0.0
        %2314 = vmatpush1.msra.mxu0 0.0
        %2315 = vmatprep.subr.mxu0 0.0
        %2316 = vmatpush1.msra.mxu0 0.0
        %2317 = vmatprep.subr.mxu0 0.0
        %2318 = vmatpush1.msra.mxu0 0.0
        %2319 = vmatprep.subr.mxu0 0.0
        %2320 = vmatpush1.msra.mxu0 0.0
        %2321 = vmatprep.subr.mxu0 0.0
        %2322 = vmatpush1.msra.mxu0 0.0
        %2323 = vmatprep.subr.mxu0 0.0
        %2324 = vmatpush1.msra.mxu0 0.0
        %2325 = vmatprep.subr.mxu0 0.0
        %2326 = vmatpush1.msra.mxu0 0.0
        %2327 = vmatprep.subr.mxu0 0.0
        %2328 = vmatpush1.msra.mxu0 0.0
        %2329 = vmatprep.subr.mxu0 0.0
        %2330 = vmatpush1.msra.mxu0 0.0
        %2331 = vmatprep.subr.mxu0 0.0
        %2332 = vmatpush1.msra.mxu0 0.0
        %2333 = vmatprep.mubr.f32.mxu0 0.0
        %2334 = vmatmul.mubr.f32.gmra.mrb[0].mxu0 %v2267
        %v2335 = vpop.f32.mrb[0].mxu0
        %v2336 = vadd.f32 0.0, %v2335
        %v2337 = vpop.f32.mrb[0].mxu0
        %2338 = vdwg.mxu0
        %v2340 = vsel %vm1471, %v2117, 0
        %2342 = vmatprep.subr.mxu0 0.0
        %2343 = vmatpush1.msra.mxu0 %v545
        %2344 = vmatprep.subr.mxu0 0.0
        %2345 = vmatpush1.msra.mxu0 0.0
        %2346 = vmatprep.subr.mxu0 0.0
        %2347 = vmatpush1.msra.mxu0 0.0
        %2348 = vmatprep.subr.mxu0 0.0
        %2349 = vmatpush1.msra.mxu0 0.0
        %2350 = vmatprep.subr.mxu0 0.0
        %2351 = vmatpush1.msra.mxu0 0.0
        %2352 = vmatprep.subr.mxu0 0.0
        %2353 = vmatpush1.msra.mxu0 0.0
        %2354 = vmatprep.subr.mxu0 0.0
        %2355 = vmatpush1.msra.mxu0 0.0
        %2356 = vmatprep.subr.mxu0 0.0
        %2357 = vmatpush1.msra.mxu0 0.0
        %2358 = vmatprep.subr.mxu0 0.0
        %2359 = vmatpush1.msra.mxu0 0.0
        %2360 = vmatprep.subr.mxu0 0.0
        %2361 = vmatpush1.msra.mxu0 0.0
        %2362 = vmatprep.subr.mxu0 0.0
        %2363 = vmatpush1.msra.mxu0 0.0
        %2364 = vmatprep.subr.mxu0 0.0
        %2365 = vmatpush1.msra.mxu0 0.0
        %2366 = vmatprep.subr.mxu0 0.0
        %2367 = vmatpush1.msra.mxu0 0.0
        %2368 = vmatprep.subr.mxu0 0.0
        %2369 = vmatpush1.msra.mxu0 0.0
        %2370 = vmatprep.subr.mxu0 0.0
        %2371 = vmatpush1.msra.mxu0 0.0
        %2372 = vmatprep.subr.mxu0 0.0
        %2373 = vmatpush1.msra.mxu0 0.0
        %2374 = vmatprep.subr.mxu0 0.0
        %2375 = vmatpush1.msra.mxu0 0.0
        %2376 = vmatprep.subr.mxu0 0.0
        %2377 = vmatpush1.msra.mxu0 0.0
        %2378 = vmatprep.subr.mxu0 0.0
        %2379 = vmatpush1.msra.mxu0 0.0
        %2380 = vmatprep.subr.mxu0 0.0
        %2381 = vmatpush1.msra.mxu0 0.0
        %2382 = vmatprep.subr.mxu0 0.0
        %2383 = vmatpush1.msra.mxu0 0.0
        %2384 = vmatprep.subr.mxu0 0.0
        %2385 = vmatpush1.msra.mxu0 0.0
        %2386 = vmatprep.subr.mxu0 0.0
        %2387 = vmatpush1.msra.mxu0 0.0
        %2388 = vmatprep.subr.mxu0 0.0
        %2389 = vmatpush1.msra.mxu0 0.0
        %2390 = vmatprep.subr.mxu0 0.0
        %2391 = vmatpush1.msra.mxu0 0.0
        %2392 = vmatprep.subr.mxu0 0.0
        %2393 = vmatpush1.msra.mxu0 0.0
        %2394 = vmatprep.subr.mxu0 0.0
        %2395 = vmatpush1.msra.mxu0 0.0
        %2396 = vmatprep.subr.mxu0 0.0
        %2397 = vmatpush1.msra.mxu0 0.0
        %2398 = vmatprep.subr.mxu0 0.0
        %2399 = vmatpush1.msra.mxu0 0.0
        %2400 = vmatprep.subr.mxu0 0.0
        %2401 = vmatpush1.msra.mxu0 0.0
        %2402 = vmatprep.subr.mxu0 0.0
        %2403 = vmatpush1.msra.mxu0 0.0
        %2404 = vmatprep.subr.mxu0 0.0
        %2405 = vmatpush1.msra.mxu0 0.0
        %2406 = vmatprep.mubr.f32.mxu0 0.0
        %2407 = vmatmul.mubr.f32.gmra.mrb[0].mxu0 %v2340
        %v2408 = vpop.f32.mrb[0].mxu0
        %v2409 = vadd.f32 0.0, %v2408
        %v2410 = vpop.f32.mrb[0].mxu0
        %2411 = vdwg.mxu0
        %v2412 = vsel %vm579, %v2190, 0.0
        %v2413 = vsel %vm579, %v2263, 0.0
        %v2414 = vadd.f32 %v2412, %v2413
        %v2415 = vsel %vm579, %v2336, 0.0
        %v2416 = vadd.f32 %v2414, %v2415
        %v2417 = vsel %vm579, %v2409, 0.0
        %v2418 = vadd.f32 %v2416, %v2417
        %v2420 = vlaneseq
        %v2421 = vshrl.u32 %v2420, 7
        %v2422 = vsub.s32 0, %v2421
        %v2423 = vrot.slane %v546, %v2422
        %v2425 = vadd.f32 %v2418, %v2423
        %v2426 = vadd.f32 %v2425, %v480
        %v2427 = vsel %vm579, %v2426, 0.0
        %2428 = vadd.xlane.f32.xlu0 %v2427
        %v2429 = vpop.xlane.xlu0 %2428
        %v2430 = vrot.slane %v2429, 4
        %v2431 = vadd.f32 %v2429, %v2430
        %v2432 = vrot.slane %v2431, 2
        %v2433 = vadd.f32 %v2431, %v2432
        %v2434 = vrot.slane %v2433, 1
        %v2435 = vadd.f32 %v2433, %v2434
        %s2436 = vtos %v2435
        %v2437 = vstv %s2436
        %v2438 = vmul.f32 %v2437, 0.00390625
        %v2439 = vmul.f32 %v2426, %v2426
        %v2440 = vsel %vm579, %v2439, 0.0
        %2441 = vadd.xlane.f32.xlu0 %v2440
        %v2442 = vpop.xlane.xlu0 %2441
        %v2443 = vrot.slane %v2442, 4
        %v2444 = vadd.f32 %v2442, %v2443
        %v2445 = vrot.slane %v2444, 2
        %v2446 = vadd.f32 %v2444, %v2445
        %v2447 = vrot.slane %v2446, 1
        %v2448 = vadd.f32 %v2446, %v2447
        %s2449 = vtos %v2448
        %v2450 = vstv %s2449
        %v2451 = vmul.f32 %v2450, 0.00390625
        %v2452 = vmul.f32 %v2438, %v2438
        %v2453 = vsub.f32 %v2451, %v2452
        %v2454 = vsub.f32 %v2426, %v2438
        %v2455 = vadd.f32 %v2453, 1e-05
        %v2456 = vrsqrt.pop %v2455
        %v2457 = vmul.f32 %v2454, %v2456
        %v2459 = vsel %vm579, %v2457, 0
        %2461 = vmatprep.subr.mxu0 0.0
        %2462 = vmatpush1.msra.mxu0 %v482
        %2463 = vmatprep.subr.mxu0 0.0
        %2464 = vmatpush1.msra.mxu0 %v483
        %2465 = vmatprep.subr.mxu0 0.0
        %2466 = vmatpush1.msra.mxu0 %v484
        %2467 = vmatprep.subr.mxu0 0.0
        %2468 = vmatpush1.msra.mxu0 %v485
        %2469 = vmatprep.subr.mxu0 0.0
        %2470 = vmatpush1.msra.mxu0 0.0
        %2471 = vmatprep.subr.mxu0 0.0
        %2472 = vmatpush1.msra.mxu0 0.0
        %2473 = vmatprep.subr.mxu0 0.0
        %2474 = vmatpush1.msra.mxu0 0.0
        %2475 = vmatprep.subr.mxu0 0.0
        %2476 = vmatpush1.msra.mxu0 0.0
        %2477 = vmatprep.subr.mxu0 0.0
        %2478 = vmatpush1.msra.mxu0 0.0
        %2479 = vmatprep.subr.mxu0 0.0
        %2480 = vmatpush1.msra.mxu0 0.0
        %2481 = vmatprep.subr.mxu0 0.0
        %2482 = vmatpush1.msra.mxu0 0.0
        %2483 = vmatprep.subr.mxu0 0.0
        %2484 = vmatpush1.msra.mxu0 0.0
        %2485 = vmatprep.subr.mxu0 0.0
        %2486 = vmatpush1.msra.mxu0 0.0
        %2487 = vmatprep.subr.mxu0 0.0
        %2488 = vmatpush1.msra.mxu0 0.0
        %2489 = vmatprep.subr.mxu0 0.0
        %2490 = vmatpush1.msra.mxu0 0.0
        %2491 = vmatprep.subr.mxu0 0.0
        %2492 = vmatpush1.msra.mxu0 0.0
        %2493 = vmatprep.subr.mxu0 0.0
        %2494 = vmatpush1.msra.mxu0 0.0
        %2495 = vmatprep.subr.mxu0 0.0
        %2496 = vmatpush1.msra.mxu0 0.0
        %2497 = vmatprep.subr.mxu0 0.0
        %2498 = vmatpush1.msra.mxu0 0.0
        %2499 = vmatprep.subr.mxu0 0.0
        %2500 = vmatpush1.msra.mxu0 0.0
        %2501 = vmatprep.subr.mxu0 0.0
        %2502 = vmatpush1.msra.mxu0 0.0
        %2503 = vmatprep.subr.mxu0 0.0
        %2504 = vmatpush1.msra.mxu0 0.0
        %2505 = vmatprep.subr.mxu0 0.0
        %2506 = vmatpush1.msra.mxu0 0.0
        %2507 = vmatprep.subr.mxu0 0.0
        %2508 = vmatpush1.msra.mxu0 0.0
        %2509 = vmatprep.subr.mxu0 0.0
        %2510 = vmatpush1.msra.mxu0 0.0
        %2511 = vmatprep.subr.mxu0 0.0
        %2512 = vmatpush1.msra.mxu0 0.0
        %2513 = vmatprep.subr.mxu0 0.0
        %2514 = vmatpush1.msra.mxu0 0.0
        %2515 = vmatprep.subr.mxu0 0.0
        %2516 = vmatpush1.msra.mxu0 0.0
        %2517 = vmatprep.subr.mxu0 0.0
        %2518 = vmatpush1.msra.mxu0 0.0
        %2519 = vmatprep.subr.mxu0 0.0
        %2520 = vmatpush1.msra.mxu0 0.0
        %2521 = vmatprep.subr.mxu0 0.0
        %2522 = vmatpush1.msra.mxu0 0.0
        %2523 = vmatprep.subr.mxu0 0.0
        %2524 = vmatpush1.msra.mxu0 0.0
        %2525 = vmatprep.mubr.f32.mxu0 0.0
        %2526 = vmatmul.mubr.f32.gmra.mrb[0].mxu0 %v2459
        %v2527 = vpop.f32.mrb[0].mxu0
        %v2528 = vadd.f32 %v562, %v2527
        %v2529 = vpop.f32.mrb[0].mxu0
        %2530 = vdwg.mxu0
        %2531 = vmatprep.subr.mxu0 0.0
        %2532 = vmatpush1.msra.mxu0 %v486
        %2533 = vmatprep.subr.mxu0 0.0
        %2534 = vmatpush1.msra.mxu0 %v487
        %2535 = vmatprep.subr.mxu0 0.0
        %2536 = vmatpush1.msra.mxu0 %v488
        %2537 = vmatprep.subr.mxu0 0.0
        %2538 = vmatpush1.msra.mxu0 %v489
        %2539 = vmatprep.subr.mxu0 0.0
        %2540 = vmatpush1.msra.mxu0 0.0
        %2541 = vmatprep.subr.mxu0 0.0
        %2542 = vmatpush1.msra.mxu0 0.0
        %2543 = vmatprep.subr.mxu0 0.0
        %2544 = vmatpush1.msra.mxu0 0.0
        %2545 = vmatprep.subr.mxu0 0.0
        %2546 = vmatpush1.msra.mxu0 0.0
        %2547 = vmatprep.subr.mxu0 0.0
        %2548 = vmatpush1.msra.mxu0 0.0
        %2549 = vmatprep.subr.mxu0 0.0
        %2550 = vmatpush1.msra.mxu0 0.0
        %2551 = vmatprep.subr.mxu0 0.0
        %2552 = vmatpush1.msra.mxu0 0.0
        %2553 = vmatprep.subr.mxu0 0.0
        %2554 = vmatpush1.msra.mxu0 0.0
        %2555 = vmatprep.subr.mxu0 0.0
        %2556 = vmatpush1.msra.mxu0 0.0
        %2557 = vmatprep.subr.mxu0 0.0
        %2558 = vmatpush1.msra.mxu0 0.0
        %2559 = vmatprep.subr.mxu0 0.0
        %2560 = vmatpush1.msra.mxu0 0.0
        %2561 = vmatprep.subr.mxu0 0.0
        %2562 = vmatpush1.msra.mxu0 0.0
        %2563 = vmatprep.subr.mxu0 0.0
        %2564 = vmatpush1.msra.mxu0 0.0
        %2565 = vmatprep.subr.mxu0 0.0
        %2566 = vmatpush1.msra.mxu0 0.0
        %2567 = vmatprep.subr.mxu0 0.0
        %2568 = vmatpush1.msra.mxu0 0.0
        %2569 = vmatprep.subr.mxu0 0.0
        %2570 = vmatpush1.msra.mxu0 0.0
        %2571 = vmatprep.subr.mxu0 0.0
        %2572 = vmatpush1.msra.mxu0 0.0
        %2573 = vmatprep.subr.mxu0 0.0
        %2574 = vmatpush1.msra.mxu0 0.0
        %2575 = vmatprep.subr.mxu0 0.0
        %2576 = vmatpush1.msra.mxu0 0.0
        %2577 = vmatprep.subr.mxu0 0.0
        %2578 = vmatpush1.msra.mxu0 0.0
        %2579 = vmatprep.subr.mxu0 0.0
        %2580 = vmatpush1.msra.mxu0 0.0
        %2581 = vmatprep.subr.mxu0 0.0
        %2582 = vmatpush1.msra.mxu0 0.0
        %2583 = vmatprep.subr.mxu0 0.0
        %2584 = vmatpush1.msra.mxu0 0.0
        %2585 = vmatprep.subr.mxu0 0.0
        %2586 = vmatpush1.msra.mxu0 0.0
        %2587 = vmatprep.subr.mxu0 0.0
        %2588 = vmatpush1.msra.mxu0 0.0
        %2589 = vmatprep.subr.mxu0 0.0
        %2590 = vmatpush1.msra.mxu0 0.0
        %2591 = vmatprep.subr.mxu0 0.0
        %2592 = vmatpush1.msra.mxu0 0.0
        %2593 = vmatprep.subr.mxu0 0.0
        %2594 = vmatpush1.msra.mxu0 0.0
        %2595 = vmatprep.mubr.f32.mxu0 0.0
        %2596 = vmatmul.mubr.f32.gmra.mrb[0].mxu0 %v2459
        %v2597 = vpop.f32.mrb[0].mxu0
        %v2598 = vadd.f32 %v566, %v2597
        %v2599 = vpop.f32.mrb[0].mxu0
        %2600 = vdwg.mxu0
        %2601 = vmatprep.subr.mxu0 0.0
        %2602 = vmatpush1.msra.mxu0 %v490
        %2603 = vmatprep.subr.mxu0 0.0
        %2604 = vmatpush1.msra.mxu0 %v491
        %2605 = vmatprep.subr.mxu0 0.0
        %2606 = vmatpush1.msra.mxu0 %v492
        %2607 = vmatprep.subr.mxu0 0.0
        %2608 = vmatpush1.msra.mxu0 %v493
        %2609 = vmatprep.subr.mxu0 0.0
        %2610 = vmatpush1.msra.mxu0 0.0
        %2611 = vmatprep.subr.mxu0 0.0
        %2612 = vmatpush1.msra.mxu0 0.0
        %2613 = vmatprep.subr.mxu0 0.0
        %2614 = vmatpush1.msra.mxu0 0.0
        %2615 = vmatprep.subr.mxu0 0.0
        %2616 = vmatpush1.msra.mxu0 0.0
        %2617 = vmatprep.subr.mxu0 0.0
        %2618 = vmatpush1.msra.mxu0 0.0
        %2619 = vmatprep.subr.mxu0 0.0
        %2620 = vmatpush1.msra.mxu0 0.0
        %2621 = vmatprep.subr.mxu0 0.0
        %2622 = vmatpush1.msra.mxu0 0.0
        %2623 = vmatprep.subr.mxu0 0.0
        %2624 = vmatpush1.msra.mxu0 0.0
        %2625 = vmatprep.subr.mxu0 0.0
        %2626 = vmatpush1.msra.mxu0 0.0
        %2627 = vmatprep.subr.mxu0 0.0
        %2628 = vmatpush1.msra.mxu0 0.0
        %2629 = vmatprep.subr.mxu0 0.0
        %2630 = vmatpush1.msra.mxu0 0.0
        %2631 = vmatprep.subr.mxu0 0.0
        %2632 = vmatpush1.msra.mxu0 0.0
        %2633 = vmatprep.subr.mxu0 0.0
        %2634 = vmatpush1.msra.mxu0 0.0
        %2635 = vmatprep.subr.mxu0 0.0
        %2636 = vmatpush1.msra.mxu0 0.0
        %2637 = vmatprep.subr.mxu0 0.0
        %2638 = vmatpush1.msra.mxu0 0.0
        %2639 = vmatprep.subr.mxu0 0.0
        %2640 = vmatpush1.msra.mxu0 0.0
        %2641 = vmatprep.subr.mxu0 0.0
        %2642 = vmatpush1.msra.mxu0 0.0
        %2643 = vmatprep.subr.mxu0 0.0
        %2644 = vmatpush1.msra.mxu0 0.0
        %2645 = vmatprep.subr.mxu0 0.0
        %2646 = vmatpush1.msra.mxu0 0.0
        %2647 = vmatprep.subr.mxu0 0.0
        %2648 = vmatpush1.msra.mxu0 0.0
        %2649 = vmatprep.subr.mxu0 0.0
        %2650 = vmatpush1.msra.mxu0 0.0
        %2651 = vmatprep.subr.mxu0 0.0
        %2652 = vmatpush1.msra.mxu0 0.0
        %2653 = vmatprep.subr.mxu0 0.0
        %2654 = vmatpush1.msra.mxu0 0.0
        %2655 = vmatprep.subr.mxu0 0.0
        %2656 = vmatpush1.msra.mxu0 0.0
        %2657 = vmatprep.subr.mxu0 0.0
        %2658 = vmatpush1.msra.mxu0 0.0
        %2659 = vmatprep.subr.mxu0 0.0
        %2660 = vmatpush1.msra.mxu0 0.0
        %2661 = vmatprep.subr.mxu0 0.0
        %2662 = vmatpush1.msra.mxu0 0.0
        %2663 = vmatprep.subr.mxu0 0.0
        %2664 = vmatpush1.msra.mxu0 0.0
        %2665 = vmatprep.mubr.f32.mxu0 0.0
        %2666 = vmatmul.mubr.f32.gmra.mrb[0].mxu0 %v2459
        %v2667 = vpop.f32.mrb[0].mxu0
        %v2668 = vadd.f32 %v570, %v2667
        %v2669 = vpop.f32.mrb[0].mxu0
        %2670 = vdwg.mxu0
        %2671 = vmatprep.subr.mxu0 0.0
        %2672 = vmatpush1.msra.mxu0 %v494
        %2673 = vmatprep.subr.mxu0 0.0
        %2674 = vmatpush1.msra.mxu0 %v495
        %2675 = vmatprep.subr.mxu0 0.0
        %2676 = vmatpush1.msra.mxu0 %v496
        %2677 = vmatprep.subr.mxu0 0.0
        %2678 = vmatpush1.msra.mxu0 %v497
        %2679 = vmatprep.subr.mxu0 0.0
        %2680 = vmatpush1.msra.mxu0 0.0
        %2681 = vmatprep.subr.mxu0 0.0
        %2682 = vmatpush1.msra.mxu0 0.0
        %2683 = vmatprep.subr.mxu0 0.0
        %2684 = vmatpush1.msra.mxu0 0.0
        %2685 = vmatprep.subr.mxu0 0.0
        %2686 = vmatpush1.msra.mxu0 0.0
        %2687 = vmatprep.subr.mxu0 0.0
        %2688 = vmatpush1.msra.mxu0 0.0
        %2689 = vmatprep.subr.mxu0 0.0
        %2690 = vmatpush1.msra.mxu0 0.0
        %2691 = vmatprep.subr.mxu0 0.0
        %2692 = vmatpush1.msra.mxu0 0.0
        %2693 = vmatprep.subr.mxu0 0.0
        %2694 = vmatpush1.msra.mxu0 0.0
        %2695 = vmatprep.subr.mxu0 0.0
        %2696 = vmatpush1.msra.mxu0 0.0
        %2697 = vmatprep.subr.mxu0 0.0
        %2698 = vmatpush1.msra.mxu0 0.0
        %2699 = vmatprep.subr.mxu0 0.0
        %2700 = vmatpush1.msra.mxu0 0.0
        %2701 = vmatprep.subr.mxu0 0.0
        %2702 = vmatpush1.msra.mxu0 0.0
        %2703 = vmatprep.subr.mxu0 0.0
        %2704 = vmatpush1.msra.mxu0 0.0
        %2705 = vmatprep.subr.mxu0 0.0
        %2706 = vmatpush1.msra.mxu0 0.0
        %2707 = vmatprep.subr.mxu0 0.0
        %2708 = vmatpush1.msra.mxu0 0.0
        %2709 = vmatprep.subr.mxu0 0.0
        %2710 = vmatpush1.msra.mxu0 0.0
        %2711 = vmatprep.subr.mxu0 0.0
        %2712 = vmatpush1.msra.mxu0 0.0
        %2713 = vmatprep.subr.mxu0 0.0
        %2714 = vmatpush1.msra.mxu0 0.0
        %2715 = vmatprep.subr.mxu0 0.0
        %2716 = vmatpush1.msra.mxu0 0.0
        %2717 = vmatprep.subr.mxu0 0.0
        %2718 = vmatpush1.msra.mxu0 0.0
        %2719 = vmatprep.subr.mxu0 0.0
        %2720 = vmatpush1.msra.mxu0 0.0
        %2721 = vmatprep.subr.mxu0 0.0
        %2722 = vmatpush1.msra.mxu0 0.0
        %2723 = vmatprep.subr.mxu0 0.0
        %2724 = vmatpush1.msra.mxu0 0.0
        %2725 = vmatprep.subr.mxu0 0.0
        %2726 = vmatpush1.msra.mxu0 0.0
        %2727 = vmatprep.subr.mxu0 0.0
        %2728 = vmatpush1.msra.mxu0 0.0
        %2729 = vmatprep.subr.mxu0 0.0
        %2730 = vmatpush1.msra.mxu0 0.0
        %2731 = vmatprep.subr.mxu0 0.0
        %2732 = vmatpush1.msra.mxu0 0.0
        %2733 = vmatprep.subr.mxu0 0.0
        %2734 = vmatpush1.msra.mxu0 0.0
        %2735 = vmatprep.mubr.f32.mxu0 0.0
        %2736 = vmatmul.mubr.f32.gmra.mrb[0].mxu0 %v2459
        %v2737 = vpop.f32.mrb[0].mxu0
        %v2738 = vadd.f32 %v574, %v2737
        %v2739 = vpop.f32.mrb[0].mxu0
        %2740 = vdwg.mxu0
        %v2742 = vsel %vm579, %v481, 0
        %2744 = vmatprep.subr.mxu0 0.0
        %2745 = vmatpush1.msra.mxu0 %v502
        %2746 = vmatprep.subr.mxu0 0.0
        %2747 = vmatpush1.msra.mxu0 %v503
        %2748 = vmatprep.subr.mxu0 0.0
        %2749 = vmatpush1.msra.mxu0 %v504
        %2750 = vmatprep.subr.mxu0 0.0
        %2751 = vmatpush1.msra.mxu0 %v505
        %2752 = vmatprep.subr.mxu0 0.0
        %2753 = vmatpush1.msra.mxu0 0.0
        %2754 = vmatprep.subr.mxu0 0.0
        %2755 = vmatpush1.msra.mxu0 0.0
        %2756 = vmatprep.subr.mxu0 0.0
        %2757 = vmatpush1.msra.mxu0 0.0
        %2758 = vmatprep.subr.mxu0 0.0
        %2759 = vmatpush1.msra.mxu0 0.0
        %2760 = vmatprep.subr.mxu0 0.0
        %2761 = vmatpush1.msra.mxu0 0.0
        %2762 = vmatprep.subr.mxu0 0.0
        %2763 = vmatpush1.msra.mxu0 0.0
        %2764 = vmatprep.subr.mxu0 0.0
        %2765 = vmatpush1.msra.mxu0 0.0
        %2766 = vmatprep.subr.mxu0 0.0
        %2767 = vmatpush1.msra.mxu0 0.0
        %2768 = vmatprep.subr.mxu0 0.0
        %2769 = vmatpush1.msra.mxu0 0.0
        %2770 = vmatprep.subr.mxu0 0.0
        %2771 = vmatpush1.msra.mxu0 0.0
        %2772 = vmatprep.subr.mxu0 0.0
        %2773 = vmatpush1.msra.mxu0 0.0
        %2774 = vmatprep.subr.mxu0 0.0
        %2775 = vmatpush1.msra.mxu0 0.0
        %2776 = vmatprep.subr.mxu0 0.0
        %2777 = vmatpush1.msra.mxu0 0.0
        %2778 = vmatprep.subr.mxu0 0.0
        %2779 = vmatpush1.msra.mxu0 0.0
        %2780 = vmatprep.subr.mxu0 0.0
        %2781 = vmatpush1.msra.mxu0 0.0
        %2782 = vmatprep.subr.mxu0 0.0
        %2783 = vmatpush1.msra.mxu0 0.0
        %2784 = vmatprep.subr.mxu0 0.0
        %2785 = vmatpush1.msra.mxu0 0.0
        %2786 = vmatprep.subr.mxu0 0.0
        %2787 = vmatpush1.msra.mxu0 0.0
        %2788 = vmatprep.subr.mxu0 0.0
        %2789 = vmatpush1.msra.mxu0 0.0
        %2790 = vmatprep.subr.mxu0 0.0
        %2791 = vmatpush1.msra.mxu0 0.0
        %2792 = vmatprep.subr.mxu0 0.0
        %2793 = vmatpush1.msra.mxu0 0.0
        %2794 = vmatprep.subr.mxu0 0.0
        %2795 = vmatpush1.msra.mxu0 0.0
        %2796 = vmatprep.subr.mxu0 0.0
        %2797 = vmatpush1.msra.mxu0 0.0
        %2798 = vmatprep.subr.mxu0 0.0
        %2799 = vmatpush1.msra.mxu0 0.0
        %2800 = vmatprep.subr.mxu0 0.0
        %2801 = vmatpush1.msra.mxu0 0.0
        %2802 = vmatprep.subr.mxu0 0.0
        %2803 = vmatpush1.msra.mxu0 0.0
        %2804 = vmatprep.subr.mxu0 0.0
        %2805 = vmatpush1.msra.mxu0 0.0
        %2806 = vmatprep.subr.mxu0 0.0
        %2807 = vmatpush1.msra.mxu0 0.0
        %2808 = vmatprep.mubr.f32.mxu0 0.0
        %2809 = vmatmul.mubr.f32.gmra.mrb[0].mxu0 %v2742
        %v2810 = vpop.f32.mrb[0].mxu0
        %v2811 = vadd.f32 %v870, %v2810
        %v2812 = vpop.f32.mrb[0].mxu0
        %2813 = vdwg.mxu0
        %2814 = vmatprep.subr.mxu0 0.0
        %2815 = vmatpush1.msra.mxu0 %v506
        %2816 = vmatprep.subr.mxu0 0.0
        %2817 = vmatpush1.msra.mxu0 %v507
        %2818 = vmatprep.subr.mxu0 0.0
        %2819 = vmatpush1.msra.mxu0 %v508
        %2820 = vmatprep.subr.mxu0 0.0
        %2821 = vmatpush1.msra.mxu0 %v509
        %2822 = vmatprep.subr.mxu0 0.0
        %2823 = vmatpush1.msra.mxu0 0.0
        %2824 = vmatprep.subr.mxu0 0.0
        %2825 = vmatpush1.msra.mxu0 0.0
        %2826 = vmatprep.subr.mxu0 0.0
        %2827 = vmatpush1.msra.mxu0 0.0
        %2828 = vmatprep.subr.mxu0 0.0
        %2829 = vmatpush1.msra.mxu0 0.0
        %2830 = vmatprep.subr.mxu0 0.0
        %2831 = vmatpush1.msra.mxu0 0.0
        %2832 = vmatprep.subr.mxu0 0.0
        %2833 = vmatpush1.msra.mxu0 0.0
        %2834 = vmatprep.subr.mxu0 0.0
        %2835 = vmatpush1.msra.mxu0 0.0
        %2836 = vmatprep.subr.mxu0 0.0
        %2837 = vmatpush1.msra.mxu0 0.0
        %2838 = vmatprep.subr.mxu0 0.0
        %2839 = vmatpush1.msra.mxu0 0.0
        %2840 = vmatprep.subr.mxu0 0.0
        %2841 = vmatpush1.msra.mxu0 0.0
        %2842 = vmatprep.subr.mxu0 0.0
        %2843 = vmatpush1.msra.mxu0 0.0
        %2844 = vmatprep.subr.mxu0 0.0
        %2845 = vmatpush1.msra.mxu0 0.0
        %2846 = vmatprep.subr.mxu0 0.0
        %2847 = vmatpush1.msra.mxu0 0.0
        %2848 = vmatprep.subr.mxu0 0.0
        %2849 = vmatpush1.msra.mxu0 0.0
        %2850 = vmatprep.subr.mxu0 0.0
        %2851 = vmatpush1.msra.mxu0 0.0
        %2852 = vmatprep.subr.mxu0 0.0
        %2853 = vmatpush1.msra.mxu0 0.0
        %2854 = vmatprep.subr.mxu0 0.0
        %2855 = vmatpush1.msra.mxu0 0.0
        %2856 = vmatprep.subr.mxu0 0.0
        %2857 = vmatpush1.msra.mxu0 0.0
        %2858 = vmatprep.subr.mxu0 0.0
        %2859 = vmatpush1.msra.mxu0 0.0
        %2860 = vmatprep.subr.mxu0 0.0
        %2861 = vmatpush1.msra.mxu0 0.0
        %2862 = vmatprep.subr.mxu0 0.0
        %2863 = vmatpush1.msra.mxu0 0.0
        %2864 = vmatprep.subr.mxu0 0.0
        %2865 = vmatpush1.msra.mxu0 0.0
        %2866 = vmatprep.subr.mxu0 0.0
        %2867 = vmatpush1.msra.mxu0 0.0
        %2868 = vmatprep.subr.mxu0 0.0
        %2869 = vmatpush1.msra.mxu0 0.0
        %2870 = vmatprep.subr.mxu0 0.0
        %2871 = vmatpush1.msra.mxu0 0.0
        %2872 = vmatprep.subr.mxu0 0.0
        %2873 = vmatpush1.msra.mxu0 0.0
        %2874 = vmatprep.subr.mxu0 0.0
        %2875 = vmatpush1.msra.mxu0 0.0
        %2876 = vmatprep.subr.mxu0 0.0
        %2877 = vmatpush1.msra.mxu0 0.0
        %2878 = vmatprep.mubr.f32.mxu0 0.0
        %2879 = vmatmul.mubr.f32.gmra.mrb[0].mxu0 %v2742
        %v2880 = vpop.f32.mrb[0].mxu0
        %v2881 = vadd.f32 %v874, %v2880
        %v2882 = vpop.f32.mrb[0].mxu0
        %2883 = vdwg.mxu0
        %2884 = vmatprep.subr.mxu0 0.0
        %2885 = vmatpush1.msra.mxu0 %v510
        %2886 = vmatprep.subr.mxu0 0.0
        %2887 = vmatpush1.msra.mxu0 %v511
        %2888 = vmatprep.subr.mxu0 0.0
        %2889 = vmatpush1.msra.mxu0 %v512
        %2890 = vmatprep.subr.mxu0 0.0
        %2891 = vmatpush1.msra.mxu0 %v513
        %2892 = vmatprep.subr.mxu0 0.0
        %2893 = vmatpush1.msra.mxu0 0.0
        %2894 = vmatprep.subr.mxu0 0.0
        %2895 = vmatpush1.msra.mxu0 0.0
        %2896 = vmatprep.subr.mxu0 0.0
        %2897 = vmatpush1.msra.mxu0 0.0
        %2898 = vmatprep.subr.mxu0 0.0
        %2899 = vmatpush1.msra.mxu0 0.0
        %2900 = vmatprep.subr.mxu0 0.0
        %2901 = vmatpush1.msra.mxu0 0.0
        %2902 = vmatprep.subr.mxu0 0.0
        %2903 = vmatpush1.msra.mxu0 0.0
        %2904 = vmatprep.subr.mxu0 0.0
        %2905 = vmatpush1.msra.mxu0 0.0
        %2906 = vmatprep.subr.mxu0 0.0
        %2907 = vmatpush1.msra.mxu0 0.0
        %2908 = vmatprep.subr.mxu0 0.0
        %2909 = vmatpush1.msra.mxu0 0.0
        %2910 = vmatprep.subr.mxu0 0.0
        %2911 = vmatpush1.msra.mxu0 0.0
        %2912 = vmatprep.subr.mxu0 0.0
        %2913 = vmatpush1.msra.mxu0 0.0
        %2914 = vmatprep.subr.mxu0 0.0
        %2915 = vmatpush1.msra.mxu0 0.0
        %2916 = vmatprep.subr.mxu0 0.0
        %2917 = vmatpush1.msra.mxu0 0.0
        %2918 = vmatprep.subr.mxu0 0.0
        %2919 = vmatpush1.msra.mxu0 0.0
        %2920 = vmatprep.subr.mxu0 0.0
        %2921 = vmatpush1.msra.mxu0 0.0
        %2922 = vmatprep.subr.mxu0 0.0
        %2923 = vmatpush1.msra.mxu0 0.0
        %2924 = vmatprep.subr.mxu0 0.0
        %2925 = vmatpush1.msra.mxu0 0.0
        %2926 = vmatprep.subr.mxu0 0.0
        %2927 = vmatpush1.msra.mxu0 0.0
        %2928 = vmatprep.subr.mxu0 0.0
        %2929 = vmatpush1.msra.mxu0 0.0
        %2930 = vmatprep.subr.mxu0 0.0
        %2931 = vmatpush1.msra.mxu0 0.0
        %2932 = vmatprep.subr.mxu0 0.0
        %2933 = vmatpush1.msra.mxu0 0.0
        %2934 = vmatprep.subr.mxu0 0.0
        %2935 = vmatpush1.msra.mxu0 0.0
        %2936 = vmatprep.subr.mxu0 0.0
        %2937 = vmatpush1.msra.mxu0 0.0
        %2938 = vmatprep.subr.mxu0 0.0
        %2939 = vmatpush1.msra.mxu0 0.0
        %2940 = vmatprep.subr.mxu0 0.0
        %2941 = vmatpush1.msra.mxu0 0.0
        %2942 = vmatprep.subr.mxu0 0.0
        %2943 = vmatpush1.msra.mxu0 0.0
        %2944 = vmatprep.subr.mxu0 0.0
        %2945 = vmatpush1.msra.mxu0 0.0
        %2946 = vmatprep.subr.mxu0 0.0
        %2947 = vmatpush1.msra.mxu0 0.0
        %2948 = vmatprep.mubr.f32.mxu0 0.0
        %2949 = vmatmul.mubr.f32.gmra.mrb[0].mxu0 %v2742
        %v2950 = vpop.f32.mrb[0].mxu0
        %v2951 = vadd.f32 %v878, %v2950
        %v2952 = vpop.f32.mrb[0].mxu0
        %2953 = vdwg.mxu0
        %2954 = vmatprep.subr.mxu0 0.0
        %2955 = vmatpush1.msra.mxu0 %v514
        %2956 = vmatprep.subr.mxu0 0.0
        %2957 = vmatpush1.msra.mxu0 %v515
        %2958 = vmatprep.subr.mxu0 0.0
        %2959 = vmatpush1.msra.mxu0 %v516
        %2960 = vmatprep.subr.mxu0 0.0
        %2961 = vmatpush1.msra.mxu0 %v517
        %2962 = vmatprep.subr.mxu0 0.0
        %2963 = vmatpush1.msra.mxu0 0.0
        %2964 = vmatprep.subr.mxu0 0.0
        %2965 = vmatpush1.msra.mxu0 0.0
        %2966 = vmatprep.subr.mxu0 0.0
        %2967 = vmatpush1.msra.mxu0 0.0
        %2968 = vmatprep.subr.mxu0 0.0
        %2969 = vmatpush1.msra.mxu0 0.0
        %2970 = vmatprep.subr.mxu0 0.0
        %2971 = vmatpush1.msra.mxu0 0.0
        %2972 = vmatprep.subr.mxu0 0.0
        %2973 = vmatpush1.msra.mxu0 0.0
        %2974 = vmatprep.subr.mxu0 0.0
        %2975 = vmatpush1.msra.mxu0 0.0
        %2976 = vmatprep.subr.mxu0 0.0
        %2977 = vmatpush1.msra.mxu0 0.0
        %2978 = vmatprep.subr.mxu0 0.0
        %2979 = vmatpush1.msra.mxu0 0.0
        %2980 = vmatprep.subr.mxu0 0.0
        %2981 = vmatpush1.msra.mxu0 0.0
        %2982 = vmatprep.subr.mxu0 0.0
        %2983 = vmatpush1.msra.mxu0 0.0
        %2984 = vmatprep.subr.mxu0 0.0
        %2985 = vmatpush1.msra.mxu0 0.0
        %2986 = vmatprep.subr.mxu0 0.0
        %2987 = vmatpush1.msra.mxu0 0.0
        %2988 = vmatprep.subr.mxu0 0.0
        %2989 = vmatpush1.msra.mxu0 0.0
        %2990 = vmatprep.subr.mxu0 0.0
        %2991 = vmatpush1.msra.mxu0 0.0
        %2992 = vmatprep.subr.mxu0 0.0
        %2993 = vmatpush1.msra.mxu0 0.0
        %2994 = vmatprep.subr.mxu0 0.0
        %2995 = vmatpush1.msra.mxu0 0.0
        %2996 = vmatprep.subr.mxu0 0.0
        %2997 = vmatpush1.msra.mxu0 0.0
        %2998 = vmatprep.subr.mxu0 0.0
        %2999 = vmatpush1.msra.mxu0 0.0
        %3000 = vmatprep.subr.mxu0 0.0
        %3001 = vmatpush1.msra.mxu0 0.0
        %3002 = vmatprep.subr.mxu0 0.0
        %3003 = vmatpush1.msra.mxu0 0.0
        %3004 = vmatprep.subr.mxu0 0.0
        %3005 = vmatpush1.msra.mxu0 0.0
        %3006 = vmatprep.subr.mxu0 0.0
        %3007 = vmatpush1.msra.mxu0 0.0
        %3008 = vmatprep.subr.mxu0 0.0
        %3009 = vmatpush1.msra.mxu0 0.0
        %3010 = vmatprep.subr.mxu0 0.0
        %3011 = vmatpush1.msra.mxu0 0.0
        %3012 = vmatprep.subr.mxu0 0.0
        %3013 = vmatpush1.msra.mxu0 0.0
        %3014 = vmatprep.subr.mxu0 0.0
        %3015 = vmatpush1.msra.mxu0 0.0
        %3016 = vmatprep.subr.mxu0 0.0
        %3017 = vmatpush1.msra.mxu0 0.0
        %3018 = vmatprep.mubr.f32.mxu0 0.0
        %3019 = vmatmul.mubr.f32.gmra.mrb[0].mxu0 %v2742
        %v3020 = vpop.f32.mrb[0].mxu0
        %v3021 = vadd.f32 %v882, %v3020
        %v3022 = vpop.f32.mrb[0].mxu0
        %3023 = vdwg.mxu0
        %3024 = vmatprep.subr.mxu0 0.0
        %3025 = vmatpush1.msra.mxu0 %v522
        %3026 = vmatprep.subr.mxu0 0.0
        %3027 = vmatpush1.msra.mxu0 %v523
        %3028 = vmatprep.subr.mxu0 0.0
        %3029 = vmatpush1.msra.mxu0 %v524
        %3030 = vmatprep.subr.mxu0 0.0
        %3031 = vmatpush1.msra.mxu0 %v525
        %3032 = vmatprep.subr.mxu0 0.0
        %3033 = vmatpush1.msra.mxu0 0.0
        %3034 = vmatprep.subr.mxu0 0.0
        %3035 = vmatpush1.msra.mxu0 0.0
        %3036 = vmatprep.subr.mxu0 0.0
        %3037 = vmatpush1.msra.mxu0 0.0
        %3038 = vmatprep.subr.mxu0 0.0
        %3039 = vmatpush1.msra.mxu0 0.0
        %3040 = vmatprep.subr.mxu0 0.0
        %3041 = vmatpush1.msra.mxu0 0.0
        %3042 = vmatprep.subr.mxu0 0.0
        %3043 = vmatpush1.msra.mxu0 0.0
        %3044 = vmatprep.subr.mxu0 0.0
        %3045 = vmatpush1.msra.mxu0 0.0
        %3046 = vmatprep.subr.mxu0 0.0
        %3047 = vmatpush1.msra.mxu0 0.0
        %3048 = vmatprep.subr.mxu0 0.0
        %3049 = vmatpush1.msra.mxu0 0.0
        %3050 = vmatprep.subr.mxu0 0.0
        %3051 = vmatpush1.msra.mxu0 0.0
        %3052 = vmatprep.subr.mxu0 0.0
        %3053 = vmatpush1.msra.mxu0 0.0
        %3054 = vmatprep.subr.mxu0 0.0
        %3055 = vmatpush1.msra.mxu0 0.0
        %3056 = vmatprep.subr.mxu0 0.0
        %3057 = vmatpush1.msra.mxu0 0.0
        %3058 = vmatprep.subr.mxu0 0.0
        %3059 = vmatpush1.msra.mxu0 0.0
        %3060 = vmatprep.subr.mxu0 0.0
        %3061 = vmatpush1.msra.mxu0 0.0
        %3062 = vmatprep.subr.mxu0 0.0
        %3063 = vmatpush1.msra.mxu0 0.0
        %3064 = vmatprep.subr.mxu0 0.0
        %3065 = vmatpush1.msra.mxu0 0.0
        %3066 = vmatprep.subr.mxu0 0.0
        %3067 = vmatpush1.msra.mxu0 0.0
        %3068 = vmatprep.subr.mxu0 0.0
        %3069 = vmatpush1.msra.mxu0 0.0
        %3070 = vmatprep.subr.mxu0 0.0
        %3071 = vmatpush1.msra.mxu0 0.0
        %3072 = vmatprep.subr.mxu0 0.0
        %3073 = vmatpush1.msra.mxu0 0.0
        %3074 = vmatprep.subr.mxu0 0.0
        %3075 = vmatpush1.msra.mxu0 0.0
        %3076 = vmatprep.subr.mxu0 0.0
        %3077 = vmatpush1.msra.mxu0 0.0
        %3078 = vmatprep.subr.mxu0 0.0
        %3079 = vmatpush1.msra.mxu0 0.0
        %3080 = vmatprep.subr.mxu0 0.0
        %3081 = vmatpush1.msra.mxu0 0.0
        %3082 = vmatprep.subr.mxu0 0.0
        %3083 = vmatpush1.msra.mxu0 0.0
        %3084 = vmatprep.subr.mxu0 0.0
        %3085 = vmatpush1.msra.mxu0 0.0
        %3086 = vmatprep.subr.mxu0 0.0
        %3087 = vmatpush1.msra.mxu0 0.0
        %3088 = vmatprep.mubr.f32.mxu0 0.0
        %3089 = vmatmul.mubr.f32.gmra.mrb[0].mxu0 %v2742
        %v3090 = vpop.f32.mrb[0].mxu0
        %v3091 = vadd.f32 %v1174, %v3090
        %v3092 = vpop.f32.mrb[0].mxu0
        %3093 = vdwg.mxu0
        %3094 = vmatprep.subr.mxu0 0.0
        %3095 = vmatpush1.msra.mxu0 %v526
        %3096 = vmatprep.subr.mxu0 0.0
        %3097 = vmatpush1.msra.mxu0 %v527
        %3098 = vmatprep.subr.mxu0 0.0
        %3099 = vmatpush1.msra.mxu0 %v528
        %3100 = vmatprep.subr.mxu0 0.0
        %3101 = vmatpush1.msra.mxu0 %v529
        %3102 = vmatprep.subr.mxu0 0.0
        %3103 = vmatpush1.msra.mxu0 0.0
        %3104 = vmatprep.subr.mxu0 0.0
        %3105 = vmatpush1.msra.mxu0 0.0
        %3106 = vmatprep.subr.mxu0 0.0
        %3107 = vmatpush1.msra.mxu0 0.0
        %3108 = vmatprep.subr.mxu0 0.0
        %3109 = vmatpush1.msra.mxu0 0.0
        %3110 = vmatprep.subr.mxu0 0.0
        %3111 = vmatpush1.msra.mxu0 0.0
        %3112 = vmatprep.subr.mxu0 0.0
        %3113 = vmatpush1.msra.mxu0 0.0
        %3114 = vmatprep.subr.mxu0 0.0
        %3115 = vmatpush1.msra.mxu0 0.0
        %3116 = vmatprep.subr.mxu0 0.0
        %3117 = vmatpush1.msra.mxu0 0.0
        %3118 = vmatprep.subr.mxu0 0.0
        %3119 = vmatpush1.msra.mxu0 0.0
        %3120 = vmatprep.subr.mxu0 0.0
        %3121 = vmatpush1.msra.mxu0 0.0
        %3122 = vmatprep.subr.mxu0 0.0
        %3123 = vmatpush1.msra.mxu0 0.0
        %3124 = vmatprep.subr.mxu0 0.0
        %3125 = vmatpush1.msra.mxu0 0.0
        %3126 = vmatprep.subr.mxu0 0.0
        %3127 = vmatpush1.msra.mxu0 0.0
        %3128 = vmatprep.subr.mxu0 0.0
        %3129 = vmatpush1.msra.mxu0 0.0
        %3130 = vmatprep.subr.mxu0 0.0
        %3131 = vmatpush1.msra.mxu0 0.0
        %3132 = vmatprep.subr.mxu0 0.0
        %3133 = vmatpush1.msra.mxu0 0.0
        %3134 = vmatprep.subr.mxu0 0.0
        %3135 = vmatpush1.msra.mxu0 0.0
        %3136 = vmatprep.subr.mxu0 0.0
        %3137 = vmatpush1.msra.mxu0 0.0
        %3138 = vmatprep.subr.mxu0 0.0
        %3139 = vmatpush1.msra.mxu0 0.0
        %3140 = vmatprep.subr.mxu0 0.0
        %3141 = vmatpush1.msra.mxu0 0.0
        %3142 = vmatprep.subr.mxu0 0.0
        %3143 = vmatpush1.msra.mxu0 0.0
        %3144 = vmatprep.subr.mxu0 0.0
        %3145 = vmatpush1.msra.mxu0 0.0
        %3146 = vmatprep.subr.mxu0 0.0
        %3147 = vmatpush1.msra.mxu0 0.0
        %3148 = vmatprep.subr.mxu0 0.0
        %3149 = vmatpush1.msra.mxu0 0.0
        %3150 = vmatprep.subr.mxu0 0.0
        %3151 = vmatpush1.msra.mxu0 0.0
        %3152 = vmatprep.subr.mxu0 0.0
        %3153 = vmatpush1.msra.mxu0 0.0
        %3154 = vmatprep.subr.mxu0 0.0
        %3155 = vmatpush1.msra.mxu0 0.0
        %3156 = vmatprep.subr.mxu0 0.0
        %3157 = vmatpush1.msra.mxu0 0.0
        %3158 = vmatprep.mubr.f32.mxu0 0.0
        %3159 = vmatmul.mubr.f32.gmra.mrb[0].mxu0 %v2742
        %v3160 = vpop.f32.mrb[0].mxu0
        %v3161 = vadd.f32 %v1178, %v3160
        %v3162 = vpop.f32.mrb[0].mxu0
        %3163 = vdwg.mxu0
        %3164 = vmatprep.subr.mxu0 0.0
        %3165 = vmatpush1.msra.mxu0 %v530
        %3166 = vmatprep.subr.mxu0 0.0
        %3167 = vmatpush1.msra.mxu0 %v531
        %3168 = vmatprep.subr.mxu0 0.0
        %3169 = vmatpush1.msra.mxu0 %v532
        %3170 = vmatprep.subr.mxu0 0.0
        %3171 = vmatpush1.msra.mxu0 %v533
        %3172 = vmatprep.subr.mxu0 0.0
        %3173 = vmatpush1.msra.mxu0 0.0
        %3174 = vmatprep.subr.mxu0 0.0
        %3175 = vmatpush1.msra.mxu0 0.0
        %3176 = vmatprep.subr.mxu0 0.0
        %3177 = vmatpush1.msra.mxu0 0.0
        %3178 = vmatprep.subr.mxu0 0.0
        %3179 = vmatpush1.msra.mxu0 0.0
        %3180 = vmatprep.subr.mxu0 0.0
        %3181 = vmatpush1.msra.mxu0 0.0
        %3182 = vmatprep.subr.mxu0 0.0
        %3183 = vmatpush1.msra.mxu0 0.0
        %3184 = vmatprep.subr.mxu0 0.0
        %3185 = vmatpush1.msra.mxu0 0.0
        %3186 = vmatprep.subr.mxu0 0.0
        %3187 = vmatpush1.msra.mxu0 0.0
        %3188 = vmatprep.subr.mxu0 0.0
        %3189 = vmatpush1.msra.mxu0 0.0
        %3190 = vmatprep.subr.mxu0 0.0
        %3191 = vmatpush1.msra.mxu0 0.0
        %3192 = vmatprep.subr.mxu0 0.0
        %3193 = vmatpush1.msra.mxu0 0.0
        %3194 = vmatprep.subr.mxu0 0.0
        %3195 = vmatpush1.msra.mxu0 0.0
        %3196 = vmatprep.subr.mxu0 0.0
        %3197 = vmatpush1.msra.mxu0 0.0
        %3198 = vmatprep.subr.mxu0 0.0
        %3199 = vmatpush1.msra.mxu0 0.0
        %3200 = vmatprep.subr.mxu0 0.0
        %3201 = vmatpush1.msra.mxu0 0.0
        %3202 = vmatprep.subr.mxu0 0.0
        %3203 = vmatpush1.msra.mxu0 0.0
        %3204 = vmatprep.subr.mxu0 0.0
        %3205 = vmatpush1.msra.mxu0 0.0
        %3206 = vmatprep.subr.mxu0 0.0
        %3207 = vmatpush1.msra.mxu0 0.0
        %3208 = vmatprep.subr.mxu0 0.0
        %3209 = vmatpush1.msra.mxu0 0.0
        %3210 = vmatprep.subr.mxu0 0.0
        %3211 = vmatpush1.msra.mxu0 0.0
        %3212 = vmatprep.subr.mxu0 0.0
        %3213 = vmatpush1.msra.mxu0 0.0
        %3214 = vmatprep.subr.mxu0 0.0
        %3215 = vmatpush1.msra.mxu0 0.0
        %3216 = vmatprep.subr.mxu0 0.0
        %3217 = vmatpush1.msra.mxu0 0.0
        %3218 = vmatprep.subr.mxu0 0.0
        %3219 = vmatpush1.msra.mxu0 0.0
        %3220 = vmatprep.subr.mxu0 0.0
        %3221 = vmatpush1.msra.mxu0 0.0
        %3222 = vmatprep.subr.mxu0 0.0
        %3223 = vmatpush1.msra.mxu0 0.0
        %3224 = vmatprep.subr.mxu0 0.0
        %3225 = vmatpush1.msra.mxu0 0.0
        %3226 = vmatprep.subr.mxu0 0.0
        %3227 = vmatpush1.msra.mxu0 0.0
        %3228 = vmatprep.mubr.f32.mxu0 0.0
        %3229 = vmatmul.mubr.f32.gmra.mrb[0].mxu0 %v2742
        %v3230 = vpop.f32.mrb[0].mxu0
        %v3231 = vadd.f32 %v1182, %v3230
        %v3232 = vpop.f32.mrb[0].mxu0
        %3233 = vdwg.mxu0
        %3234 = vmatprep.subr.mxu0 0.0
        %3235 = vmatpush1.msra.mxu0 %v534
        %3236 = vmatprep.subr.mxu0 0.0
        %3237 = vmatpush1.msra.mxu0 %v535
        %3238 = vmatprep.subr.mxu0 0.0
        %3239 = vmatpush1.msra.mxu0 %v536
        %3240 = vmatprep.subr.mxu0 0.0
        %3241 = vmatpush1.msra.mxu0 %v537
        %3242 = vmatprep.subr.mxu0 0.0
        %3243 = vmatpush1.msra.mxu0 0.0
        %3244 = vmatprep.subr.mxu0 0.0
        %3245 = vmatpush1.msra.mxu0 0.0
        %3246 = vmatprep.subr.mxu0 0.0
        %3247 = vmatpush1.msra.mxu0 0.0
        %3248 = vmatprep.subr.mxu0 0.0
        %3249 = vmatpush1.msra.mxu0 0.0
        %3250 = vmatprep.subr.mxu0 0.0
        %3251 = vmatpush1.msra.mxu0 0.0
        %3252 = vmatprep.subr.mxu0 0.0
        %3253 = vmatpush1.msra.mxu0 0.0
        %3254 = vmatprep.subr.mxu0 0.0
        %3255 = vmatpush1.msra.mxu0 0.0
        %3256 = vmatprep.subr.mxu0 0.0
        %3257 = vmatpush1.msra.mxu0 0.0
        %3258 = vmatprep.subr.mxu0 0.0
        %3259 = vmatpush1.msra.mxu0 0.0
        %3260 = vmatprep.subr.mxu0 0.0
        %3261 = vmatpush1.msra.mxu0 0.0
        %3262 = vmatprep.subr.mxu0 0.0
        %3263 = vmatpush1.msra.mxu0 0.0
        %3264 = vmatprep.subr.mxu0 0.0
        %3265 = vmatpush1.msra.mxu0 0.0
        %3266 = vmatprep.subr.mxu0 0.0
        %3267 = vmatpush1.msra.mxu0 0.0
        %3268 = vmatprep.subr.mxu0 0.0
        %3269 = vmatpush1.msra.mxu0 0.0
        %3270 = vmatprep.subr.mxu0 0.0
        %3271 = vmatpush1.msra.mxu0 0.0
        %3272 = vmatprep.subr.mxu0 0.0
        %3273 = vmatpush1.msra.mxu0 0.0
        %3274 = vmatprep.subr.mxu0 0.0
        %3275 = vmatpush1.msra.mxu0 0.0
        %3276 = vmatprep.subr.mxu0 0.0
        %3277 = vmatpush1.msra.mxu0 0.0
        %3278 = vmatprep.subr.mxu0 0.0
        %3279 = vmatpush1.msra.mxu0 0.0
        %3280 = vmatprep.subr.mxu0 0.0
        %3281 = vmatpush1.msra.mxu0 0.0
        %3282 = vmatprep.subr.mxu0 0.0
        %3283 = vmatpush1.msra.mxu0 0.0
        %3284 = vmatprep.subr.mxu0 0.0
        %3285 = vmatpush1.msra.mxu0 0.0
        %3286 = vmatprep.subr.mxu0 0.0
        %3287 = vmatpush1.msra.mxu0 0.0
        %3288 = vmatprep.subr.mxu0 0.0
        %3289 = vmatpush1.msra.mxu0 0.0
        %3290 = vmatprep.subr.mxu0 0.0
        %3291 = vmatpush1.msra.mxu0 0.0
        %3292 = vmatprep.subr.mxu0 0.0
        %3293 = vmatpush1.msra.mxu0 0.0
        %3294 = vmatprep.subr.mxu0 0.0
        %3295 = vmatpush1.msra.mxu0 0.0
        %3296 = vmatprep.subr.mxu0 0.0
        %3297 = vmatpush1.msra.mxu0 0.0
        %3298 = vmatprep.mubr.f32.mxu0 0.0
        %3299 = vmatmul.mubr.f32.gmra.mrb[0].mxu0 %v2742
        %v3300 = vpop.f32.mrb[0].mxu0
        %v3301 = vadd.f32 %v1186, %v3300
        %v3302 = vpop.f32.mrb[0].mxu0
        %3303 = vdwg.mxu0
        %v3305 = vsel %vm1471, %v2528, 0
        %v3308 = vsel %vm1471, %v2811, 0
        %3310 = vmatprep.subr.mxu0 0.0
        %3311 = vmatpush1.xpose.msra.mxu0 %v3308
        %3312 = vmatprep.subr.mxu0 0.0
        %3313 = vmatpush1.xpose.msra.mxu0 0.0
        %3314 = vmatprep.subr.mxu0 0.0
        %3315 = vmatpush1.xpose.msra.mxu0 0.0
        %3316 = vmatprep.subr.mxu0 0.0
        %3317 = vmatpush1.xpose.msra.mxu0 0.0
        %3318 = vmatprep.subr.mxu0 0.0
        %3319 = vmatpush1.xpose.msra.mxu0 0.0
        %3320 = vmatprep.subr.mxu0 0.0
        %3321 = vmatpush1.xpose.msra.mxu0 0.0
        %3322 = vmatprep.subr.mxu0 0.0
        %3323 = vmatpush1.xpose.msra.mxu0 0.0
        %3324 = vmatprep.subr.mxu0 0.0
        %3325 = vmatpush1.xpose.msra.mxu0 0.0
        %3326 = vmatprep.subr.mxu0 0.0
        %3327 = vmatpush1.xpose.msra.mxu0 0.0
        %3328 = vmatprep.subr.mxu0 0.0
        %3329 = vmatpush1.xpose.msra.mxu0 0.0
        %3330 = vmatprep.subr.mxu0 0.0
        %3331 = vmatpush1.xpose.msra.mxu0 0.0
        %3332 = vmatprep.subr.mxu0 0.0
        %3333 = vmatpush1.xpose.msra.mxu0 0.0
        %3334 = vmatprep.subr.mxu0 0.0
        %3335 = vmatpush1.xpose.msra.mxu0 0.0
        %3336 = vmatprep.subr.mxu0 0.0
        %3337 = vmatpush1.xpose.msra.mxu0 0.0
        %3338 = vmatprep.subr.mxu0 0.0
        %3339 = vmatpush1.xpose.msra.mxu0 0.0
        %3340 = vmatprep.subr.mxu0 0.0
        %3341 = vmatpush1.xpose.msra.mxu0 0.0
        %3342 = vmatprep.subr.mxu0 0.0
        %3343 = vmatpush1.xpose.msra.mxu0 0.0
        %3344 = vmatprep.subr.mxu0 0.0
        %3345 = vmatpush1.xpose.msra.mxu0 0.0
        %3346 = vmatprep.subr.mxu0 0.0
        %3347 = vmatpush1.xpose.msra.mxu0 0.0
        %3348 = vmatprep.subr.mxu0 0.0
        %3349 = vmatpush1.xpose.msra.mxu0 0.0
        %3350 = vmatprep.subr.mxu0 0.0
        %3351 = vmatpush1.xpose.msra.mxu0 0.0
        %3352 = vmatprep.subr.mxu0 0.0
        %3353 = vmatpush1.xpose.msra.mxu0 0.0
        %3354 = vmatprep.subr.mxu0 0.0
        %3355 = vmatpush1.xpose.msra.mxu0 0.0
        %3356 = vmatprep.subr.mxu0 0.0
        %3357 = vmatpush1.xpose.msra.mxu0 0.0
        %3358 = vmatprep.subr.mxu0 0.0
        %3359 = vmatpush1.xpose.msra.mxu0 0.0
        %3360 = vmatprep.subr.mxu0 0.0
        %3361 = vmatpush1.xpose.msra.mxu0 0.0
        %3362 = vmatprep.subr.mxu0 0.0
        %3363 = vmatpush1.xpose.msra.mxu0 0.0
        %3364 = vmatprep.subr.mxu0 0.0
        %3365 = vmatpush1.xpose.msra.mxu0 0.0
        %3366 = vmatprep.subr.mxu0 0.0
        %3367 = vmatpush1.xpose.msra.mxu0 0.0
        %3368 = vmatprep.subr.mxu0 0.0
        %3369 = vmatpush1.xpose.msra.mxu0 0.0
        %3370 = vmatprep.subr.mxu0 0.0
        %3371 = vmatpush1.xpose.msra.mxu0 0.0
        %3372 = vmatprep.subr.mxu0 0.0
        %3373 = vmatpush1.xpose.msra.mxu0 0.0
        %3374 = vmatprep.mubr.f32.mxu0 0.0
        %3375 = vmatmul.mubr.f32.gmra.mrb[0].mxu0 %v3305
        %v3376 = vpop.f32.mrb[0].mxu0
        %v3377 = vadd.f32 0.0, %v3376
        %v3378 = vpop.f32.mrb[0].mxu0
        %3379 = vdwg.mxu0
        %v3381 = vsel %vm1471, %v2598, 0
        %v3384 = vsel %vm1471, %v2881, 0
        %3386 = vmatprep.subr.mxu0 0.0
        %3387 = vmatpush1.xpose.msra.mxu0 %v3384
        %3388 = vmatprep.subr.mxu0 0.0
        %3389 = vmatpush1.xpose.msra.mxu0 0.0
        %3390 = vmatprep.subr.mxu0 0.0
        %3391 = vmatpush1.xpose.msra.mxu0 0.0
        %3392 = vmatprep.subr.mxu0 0.0
        %3393 = vmatpush1.xpose.msra.mxu0 0.0
        %3394 = vmatprep.subr.mxu0 0.0
        %3395 = vmatpush1.xpose.msra.mxu0 0.0
        %3396 = vmatprep.subr.mxu0 0.0
        %3397 = vmatpush1.xpose.msra.mxu0 0.0
        %3398 = vmatprep.subr.mxu0 0.0
        %3399 = vmatpush1.xpose.msra.mxu0 0.0
        %3400 = vmatprep.subr.mxu0 0.0
        %3401 = vmatpush1.xpose.msra.mxu0 0.0
        %3402 = vmatprep.subr.mxu0 0.0
        %3403 = vmatpush1.xpose.msra.mxu0 0.0
        %3404 = vmatprep.subr.mxu0 0.0
        %3405 = vmatpush1.xpose.msra.mxu0 0.0
        %3406 = vmatprep.subr.mxu0 0.0
        %3407 = vmatpush1.xpose.msra.mxu0 0.0
        %3408 = vmatprep.subr.mxu0 0.0
        %3409 = vmatpush1.xpose.msra.mxu0 0.0
        %3410 = vmatprep.subr.mxu0 0.0
        %3411 = vmatpush1.xpose.msra.mxu0 0.0
        %3412 = vmatprep.subr.mxu0 0.0
        %3413 = vmatpush1.xpose.msra.mxu0 0.0
        %3414 = vmatprep.subr.mxu0 0.0
        %3415 = vmatpush1.xpose.msra.mxu0 0.0
        %3416 = vmatprep.subr.mxu0 0.0
        %3417 = vmatpush1.xpose.msra.mxu0 0.0
        %3418 = vmatprep.subr.mxu0 0.0
        %3419 = vmatpush1.xpose.msra.mxu0 0.0
        %3420 = vmatprep.subr.mxu0 0.0
        %3421 = vmatpush1.xpose.msra.mxu0 0.0
        %3422 = vmatprep.subr.mxu0 0.0
        %3423 = vmatpush1.xpose.msra.mxu0 0.0
        %3424 = vmatprep.subr.mxu0 0.0
        %3425 = vmatpush1.xpose.msra.mxu0 0.0
        %3426 = vmatprep.subr.mxu0 0.0
        %3427 = vmatpush1.xpose.msra.mxu0 0.0
        %3428 = vmatprep.subr.mxu0 0.0
        %3429 = vmatpush1.xpose.msra.mxu0 0.0
        %3430 = vmatprep.subr.mxu0 0.0
        %3431 = vmatpush1.xpose.msra.mxu0 0.0
        %3432 = vmatprep.subr.mxu0 0.0
        %3433 = vmatpush1.xpose.msra.mxu0 0.0
        %3434 = vmatprep.subr.mxu0 0.0
        %3435 = vmatpush1.xpose.msra.mxu0 0.0
        %3436 = vmatprep.subr.mxu0 0.0
        %3437 = vmatpush1.xpose.msra.mxu0 0.0
        %3438 = vmatprep.subr.mxu0 0.0
        %3439 = vmatpush1.xpose.msra.mxu0 0.0
        %3440 = vmatprep.subr.mxu0 0.0
        %3441 = vmatpush1.xpose.msra.mxu0 0.0
        %3442 = vmatprep.subr.mxu0 0.0
        %3443 = vmatpush1.xpose.msra.mxu0 0.0
        %3444 = vmatprep.subr.mxu0 0.0
        %3445 = vmatpush1.xpose.msra.mxu0 0.0
        %3446 = vmatprep.subr.mxu0 0.0
        %3447 = vmatpush1.xpose.msra.mxu0 0.0
        %3448 = vmatprep.subr.mxu0 0.0
        %3449 = vmatpush1.xpose.msra.mxu0 0.0
        %3450 = vmatprep.mubr.f32.mxu0 0.0
        %3451 = vmatmul.mubr.f32.gmra.mrb[0].mxu0 %v3381
        %v3452 = vpop.f32.mrb[0].mxu0
        %v3453 = vadd.f32 0.0, %v3452
        %v3454 = vpop.f32.mrb[0].mxu0
        %3455 = vdwg.mxu0
        %v3457 = vsel %vm1471, %v2668, 0
        %v3460 = vsel %vm1471, %v2951, 0
        %3462 = vmatprep.subr.mxu0 0.0
        %3463 = vmatpush1.xpose.msra.mxu0 %v3460
        %3464 = vmatprep.subr.mxu0 0.0
        %3465 = vmatpush1.xpose.msra.mxu0 0.0
        %3466 = vmatprep.subr.mxu0 0.0
        %3467 = vmatpush1.xpose.msra.mxu0 0.0
        %3468 = vmatprep.subr.mxu0 0.0
        %3469 = vmatpush1.xpose.msra.mxu0 0.0
        %3470 = vmatprep.subr.mxu0 0.0
        %3471 = vmatpush1.xpose.msra.mxu0 0.0
        %3472 = vmatprep.subr.mxu0 0.0
        %3473 = vmatpush1.xpose.msra.mxu0 0.0
        %3474 = vmatprep.subr.mxu0 0.0
        %3475 = vmatpush1.xpose.msra.mxu0 0.0
        %3476 = vmatprep.subr.mxu0 0.0
        %3477 = vmatpush1.xpose.msra.mxu0 0.0
        %3478 = vmatprep.subr.mxu0 0.0
        %3479 = vmatpush1.xpose.msra.mxu0 0.0
        %3480 = vmatprep.subr.mxu0 0.0
        %3481 = vmatpush1.xpose.msra.mxu0 0.0
        %3482 = vmatprep.subr.mxu0 0.0
        %3483 = vmatpush1.xpose.msra.mxu0 0.0
        %3484 = vmatprep.subr.mxu0 0.0
        %3485 = vmatpush1.xpose.msra.mxu0 0.0
        %3486 = vmatprep.subr.mxu0 0.0
        %3487 = vmatpush1.xpose.msra.mxu0 0.0
        %3488 = vmatprep.subr.mxu0 0.0
        %3489 = vmatpush1.xpose.msra.mxu0 0.0
        %3490 = vmatprep.subr.mxu0 0.0
        %3491 = vmatpush1.xpose.msra.mxu0 0.0
        %3492 = vmatprep.subr.mxu0 0.0
        %3493 = vmatpush1.xpose.msra.mxu0 0.0
        %3494 = vmatprep.subr.mxu0 0.0
        %3495 = vmatpush1.xpose.msra.mxu0 0.0
        %3496 = vmatprep.subr.mxu0 0.0
        %3497 = vmatpush1.xpose.msra.mxu0 0.0
        %3498 = vmatprep.subr.mxu0 0.0
        %3499 = vmatpush1.xpose.msra.mxu0 0.0
        %3500 = vmatprep.subr.mxu0 0.0
        %3501 = vmatpush1.xpose.msra.mxu0 0.0
        %3502 = vmatprep.subr.mxu0 0.0
        %3503 = vmatpush1.xpose.msra.mxu0 0.0
        %3504 = vmatprep.subr.mxu0 0.0
        %3505 = vmatpush1.xpose.msra.mxu0 0.0
        %3506 = vmatprep.subr.mxu0 0.0
        %3507 = vmatpush1.xpose.msra.mxu0 0.0
        %3508 = vmatprep.subr.mxu0 0.0
        %3509 = vmatpush1.xpose.msra.mxu0 0.0
        %3510 = vmatprep.subr.mxu0 0.0
        %3511 = vmatpush1.xpose.msra.mxu0 0.0
        %3512 = vmatprep.subr.mxu0 0.0
        %3513 = vmatpush1.xpose.msra.mxu0 0.0
        %3514 = vmatprep.subr.mxu0 0.0
        %3515 = vmatpush1.xpose.msra.mxu0 0.0
        %3516 = vmatprep.subr.mxu0 0.0
        %3517 = vmatpush1.xpose.msra.mxu0 0.0
        %3518 = vmatprep.subr.mxu0 0.0
        %3519 = vmatpush1.xpose.msra.mxu0 0.0
        %3520 = vmatprep.subr.mxu0 0.0
        %3521 = vmatpush1.xpose.msra.mxu0 0.0
        %3522 = vmatprep.subr.mxu0 0.0
        %3523 = vmatpush1.xpose.msra.mxu0 0.0
        %3524 = vmatprep.subr.mxu0 0.0
        %3525 = vmatpush1.xpose.msra.mxu0 0.0
        %3526 = vmatprep.mubr.f32.mxu0 0.0
        %3527 = vmatmul.mubr.f32.gmra.mrb[0].mxu0 %v3457
        %v3528 = vpop.f32.mrb[0].mxu0
        %v3529 = vadd.f32 0.0, %v3528
        %v3530 = vpop.f32.mrb[0].mxu0
        %3531 = vdwg.mxu0
        %v3533 = vsel %vm1471, %v2738, 0
        %v3536 = vsel %vm1471, %v3021, 0
        %3538 = vmatprep.subr.mxu0 0.0
        %3539 = vmatpush1.xpose.msra.mxu0 %v3536
        %3540 = vmatprep.subr.mxu0 0.0
        %3541 = vmatpush1.xpose.msra.mxu0 0.0
        %3542 = vmatprep.subr.mxu0 0.0
        %3543 = vmatpush1.xpose.msra.mxu0 0.0
        %3544 = vmatprep.subr.mxu0 0.0
        %3545 = vmatpush1.xpose.msra.mxu0 0.0
        %3546 = vmatprep.subr.mxu0 0.0
        %3547 = vmatpush1.xpose.msra.mxu0 0.0
        %3548 = vmatprep.subr.mxu0 0.0
        %3549 = vmatpush1.xpose.msra.mxu0 0.0
        %3550 = vmatprep.subr.mxu0 0.0
        %3551 = vmatpush1.xpose.msra.mxu0 0.0
        %3552 = vmatprep.subr.mxu0 0.0
        %3553 = vmatpush1.xpose.msra.mxu0 0.0
        %3554 = vmatprep.subr.mxu0 0.0
        %3555 = vmatpush1.xpose.msra.mxu0 0.0
        %3556 = vmatprep.subr.mxu0 0.0
        %3557 = vmatpush1.xpose.msra.mxu0 0.0
        %3558 = vmatprep.subr.mxu0 0.0
        %3559 = vmatpush1.xpose.msra.mxu0 0.0
        %3560 = vmatprep.subr.mxu0 0.0
        %3561 = vmatpush1.xpose.msra.mxu0 0.0
        %3562 = vmatprep.subr.mxu0 0.0
        %3563 = vmatpush1.xpose.msra.mxu0 0.0
        %3564 = vmatprep.subr.mxu0 0.0
        %3565 = vmatpush1.xpose.msra.mxu0 0.0
        %3566 = vmatprep.subr.mxu0 0.0
        %3567 = vmatpush1.xpose.msra.mxu0 0.0
        %3568 = vmatprep.subr.mxu0 0.0
        %3569 = vmatpush1.xpose.msra.mxu0 0.0
        %3570 = vmatprep.subr.mxu0 0.0
        %3571 = vmatpush1.xpose.msra.mxu0 0.0
        %3572 = vmatprep.subr.mxu0 0.0
        %3573 = vmatpush1.xpose.msra.mxu0 0.0
        %3574 = vmatprep.subr.mxu0 0.0
        %3575 = vmatpush1.xpose.msra.mxu0 0.0
        %3576 = vmatprep.subr.mxu0 0.0
        %3577 = vmatpush1.xpose.msra.mxu0 0.0
        %3578 = vmatprep.subr.mxu0 0.0
        %3579 = vmatpush1.xpose.msra.mxu0 0.0
        %3580 = vmatprep.subr.mxu0 0.0
        %3581 = vmatpush1.xpose.msra.mxu0 0.0
        %3582 = vmatprep.subr.mxu0 0.0
        %3583 = vmatpush1.xpose.msra.mxu0 0.0
        %3584 = vmatprep.subr.mxu0 0.0
        %3585 = vmatpush1.xpose.msra.mxu0 0.0
        %3586 = vmatprep.subr.mxu0 0.0
        %3587 = vmatpush1.xpose.msra.mxu0 0.0
        %3588 = vmatprep.subr.mxu0 0.0
        %3589 = vmatpush1.xpose.msra.mxu0 0.0
        %3590 = vmatprep.subr.mxu0 0.0
        %3591 = vmatpush1.xpose.msra.mxu0 0.0
        %3592 = vmatprep.subr.mxu0 0.0
        %3593 = vmatpush1.xpose.msra.mxu0 0.0
        %3594 = vmatprep.subr.mxu0 0.0
        %3595 = vmatpush1.xpose.msra.mxu0 0.0
        %3596 = vmatprep.subr.mxu0 0.0
        %3597 = vmatpush1.xpose.msra.mxu0 0.0
        %3598 = vmatprep.subr.mxu0 0.0
        %3599 = vmatpush1.xpose.msra.mxu0 0.0
        %3600 = vmatprep.subr.mxu0 0.0
        %3601 = vmatpush1.xpose.msra.mxu0 0.0
        %3602 = vmatprep.mubr.f32.mxu0 0.0
        %3603 = vmatmul.mubr.f32.gmra.mrb[0].mxu0 %v3533
        %v3604 = vpop.f32.mrb[0].mxu0
        %v3605 = vadd.f32 0.0, %v3604
        %v3606 = vpop.f32.mrb[0].mxu0
        %3607 = vdwg.mxu0
        %v3608 = vmul.f32 %v3377, 0.35355338
        %v3609 = vmul.f32 %v3453, 0.35355338
        %v3610 = vmul.f32 %v3529, 0.35355338
        %v3611 = vmul.f32 %v3605, 0.35355338
        %v3612 = vadd.f32 %v3608, %v554
        %v3613 = vadd.f32 %v3609, %v554
        %v3614 = vadd.f32 %v3610, %v554
        %v3615 = vadd.f32 %v3611, %v554
        %v3616 = vsel %vm1471, %v3612, -inf
        %3617 = vmax.xlane.f32.xlu0 %v3616
        %v3618 = vpop.xlane.xlu0 %3617
        %v3619 = vsel %vm1471, %v3613, -inf
        %3620 = vmax.xlane.f32.xlu0 %v3619
        %v3621 = vpop.xlane.xlu0 %3620
        %v3622 = vsel %vm1471, %v3614, -inf
        %3623 = vmax.xlane.f32.xlu0 %v3622
        %v3624 = vpop.xlane.xlu0 %3623
        %v3625 = vsel %vm1471, %v3615, -inf
        %3626 = vmax.xlane.f32.xlu0 %v3625
        %v3627 = vpop.xlane.xlu0 %3626
        %v3628 = vsub.f32 %v3612, %v3618
        %v3629 = vsub.f32 %v3613, %v3621
        %v3630 = vsub.f32 %v3614, %v3624
        %v3631 = vsub.f32 %v3615, %v3627
        %v3632 = vmul.f32 %v3628, 1.442695
        %v3633 = vpow.pop %v3632
        %v3634 = vmul.f32 %v3629, 1.442695
        %v3635 = vpow.pop %v3634
        %v3636 = vmul.f32 %v3630, 1.442695
        %v3637 = vpow.pop %v3636
        %v3638 = vmul.f32 %v3631, 1.442695
        %v3639 = vpow.pop %v3638
        %v3640 = vsel %vm1471, %v3633, 0.0
        %3641 = vadd.xlane.f32.xlu0 %v3640
        %v3642 = vpop.xlane.xlu0 %3641
        %v3643 = vsel %vm1471, %v3635, 0.0
        %3644 = vadd.xlane.f32.xlu0 %v3643
        %v3645 = vpop.xlane.xlu0 %3644
        %v3646 = vsel %vm1471, %v3637, 0.0
        %3647 = vadd.xlane.f32.xlu0 %v3646
        %v3648 = vpop.xlane.xlu0 %3647
        %v3649 = vsel %vm1471, %v3639, 0.0
        %3650 = vadd.xlane.f32.xlu0 %v3649
        %v3651 = vpop.xlane.xlu0 %3650
        %v3652 = vrcp.pop %v3642
        %v3653 = vrcp.pop %v3645
        %v3654 = vrcp.pop %v3648
        %v3655 = vrcp.pop %v3651
        %v3656 = vmul.f32 %v3633, %v3652
        %v3657 = vmul.f32 %v3635, %v3653
        %v3658 = vmul.f32 %v3637, %v3654
        %v3659 = vmul.f32 %v3639, %v3655
        %v3661 = vsel %vm1471, %v3656, 0
        %3663 = vmatprep.subr.mxu0 0.0
        %3664 = vmatpush1.msra.mxu0 %v3091
        %3665 = vmatprep.subr.mxu0 0.0
        %3666 = vmatpush1.msra.mxu0 0.0
        %3667 = vmatprep.subr.mxu0 0.0
        %3668 = vmatpush1.msra.mxu0 0.0
        %3669 = vmatprep.subr.mxu0 0.0
        %3670 = vmatpush1.msra.mxu0 0.0
        %3671 = vmatprep.subr.mxu0 0.0
        %3672 = vmatpush1.msra.mxu0 0.0
        %3673 = vmatprep.subr.mxu0 0.0
        %3674 = vmatpush1.msra.mxu0 0.0
        %3675 = vmatprep.subr.mxu0 0.0
        %3676 = vmatpush1.msra.mxu0 0.0
        %3677 = vmatprep.subr.mxu0 0.0
        %3678 = vmatpush1.msra.mxu0 0.0
        %3679 = vmatprep.subr.mxu0 0.0
        %3680 = vmatpush1.msra.mxu0 0.0
        %3681 = vmatprep.subr.mxu0 0.0
        %3682 = vmatpush1.msra.mxu0 0.0
        %3683 = vmatprep.subr.mxu0 0.0
        %3684 = vmatpush1.msra.mxu0 0.0
        %3685 = vmatprep.subr.mxu0 0.0
        %3686 = vmatpush1.msra.mxu0 0.0
        %3687 = vmatprep.subr.mxu0 0.0
        %3688 = vmatpush1.msra.mxu0 0.0
        %3689 = vmatprep.subr.mxu0 0.0
        %3690 = vmatpush1.msra.mxu0 0.0
        %3691 = vmatprep.subr.mxu0 0.0
        %3692 = vmatpush1.msra.mxu0 0.0
        %3693 = vmatprep.subr.mxu0 0.0
        %3694 = vmatpush1.msra.mxu0 0.0
        %3695 = vmatprep.subr.mxu0 0.0
        %3696 = vmatpush1.msra.mxu0 0.0
        %3697 = vmatprep.subr.mxu0 0.0
        %3698 = vmatpush1.msra.mxu0 0.0
        %3699 = vmatprep.subr.mxu0 0.0
        %3700 = vmatpush1.msra.mxu0 0.0
        %3701 = vmatprep.subr.mxu0 0.0
        %3702 = vmatpush1.msra.mxu0 0.0
        %3703 = vmatprep.subr.mxu0 0.0
        %3704 = vmatpush1.msra.mxu0 0.0
        %3705 = vmatprep.subr.mxu0 0.0
        %3706 = vmatpush1.msra.mxu0 0.0
        %3707 = vmatprep.subr.mxu0 0.0
        %3708 = vmatpush1.msra.mxu0 0.0
        %3709 = vmatprep.subr.mxu0 0.0
        %3710 = vmatpush1.msra.mxu0 0.0
        %3711 = vmatprep.subr.mxu0 0.0
        %3712 = vmatpush1.msra.mxu0 0.0
        %3713 = vmatprep.subr.mxu0 0.0
        %3714 = vmatpush1.msra.mxu0 0.0
        %3715 = vmatprep.subr.mxu0 0.0
        %3716 = vmatpush1.msra.mxu0 0.0
        %3717 = vmatprep.subr.mxu0 0.0
        %3718 = vmatpush1.msra.mxu0 0.0
        %3719 = vmatprep.subr.mxu0 0.0
        %3720 = vmatpush1.msra.mxu0 0.0
        %3721 = vmatprep.subr.mxu0 0.0
        %3722 = vmatpush1.msra.mxu0 0.0
        %3723 = vmatprep.subr.mxu0 0.0
        %3724 = vmatpush1.msra.mxu0 0.0
        %3725 = vmatprep.subr.mxu0 0.0
        %3726 = vmatpush1.msra.mxu0 0.0
        %3727 = vmatprep.mubr.f32.mxu0 0.0
        %3728 = vmatmul.mubr.f32.gmra.mrb[0].mxu0 %v3661
        %v3729 = vpop.f32.mrb[0].mxu0
        %v3730 = vadd.f32 0.0, %v3729
        %v3731 = vpop.f32.mrb[0].mxu0
        %3732 = vdwg.mxu0
        %v3734 = vsel %vm1471, %v3657, 0
        %3736 = vmatprep.subr.mxu0 0.0
        %3737 = vmatpush1.msra.mxu0 %v3161
        %3738 = vmatprep.subr.mxu0 0.0
        %3739 = vmatpush1.msra.mxu0 0.0
        %3740 = vmatprep.subr.mxu0 0.0
        %3741 = vmatpush1.msra.mxu0 0.0
        %3742 = vmatprep.subr.mxu0 0.0
        %3743 = vmatpush1.msra.mxu0 0.0
        %3744 = vmatprep.subr.mxu0 0.0
        %3745 = vmatpush1.msra.mxu0 0.0
        %3746 = vmatprep.subr.mxu0 0.0
        %3747 = vmatpush1.msra.mxu0 0.0
        %3748 = vmatprep.subr.mxu0 0.0
        %3749 = vmatpush1.msra.mxu0 0.0
        %3750 = vmatprep.subr.mxu0 0.0
        %3751 = vmatpush1.msra.mxu0 0.0
        %3752 = vmatprep.subr.mxu0 0.0
        %3753 = vmatpush1.msra.mxu0 0.0
        %3754 = vmatprep.subr.mxu0 0.0
        %3755 = vmatpush1.msra.mxu0 0.0
        %3756 = vmatprep.subr.mxu0 0.0
        %3757 = vmatpush1.msra.mxu0 0.0
        %3758 = vmatprep.subr.mxu0 0.0
        %3759 = vmatpush1.msra.mxu0 0.0
        %3760 = vmatprep.subr.mxu0 0.0
        %3761 = vmatpush1.msra.mxu0 0.0
        %3762 = vmatprep.subr.mxu0 0.0
        %3763 = vmatpush1.msra.mxu0 0.0
        %3764 = vmatprep.subr.mxu0 0.0
        %3765 = vmatpush1.msra.mxu0 0.0
        %3766 = vmatprep.subr.mxu0 0.0
        %3767 = vmatpush1.msra.mxu0 0.0
        %3768 = vmatprep.subr.mxu0 0.0
        %3769 = vmatpush1.msra.mxu0 0.0
        %3770 = vmatprep.subr.mxu0 0.0
        %3771 = vmatpush1.msra.mxu0 0.0
        %3772 = vmatprep.subr.mxu0 0.0
        %3773 = vmatpush1.msra.mxu0 0.0
        %3774 = vmatprep.subr.mxu0 0.0
        %3775 = vmatpush1.msra.mxu0 0.0
        %3776 = vmatprep.subr.mxu0 0.0
        %3777 = vmatpush1.msra.mxu0 0.0
        %3778 = vmatprep.subr.mxu0 0.0
        %3779 = vmatpush1.msra.mxu0 0.0
        %3780 = vmatprep.subr.mxu0 0.0
        %3781 = vmatpush1.msra.mxu0 0.0
        %3782 = vmatprep.subr.mxu0 0.0
        %3783 = vmatpush1.msra.mxu0 0.0
        %3784 = vmatprep.subr.mxu0 0.0
        %3785 = vmatpush1.msra.mxu0 0.0
        %3786 = vmatprep.subr.mxu0 0.0
        %3787 = vmatpush1.msra.mxu0 0.0
        %3788 = vmatprep.subr.mxu0 0.0
        %3789 = vmatpush1.msra.mxu0 0.0
        %3790 = vmatprep.subr.mxu0 0.0
        %3791 = vmatpush1.msra.mxu0 0.0
        %3792 = vmatprep.subr.mxu0 0.0
        %3793 = vmatpush1.msra.mxu0 0.0
        %3794 = vmatprep.subr.mxu0 0.0
        %3795 = vmatpush1.msra.mxu0 0.0
        %3796 = vmatprep.subr.mxu0 0.0
        %3797 = vmatpush1.msra.mxu0 0.0
        %3798 = vmatprep.subr.mxu0 0.0
        %3799 = vmatpush1.msra.mxu0 0.0
        %3800 = vmatprep.mubr.f32.mxu0 0.0
        %3801 = vmatmul.mubr.f32.gmra.mrb[0].mxu0 %v3734
        %v3802 = vpop.f32.mrb[0].mxu0
        %v3803 = vadd.f32 0.0, %v3802
        %v3804 = vpop.f32.mrb[0].mxu0
        %3805 = vdwg.mxu0
        %v3807 = vsel %vm1471, %v3658, 0
        %3809 = vmatprep.subr.mxu0 0.0
        %3810 = vmatpush1.msra.mxu0 %v3231
        %3811 = vmatprep.subr.mxu0 0.0
        %3812 = vmatpush1.msra.mxu0 0.0
        %3813 = vmatprep.subr.mxu0 0.0
        %3814 = vmatpush1.msra.mxu0 0.0
        %3815 = vmatprep.subr.mxu0 0.0
        %3816 = vmatpush1.msra.mxu0 0.0
        %3817 = vmatprep.subr.mxu0 0.0
        %3818 = vmatpush1.msra.mxu0 0.0
        %3819 = vmatprep.subr.mxu0 0.0
        %3820 = vmatpush1.msra.mxu0 0.0
        %3821 = vmatprep.subr.mxu0 0.0
        %3822 = vmatpush1.msra.mxu0 0.0
        %3823 = vmatprep.subr.mxu0 0.0
        %3824 = vmatpush1.msra.mxu0 0.0
        %3825 = vmatprep.subr.mxu0 0.0
        %3826 = vmatpush1.msra.mxu0 0.0
        %3827 = vmatprep.subr.mxu0 0.0
        %3828 = vmatpush1.msra.mxu0 0.0
        %3829 = vmatprep.subr.mxu0 0.0
        %3830 = vmatpush1.msra.mxu0 0.0
        %3831 = vmatprep.subr.mxu0 0.0
        %3832 = vmatpush1.msra.mxu0 0.0
        %3833 = vmatprep.subr.mxu0 0.0
        %3834 = vmatpush1.msra.mxu0 0.0
        %3835 = vmatprep.subr.mxu0 0.0
        %3836 = vmatpush1.msra.mxu0 0.0
        %3837 = vmatprep.subr.mxu0 0.0
        %3838 = vmatpush1.msra.mxu0 0.0
        %3839 = vmatprep.subr.mxu0 0.0
        %3840 = vmatpush1.msra.mxu0 0.0
        %3841 = vmatprep.subr.mxu0 0.0
        %3842 = vmatpush1.msra.mxu0 0.0
        %3843 = vmatprep.subr.mxu0 0.0
        %3844 = vmatpush1.msra.mxu0 0.0
        %3845 = vmatprep.subr.mxu0 0.0
        %3846 = vmatpush1.msra.mxu0 0.0
        %3847 = vmatprep.subr.mxu0 0.0
        %3848 = vmatpush1.msra.mxu0 0.0
        %3849 = vmatprep.subr.mxu0 0.0
        %3850 = vmatpush1.msra.mxu0 0.0
        %3851 = vmatprep.subr.mxu0 0.0
        %3852 = vmatpush1.msra.mxu0 0.0
        %3853 = vmatprep.subr.mxu0 0.0
        %3854 = vmatpush1.msra.mxu0 0.0
        %3855 = vmatprep.subr.mxu0 0.0
        %3856 = vmatpush1.msra.mxu0 0.0
        %3857 = vmatprep.subr.mxu0 0.0
        %3858 = vmatpush1.msra.mxu0 0.0
        %3859 = vmatprep.subr.mxu0 0.0
        %3860 = vmatpush1.msra.mxu0 0.0
        %3861 = vmatprep.subr.mxu0 0.0
        %3862 = vmatpush1.msra.mxu0 0.0
        %3863 = vmatprep.subr.mxu0 0.0
        %3864 = vmatpush1.msra.mxu0 0.0
        %3865 = vmatprep.subr.mxu0 0.0
        %3866 = vmatpush1.msra.mxu0 0.0
        %3867 = vmatprep.subr.mxu0 0.0
        %3868 = vmatpush1.msra.mxu0 0.0
        %3869 = vmatprep.subr.mxu0 0.0
        %3870 = vmatpush1.msra.mxu0 0.0
        %3871 = vmatprep.subr.mxu0 0.0
        %3872 = vmatpush1.msra.mxu0 0.0
        %3873 = vmatprep.mubr.f32.mxu0 0.0
        %3874 = vmatmul.mubr.f32.gmra.mrb[0].mxu0 %v3807
        %v3875 = vpop.f32.mrb[0].mxu0
        %v3876 = vadd.f32 0.0, %v3875
        %v3877 = vpop.f32.mrb[0].mxu0
        %3878 = vdwg.mxu0
        %v3880 = vsel %vm1471, %v3659, 0
        %3882 = vmatprep.subr.mxu0 0.0
        %3883 = vmatpush1.msra.mxu0 %v3301
        %3884 = vmatprep.subr.mxu0 0.0
        %3885 = vmatpush1.msra.mxu0 0.0
        %3886 = vmatprep.subr.mxu0 0.0
        %3887 = vmatpush1.msra.mxu0 0.0
        %3888 = vmatprep.subr.mxu0 0.0
        %3889 = vmatpush1.msra.mxu0 0.0
        %3890 = vmatprep.subr.mxu0 0.0
        %3891 = vmatpush1.msra.mxu0 0.0
        %3892 = vmatprep.subr.mxu0 0.0
        %3893 = vmatpush1.msra.mxu0 0.0
        %3894 = vmatprep.subr.mxu0 0.0
        %3895 = vmatpush1.msra.mxu0 0.0
        %3896 = vmatprep.subr.mxu0 0.0
        %3897 = vmatpush1.msra.mxu0 0.0
        %3898 = vmatprep.subr.mxu0 0.0
        %3899 = vmatpush1.msra.mxu0 0.0
        %3900 = vmatprep.subr.mxu0 0.0
        %3901 = vmatpush1.msra.mxu0 0.0
        %3902 = vmatprep.subr.mxu0 0.0
        %3903 = vmatpush1.msra.mxu0 0.0
        %3904 = vmatprep.subr.mxu0 0.0
        %3905 = vmatpush1.msra.mxu0 0.0
        %3906 = vmatprep.subr.mxu0 0.0
        %3907 = vmatpush1.msra.mxu0 0.0
        %3908 = vmatprep.subr.mxu0 0.0
        %3909 = vmatpush1.msra.mxu0 0.0
        %3910 = vmatprep.subr.mxu0 0.0
        %3911 = vmatpush1.msra.mxu0 0.0
        %3912 = vmatprep.subr.mxu0 0.0
        %3913 = vmatpush1.msra.mxu0 0.0
        %3914 = vmatprep.subr.mxu0 0.0
        %3915 = vmatpush1.msra.mxu0 0.0
        %3916 = vmatprep.subr.mxu0 0.0
        %3917 = vmatpush1.msra.mxu0 0.0
        %3918 = vmatprep.subr.mxu0 0.0
        %3919 = vmatpush1.msra.mxu0 0.0
        %3920 = vmatprep.subr.mxu0 0.0
        %3921 = vmatpush1.msra.mxu0 0.0
        %3922 = vmatprep.subr.mxu0 0.0
        %3923 = vmatpush1.msra.mxu0 0.0
        %3924 = vmatprep.subr.mxu0 0.0
        %3925 = vmatpush1.msra.mxu0 0.0
        %3926 = vmatprep.subr.mxu0 0.0
        %3927 = vmatpush1.msra.mxu0 0.0
        %3928 = vmatprep.subr.mxu0 0.0
        %3929 = vmatpush1.msra.mxu0 0.0
        %3930 = vmatprep.subr.mxu0 0.0
        %3931 = vmatpush1.msra.mxu0 0.0
        %3932 = vmatprep.subr.mxu0 0.0
        %3933 = vmatpush1.msra.mxu0 0.0
        %3934 = vmatprep.subr.mxu0 0.0
        %3935 = vmatpush1.msra.mxu0 0.0
        %3936 = vmatprep.subr.mxu0 0.0
        %3937 = vmatpush1.msra.mxu0 0.0
        %3938 = vmatprep.subr.mxu0 0.0
        %3939 = vmatpush1.msra.mxu0 0.0
        %3940 = vmatprep.subr.mxu0 0.0
        %3941 = vmatpush1.msra.mxu0 0.0
        %3942 = vmatprep.subr.mxu0 0.0
        %3943 = vmatpush1.msra.mxu0 0.0
        %3944 = vmatprep.subr.mxu0 0.0
        %3945 = vmatpush1.msra.mxu0 0.0
        %3946 = vmatprep.mubr.f32.mxu0 0.0
        %3947 = vmatmul.mubr.f32.gmra.mrb[0].mxu0 %v3880
        %v3948 = vpop.f32.mrb[0].mxu0
        %v3949 = vadd.f32 0.0, %v3948
        %v3950 = vpop.f32.mrb[0].mxu0
        %3951 = vdwg.mxu0
        %v3953 = vsel %vm1471, %v3730, 0
        %3955 = vmatprep.subr.mxu0 0.0
        %3956 = vmatpush1.msra.mxu0 %v542
        %3957 = vmatprep.subr.mxu0 0.0
        %3958 = vmatpush1.msra.mxu0 0.0
        %3959 = vmatprep.subr.mxu0 0.0
        %3960 = vmatpush1.msra.mxu0 0.0
        %3961 = vmatprep.subr.mxu0 0.0
        %3962 = vmatpush1.msra.mxu0 0.0
        %3963 = vmatprep.subr.mxu0 0.0
        %3964 = vmatpush1.msra.mxu0 0.0
        %3965 = vmatprep.subr.mxu0 0.0
        %3966 = vmatpush1.msra.mxu0 0.0
        %3967 = vmatprep.subr.mxu0 0.0
        %3968 = vmatpush1.msra.mxu0 0.0
        %3969 = vmatprep.subr.mxu0 0.0
        %3970 = vmatpush1.msra.mxu0 0.0
        %3971 = vmatprep.subr.mxu0 0.0
        %3972 = vmatpush1.msra.mxu0 0.0
        %3973 = vmatprep.subr.mxu0 0.0
        %3974 = vmatpush1.msra.mxu0 0.0
        %3975 = vmatprep.subr.mxu0 0.0
        %3976 = vmatpush1.msra.mxu0 0.0
        %3977 = vmatprep.subr.mxu0 0.0
        %3978 = vmatpush1.msra.mxu0 0.0
        %3979 = vmatprep.subr.mxu0 0.0
        %3980 = vmatpush1.msra.mxu0 0.0
        %3981 = vmatprep.subr.mxu0 0.0
        %3982 = vmatpush1.msra.mxu0 0.0
        %3983 = vmatprep.subr.mxu0 0.0
        %3984 = vmatpush1.msra.mxu0 0.0
        %3985 = vmatprep.subr.mxu0 0.0
        %3986 = vmatpush1.msra.mxu0 0.0
        %3987 = vmatprep.subr.mxu0 0.0
        %3988 = vmatpush1.msra.mxu0 0.0
        %3989 = vmatprep.subr.mxu0 0.0
        %3990 = vmatpush1.msra.mxu0 0.0
        %3991 = vmatprep.subr.mxu0 0.0
        %3992 = vmatpush1.msra.mxu0 0.0
        %3993 = vmatprep.subr.mxu0 0.0
        %3994 = vmatpush1.msra.mxu0 0.0
        %3995 = vmatprep.subr.mxu0 0.0
        %3996 = vmatpush1.msra.mxu0 0.0
        %3997 = vmatprep.subr.mxu0 0.0
        %3998 = vmatpush1.msra.mxu0 0.0
        %3999 = vmatprep.subr.mxu0 0.0
        %4000 = vmatpush1.msra.mxu0 0.0
        %4001 = vmatprep.subr.mxu0 0.0
        %4002 = vmatpush1.msra.mxu0 0.0
        %4003 = vmatprep.subr.mxu0 0.0
        %4004 = vmatpush1.msra.mxu0 0.0
        %4005 = vmatprep.subr.mxu0 0.0
        %4006 = vmatpush1.msra.mxu0 0.0
        %4007 = vmatprep.subr.mxu0 0.0
        %4008 = vmatpush1.msra.mxu0 0.0
        %4009 = vmatprep.subr.mxu0 0.0
        %4010 = vmatpush1.msra.mxu0 0.0
        %4011 = vmatprep.subr.mxu0 0.0
        %4012 = vmatpush1.msra.mxu0 0.0
        %4013 = vmatprep.subr.mxu0 0.0
        %4014 = vmatpush1.msra.mxu0 0.0
        %4015 = vmatprep.subr.mxu0 0.0
        %4016 = vmatpush1.msra.mxu0 0.0
        %4017 = vmatprep.subr.mxu0 0.0
        %4018 = vmatpush1.msra.mxu0 0.0
        %4019 = vmatprep.mubr.f32.mxu0 0.0
        %4020 = vmatmul.mubr.f32.gmra.mrb[0].mxu0 %v3953
        %v4021 = vpop.f32.mrb[0].mxu0
        %v4022 = vadd.f32 0.0, %v4021
        %v4023 = vpop.f32.mrb[0].mxu0
        %4024 = vdwg.mxu0
        %v4026 = vsel %vm1471, %v3803, 0
        %4028 = vmatprep.subr.mxu0 0.0
        %4029 = vmatpush1.msra.mxu0 %v543
        %4030 = vmatprep.subr.mxu0 0.0
        %4031 = vmatpush1.msra.mxu0 0.0
        %4032 = vmatprep.subr.mxu0 0.0
        %4033 = vmatpush1.msra.mxu0 0.0
        %4034 = vmatprep.subr.mxu0 0.0
        %4035 = vmatpush1.msra.mxu0 0.0
        %4036 = vmatprep.subr.mxu0 0.0
        %4037 = vmatpush1.msra.mxu0 0.0
        %4038 = vmatprep.subr.mxu0 0.0
        %4039 = vmatpush1.msra.mxu0 0.0
        %4040 = vmatprep.subr.mxu0 0.0
        %4041 = vmatpush1.msra.mxu0 0.0
        %4042 = vmatprep.subr.mxu0 0.0
        %4043 = vmatpush1.msra.mxu0 0.0
        %4044 = vmatprep.subr.mxu0 0.0
        %4045 = vmatpush1.msra.mxu0 0.0
        %4046 = vmatprep.subr.mxu0 0.0
        %4047 = vmatpush1.msra.mxu0 0.0
        %4048 = vmatprep.subr.mxu0 0.0
        %4049 = vmatpush1.msra.mxu0 0.0
        %4050 = vmatprep.subr.mxu0 0.0
        %4051 = vmatpush1.msra.mxu0 0.0
        %4052 = vmatprep.subr.mxu0 0.0
        %4053 = vmatpush1.msra.mxu0 0.0
        %4054 = vmatprep.subr.mxu0 0.0
        %4055 = vmatpush1.msra.mxu0 0.0
        %4056 = vmatprep.subr.mxu0 0.0
        %4057 = vmatpush1.msra.mxu0 0.0
        %4058 = vmatprep.subr.mxu0 0.0
        %4059 = vmatpush1.msra.mxu0 0.0
        %4060 = vmatprep.subr.mxu0 0.0
        %4061 = vmatpush1.msra.mxu0 0.0
        %4062 = vmatprep.subr.mxu0 0.0
        %4063 = vmatpush1.msra.mxu0 0.0
        %4064 = vmatprep.subr.mxu0 0.0
        %4065 = vmatpush1.msra.mxu0 0.0
        %4066 = vmatprep.subr.mxu0 0.0
        %4067 = vmatpush1.msra.mxu0 0.0
        %4068 = vmatprep.subr.mxu0 0.0
        %4069 = vmatpush1.msra.mxu0 0.0
        %4070 = vmatprep.subr.mxu0 0.0
        %4071 = vmatpush1.msra.mxu0 0.0
        %4072 = vmatprep.subr.mxu0 0.0
        %4073 = vmatpush1.msra.mxu0 0.0
        %4074 = vmatprep.subr.mxu0 0.0
        %4075 = vmatpush1.msra.mxu0 0.0
        %4076 = vmatprep.subr.mxu0 0.0
        %4077 = vmatpush1.msra.mxu0 0.0
        %4078 = vmatprep.subr.mxu0 0.0
        %4079 = vmatpush1.msra.mxu0 0.0
        %4080 = vmatprep.subr.mxu0 0.0
        %4081 = vmatpush1.msra.mxu0 0.0
        %4082 = vmatprep.subr.mxu0 0.0
        %4083 = vmatpush1.msra.mxu0 0.0
        %4084 = vmatprep.subr.mxu0 0.0
        %4085 = vmatpush1.msra.mxu0 0.0
        %4086 = vmatprep.subr.mxu0 0.0
        %4087 = vmatpush1.msra.mxu0 0.0
        %4088 = vmatprep.subr.mxu0 0.0
        %4089 = vmatpush1.msra.mxu0 0.0
        %4090 = vmatprep.subr.mxu0 0.0
        %4091 = vmatpush1.msra.mxu0 0.0
        %4092 = vmatprep.mubr.f32.mxu0 0.0
        %4093 = vmatmul.mubr.f32.gmra.mrb[0].mxu0 %v4026
        %v4094 = vpop.f32.mrb[0].mxu0
        %v4095 = vadd.f32 0.0, %v4094
        %v4096 = vpop.f32.mrb[0].mxu0
        %4097 = vdwg.mxu0
        %v4099 = vsel %vm1471, %v3876, 0
        %4101 = vmatprep.subr.mxu0 0.0
        %4102 = vmatpush1.msra.mxu0 %v544
        %4103 = vmatprep.subr.mxu0 0.0
        %4104 = vmatpush1.msra.mxu0 0.0
        %4105 = vmatprep.subr.mxu0 0.0
        %4106 = vmatpush1.msra.mxu0 0.0
        %4107 = vmatprep.subr.mxu0 0.0
        %4108 = vmatpush1.msra.mxu0 0.0
        %4109 = vmatprep.subr.mxu0 0.0
        %4110 = vmatpush1.msra.mxu0 0.0
        %4111 = vmatprep.subr.mxu0 0.0
        %4112 = vmatpush1.msra.mxu0 0.0
        %4113 = vmatprep.subr.mxu0 0.0
        %4114 = vmatpush1.msra.mxu0 0.0
        %4115 = vmatprep.subr.mxu0 0.0
        %4116 = vmatpush1.msra.mxu0 0.0
        %4117 = vmatprep.subr.mxu0 0.0
        %4118 = vmatpush1.msra.mxu0 0.0
        %4119 = vmatprep.subr.mxu0 0.0
        %4120 = vmatpush1.msra.mxu0 0.0
        %4121 = vmatprep.subr.mxu0 0.0
        %4122 = vmatpush1.msra.mxu0 0.0
        %4123 = vmatprep.subr.mxu0 0.0
        %4124 = vmatpush1.msra.mxu0 0.0
        %4125 = vmatprep.subr.mxu0 0.0
        %4126 = vmatpush1.msra.mxu0 0.0
        %4127 = vmatprep.subr.mxu0 0.0
        %4128 = vmatpush1.msra.mxu0 0.0
        %4129 = vmatprep.subr.mxu0 0.0
        %4130 = vmatpush1.msra.mxu0 0.0
        %4131 = vmatprep.subr.mxu0 0.0
        %4132 = vmatpush1.msra.mxu0 0.0
        %4133 = vmatprep.subr.mxu0 0.0
        %4134 = vmatpush1.msra.mxu0 0.0
        %4135 = vmatprep.subr.mxu0 0.0
        %4136 = vmatpush1.msra.mxu0 0.0
        %4137 = vmatprep.subr.mxu0 0.0
        %4138 = vmatpush1.msra.mxu0 0.0
        %4139 = vmatprep.subr.mxu0 0.0
        %4140 = vmatpush1.msra.mxu0 0.0
        %4141 = vmatprep.subr.mxu0 0.0
        %4142 = vmatpush1.msra.mxu0 0.0
        %4143 = vmatprep.subr.mxu0 0.0
        %4144 = vmatpush1.msra.mxu0 0.0
        %4145 = vmatprep.subr.mxu0 0.0
        %4146 = vmatpush1.msra.mxu0 0.0
        %4147 = vmatprep.subr.mxu0 0.0
        %4148 = vmatpush1.msra.mxu0 0.0
        %4149 = vmatprep.subr.mxu0 0.0
        %4150 = vmatpush1.msra.mxu0 0.0
        %4151 = vmatprep.subr.mxu0 0.0
        %4152 = vmatpush1.msra.mxu0 0.0
        %4153 = vmatprep.subr.mxu0 0.0
        %4154 = vmatpush1.msra.mxu0 0.0
        %4155 = vmatprep.subr.mxu0 0.0
        %4156 = vmatpush1.msra.mxu0 0.0
        %4157 = vmatprep.subr.mxu0 0.0
        %4158 = vmatpush1.msra.mxu0 0.0
        %4159 = vmatprep.subr.mxu0 0.0
        %4160 = vmatpush1.msra.mxu0 0.0
        %4161 = vmatprep.subr.mxu0 0.0
        %4162 = vmatpush1.msra.mxu0 0.0
        %4163 = vmatprep.subr.mxu0 0.0
        %4164 = vmatpush1.msra.mxu0 0.0
        %4165 = vmatprep.mubr.f32.mxu0 0.0
        %4166 = vmatmul.mubr.f32.gmra.mrb[0].mxu0 %v4099
        %v4167 = vpop.f32.mrb[0].mxu0
        %v4168 = vadd.f32 0.0, %v4167
        %v4169 = vpop.f32.mrb[0].mxu0
        %4170 = vdwg.mxu0
        %v4172 = vsel %vm1471, %v3949, 0
        %4174 = vmatprep.subr.mxu0 0.0
        %4175 = vmatpush1.msra.mxu0 %v545
        %4176 = vmatprep.subr.mxu0 0.0
        %4177 = vmatpush1.msra.mxu0 0.0
        %4178 = vmatprep.subr.mxu0 0.0
        %4179 = vmatpush1.msra.mxu0 0.0
        %4180 = vmatprep.subr.mxu0 0.0
        %4181 = vmatpush1.msra.mxu0 0.0
        %4182 = vmatprep.subr.mxu0 0.0
        %4183 = vmatpush1.msra.mxu0 0.0
        %4184 = vmatprep.subr.mxu0 0.0
        %4185 = vmatpush1.msra.mxu0 0.0
        %4186 = vmatprep.subr.mxu0 0.0
        %4187 = vmatpush1.msra.mxu0 0.0
        %4188 = vmatprep.subr.mxu0 0.0
        %4189 = vmatpush1.msra.mxu0 0.0
        %4190 = vmatprep.subr.mxu0 0.0
        %4191 = vmatpush1.msra.mxu0 0.0
        %4192 = vmatprep.subr.mxu0 0.0
        %4193 = vmatpush1.msra.mxu0 0.0
        %4194 = vmatprep.subr.mxu0 0.0
        %4195 = vmatpush1.msra.mxu0 0.0
        %4196 = vmatprep.subr.mxu0 0.0
        %4197 = vmatpush1.msra.mxu0 0.0
        %4198 = vmatprep.subr.mxu0 0.0
        %4199 = vmatpush1.msra.mxu0 0.0
        %4200 = vmatprep.subr.mxu0 0.0
        %4201 = vmatpush1.msra.mxu0 0.0
        %4202 = vmatprep.subr.mxu0 0.0
        %4203 = vmatpush1.msra.mxu0 0.0
        %4204 = vmatprep.subr.mxu0 0.0
        %4205 = vmatpush1.msra.mxu0 0.0
        %4206 = vmatprep.subr.mxu0 0.0
        %4207 = vmatpush1.msra.mxu0 0.0
        %4208 = vmatprep.subr.mxu0 0.0
        %4209 = vmatpush1.msra.mxu0 0.0
        %4210 = vmatprep.subr.mxu0 0.0
        %4211 = vmatpush1.msra.mxu0 0.0
        %4212 = vmatprep.subr.mxu0 0.0
        %4213 = vmatpush1.msra.mxu0 0.0
        %4214 = vmatprep.subr.mxu0 0.0
        %4215 = vmatpush1.msra.mxu0 0.0
        %4216 = vmatprep.subr.mxu0 0.0
        %4217 = vmatpush1.msra.mxu0 0.0
        %4218 = vmatprep.subr.mxu0 0.0
        %4219 = vmatpush1.msra.mxu0 0.0
        %4220 = vmatprep.subr.mxu0 0.0
        %4221 = vmatpush1.msra.mxu0 0.0
        %4222 = vmatprep.subr.mxu0 0.0
        %4223 = vmatpush1.msra.mxu0 0.0
        %4224 = vmatprep.subr.mxu0 0.0
        %4225 = vmatpush1.msra.mxu0 0.0
        %4226 = vmatprep.subr.mxu0 0.0
        %4227 = vmatpush1.msra.mxu0 0.0
        %4228 = vmatprep.subr.mxu0 0.0
        %4229 = vmatpush1.msra.mxu0 0.0
        %4230 = vmatprep.subr.mxu0 0.0
        %4231 = vmatpush1.msra.mxu0 0.0
        %4232 = vmatprep.subr.mxu0 0.0
        %4233 = vmatpush1.msra.mxu0 0.0
        %4234 = vmatprep.subr.mxu0 0.0
        %4235 = vmatpush1.msra.mxu0 0.0
        %4236 = vmatprep.subr.mxu0 0.0
        %4237 = vmatpush1.msra.mxu0 0.0
        %4238 = vmatprep.mubr.f32.mxu0 0.0
        %4239 = vmatmul.mubr.f32.gmra.mrb[0].mxu0 %v4172
        %v4240 = vpop.f32.mrb[0].mxu0
        %v4241 = vadd.f32 0.0, %v4240
        %v4242 = vpop.f32.mrb[0].mxu0
        %4243 = vdwg.mxu0
        %v4244 = vsel %vm579, %v4022, 0.0
        %v4245 = vsel %vm579, %v4095, 0.0
        %v4246 = vadd.f32 %v4244, %v4245
        %v4247 = vsel %vm579, %v4168, 0.0
        %v4248 = vadd.f32 %v4246, %v4247
        %v4249 = vsel %vm579, %v4241, 0.0
        %v4250 = vadd.f32 %v4248, %v4249
        %v4251 = vadd.f32 %v4250, %v2423
        %v4252 = vadd.f32 %v4251, %v2457
        %v4253 = vsel %vm579, %v4252, 0.0
        %4254 = vadd.xlane.f32.xlu0 %v4253
        %v4255 = vpop.xlane.xlu0 %4254
        %v4256 = vrot.slane %v4255, 4
        %v4257 = vadd.f32 %v4255, %v4256
        %v4258 = vrot.slane %v4257, 2
        %v4259 = vadd.f32 %v4257, %v4258
        %v4260 = vrot.slane %v4259, 1
        %v4261 = vadd.f32 %v4259, %v4260
        %s4262 = vtos %v4261
        %v4263 = vstv %s4262
        %v4264 = vmul.f32 %v4263, 0.00390625
        %v4265 = vmul.f32 %v4252, %v4252
        %v4266 = vsel %vm579, %v4265, 0.0
        %4267 = vadd.xlane.f32.xlu0 %v4266
        %v4268 = vpop.xlane.xlu0 %4267
        %v4269 = vrot.slane %v4268, 4
        %v4270 = vadd.f32 %v4268, %v4269
        %v4271 = vrot.slane %v4270, 2
        %v4272 = vadd.f32 %v4270, %v4271
        %v4273 = vrot.slane %v4272, 1
        %v4274 = vadd.f32 %v4272, %v4273
        %s4275 = vtos %v4274
        %v4276 = vstv %s4275
        %v4277 = vmul.f32 %v4276, 0.00390625
        %v4278 = vmul.f32 %v4264, %v4264
        %v4279 = vsub.f32 %v4277, %v4278
        %v4280 = vsub.f32 %v4252, %v4264
        %v4281 = vadd.f32 %v4279, 1e-05
        %v4282 = vrsqrt.pop %v4281
        %v4283 = vmul.f32 %v4280, %v4282
        %v4284 = vld [vmem:[%s10] sm:$0xff]
        %v4285 = vld [vmem:[%s10 + $0x8] sm:$0xff]
        %v4286 = vld [vmem:[%s10 + $0x10] sm:$0xff]
        %v4287 = vld [vmem:[%s10 + $0x18] sm:$0xff]
        %v4288 = vld [vmem:[%s11] sm:$0x1]
        %v4290 = vlaneseq
        %v4291 = vshrl.u32 %v4290, 7
        %v4292 = vsub.s32 0, %v4291
        %v4293 = vrot.slane %v4288, %v4292
        %v4296 = vsel %vm579, %v4283, 0
        %4298 = vmatprep.subr.mxu0 0.0
        %4299 = vmatpush1.msra.mxu0 %v4284
        %4300 = vmatprep.subr.mxu0 0.0
        %4301 = vmatpush1.msra.mxu0 %v4285
        %4302 = vmatprep.subr.mxu0 0.0
        %4303 = vmatpush1.msra.mxu0 %v4286
        %4304 = vmatprep.subr.mxu0 0.0
        %4305 = vmatpush1.msra.mxu0 %v4287
        %4306 = vmatprep.subr.mxu0 0.0
        %4307 = vmatpush1.msra.mxu0 0.0
        %4308 = vmatprep.subr.mxu0 0.0
        %4309 = vmatpush1.msra.mxu0 0.0
        %4310 = vmatprep.subr.mxu0 0.0
        %4311 = vmatpush1.msra.mxu0 0.0
        %4312 = vmatprep.subr.mxu0 0.0
        %4313 = vmatpush1.msra.mxu0 0.0
        %4314 = vmatprep.subr.mxu0 0.0
        %4315 = vmatpush1.msra.mxu0 0.0
        %4316 = vmatprep.subr.mxu0 0.0
        %4317 = vmatpush1.msra.mxu0 0.0
        %4318 = vmatprep.subr.mxu0 0.0
        %4319 = vmatpush1.msra.mxu0 0.0
        %4320 = vmatprep.subr.mxu0 0.0
        %4321 = vmatpush1.msra.mxu0 0.0
        %4322 = vmatprep.subr.mxu0 0.0
        %4323 = vmatpush1.msra.mxu0 0.0
        %4324 = vmatprep.subr.mxu0 0.0
        %4325 = vmatpush1.msra.mxu0 0.0
        %4326 = vmatprep.subr.mxu0 0.0
        %4327 = vmatpush1.msra.mxu0 0.0
        %4328 = vmatprep.subr.mxu0 0.0
        %4329 = vmatpush1.msra.mxu0 0.0
        %4330 = vmatprep.subr.mxu0 0.0
        %4331 = vmatpush1.msra.mxu0 0.0
        %4332 = vmatprep.subr.mxu0 0.0
        %4333 = vmatpush1.msra.mxu0 0.0
        %4334 = vmatprep.subr.mxu0 0.0
        %4335 = vmatpush1.msra.mxu0 0.0
        %4336 = vmatprep.subr.mxu0 0.0
        %4337 = vmatpush1.msra.mxu0 0.0
        %4338 = vmatprep.subr.mxu0 0.0
        %4339 = vmatpush1.msra.mxu0 0.0
        %4340 = vmatprep.subr.mxu0 0.0
        %4341 = vmatpush1.msra.mxu0 0.0
        %4342 = vmatprep.subr.mxu0 0.0
        %4343 = vmatpush1.msra.mxu0 0.0
        %4344 = vmatprep.subr.mxu0 0.0
        %4345 = vmatpush1.msra.mxu0 0.0
        %4346 = vmatprep.subr.mxu0 0.0
        %4347 = vmatpush1.msra.mxu0 0.0
        %4348 = vmatprep.subr.mxu0 0.0
        %4349 = vmatpush1.msra.mxu0 0.0
        %4350 = vmatprep.subr.mxu0 0.0
        %4351 = vmatpush1.msra.mxu0 0.0
        %4352 = vmatprep.subr.mxu0 0.0
        %4353 = vmatpush1.msra.mxu0 0.0
        %4354 = vmatprep.subr.mxu0 0.0
        %4355 = vmatpush1.msra.mxu0 0.0
        %4356 = vmatprep.subr.mxu0 0.0
        %4357 = vmatpush1.msra.mxu0 0.0
        %4358 = vmatprep.subr.mxu0 0.0
        %4359 = vmatpush1.msra.mxu0 0.0
        %4360 = vmatprep.subr.mxu0 0.0
        %4361 = vmatpush1.msra.mxu0 0.0
        %4362 = vmatprep.mubr.f32.mxu0 0.0
        %4363 = vmatmul.mubr.f32.gmra.mrb[0].mxu0 %v4296
        %v4364 = vpop.f32.mrb[0].mxu0
        %v4365 = vadd.f32 %v4293, %v4364
        %v4366 = vpop.f32.mrb[0].mxu0
        %4367 = vdwg.mxu0
        %v4368 = vmax.f32 %v4365, 0.0
        %v4369 = vld [vmem:[%s12] sm:$0xff]
        %v4370 = vld [vmem:[%s12 + $0x8] sm:$0xff]
        %v4371 = vld [vmem:[%s12 + $0x10] sm:$0xff]
        %v4372 = vld [vmem:[%s12 + $0x18] sm:$0xff]
        %v4373 = vld [vmem:[%s12 + $0x20] sm:$0xff]
        %v4374 = vld [vmem:[%s12 + $0x28] sm:$0xff]
        %v4375 = vld [vmem:[%s12 + $0x30] sm:$0xff]
        %v4376 = vld [vmem:[%s12 + $0x38] sm:$0xff]
        %v4377 = vld [vmem:[%s12 + $0x40] sm:$0xff]
        %v4378 = vld [vmem:[%s12 + $0x48] sm:$0xff]
        %v4379 = vld [vmem:[%s12 + $0x50] sm:$0xff]
        %v4380 = vld [vmem:[%s12 + $0x58] sm:$0xff]
        %v4381 = vld [vmem:[%s12 + $0x60] sm:$0xff]
        %v4382 = vld [vmem:[%s12 + $0x68] sm:$0xff]
        %v4383 = vld [vmem:[%s12 + $0x70] sm:$0xff]
        %v4384 = vld [vmem:[%s12 + $0x78] sm:$0xff]
        %v4385 = vld [vmem:[%s13] sm:$0x1]
        %v4387 = vlaneseq
        %v4388 = vshrl.u32 %v4387, 7
        %v4389 = vsub.s32 0, %v4388
        %v4390 = vrot.slane %v4385, %v4389
        %4392 = vmatprep.subr.mxu0 0.0
        %4393 = vmatpush1.msra.mxu0 %v4369
        %4394 = vmatprep.subr.mxu0 0.0
        %4395 = vmatpush1.msra.mxu0 %v4370
        %4396 = vmatprep.subr.mxu0 0.0
        %4397 = vmatpush1.msra.mxu0 %v4371
        %4398 = vmatprep.subr.mxu0 0.0
        %4399 = vmatpush1.msra.mxu0 %v4372
        %4400 = vmatprep.subr.mxu0 0.0
        %4401 = vmatpush1.msra.mxu0 %v4373
        %4402 = vmatprep.subr.mxu0 0.0
        %4403 = vmatpush1.msra.mxu0 %v4374
        %4404 = vmatprep.subr.mxu0 0.0
        %4405 = vmatpush1.msra.mxu0 %v4375
        %4406 = vmatprep.subr.mxu0 0.0
        %4407 = vmatpush1.msra.mxu0 %v4376
        %4408 = vmatprep.subr.mxu0 0.0
        %4409 = vmatpush1.msra.mxu0 %v4377
        %4410 = vmatprep.subr.mxu0 0.0
        %4411 = vmatpush1.msra.mxu0 %v4378
        %4412 = vmatprep.subr.mxu0 0.0
        %4413 = vmatpush1.msra.mxu0 %v4379
        %4414 = vmatprep.subr.mxu0 0.0
        %4415 = vmatpush1.msra.mxu0 %v4380
        %4416 = vmatprep.subr.mxu0 0.0
        %4417 = vmatpush1.msra.mxu0 %v4381
        %4418 = vmatprep.subr.mxu0 0.0
        %4419 = vmatpush1.msra.mxu0 %v4382
        %4420 = vmatprep.subr.mxu0 0.0
        %4421 = vmatpush1.msra.mxu0 %v4383
        %4422 = vmatprep.subr.mxu0 0.0
        %4423 = vmatpush1.msra.mxu0 %v4384
        %4424 = vmatprep.subr.mxu0 0.0
        %4425 = vmatpush1.msra.mxu0 0.0
        %4426 = vmatprep.subr.mxu0 0.0
        %4427 = vmatpush1.msra.mxu0 0.0
        %4428 = vmatprep.subr.mxu0 0.0
        %4429 = vmatpush1.msra.mxu0 0.0
        %4430 = vmatprep.subr.mxu0 0.0
        %4431 = vmatpush1.msra.mxu0 0.0
        %4432 = vmatprep.subr.mxu0 0.0
        %4433 = vmatpush1.msra.mxu0 0.0
        %4434 = vmatprep.subr.mxu0 0.0
        %4435 = vmatpush1.msra.mxu0 0.0
        %4436 = vmatprep.subr.mxu0 0.0
        %4437 = vmatpush1.msra.mxu0 0.0
        %4438 = vmatprep.subr.mxu0 0.0
        %4439 = vmatpush1.msra.mxu0 0.0
        %4440 = vmatprep.subr.mxu0 0.0
        %4441 = vmatpush1.msra.mxu0 0.0
        %4442 = vmatprep.subr.mxu0 0.0
        %4443 = vmatpush1.msra.mxu0 0.0
        %4444 = vmatprep.subr.mxu0 0.0
        %4445 = vmatpush1.msra.mxu0 0.0
        %4446 = vmatprep.subr.mxu0 0.0
        %4447 = vmatpush1.msra.mxu0 0.0
        %4448 = vmatprep.subr.mxu0 0.0
        %4449 = vmatpush1.msra.mxu0 0.0
        %4450 = vmatprep.subr.mxu0 0.0
        %4451 = vmatpush1.msra.mxu0 0.0
        %4452 = vmatprep.subr.mxu0 0.0
        %4453 = vmatpush1.msra.mxu0 0.0
        %4454 = vmatprep.subr.mxu0 0.0
        %4455 = vmatpush1.msra.mxu0 0.0
        %4456 = vmatprep.mubr.f32.mxu0 0.0
        %4457 = vmatmul.mubr.f32.gmra.mrb[0].mxu0 %v4368
        %v4458 = vpop.f32.mrb[0].mxu0
        %v4459 = vadd.f32 %v4390, %v4458
        %v4460 = vpop.f32.mrb[0].mxu0
        %4461 = vdwg.mxu0
        %v4462 = vadd.f32 %v4459, %v4283
        %v4463 = vsel %vm579, %v4462, 0.0
        %4464 = vadd.xlane.f32.xlu0 %v4463
        %v4465 = vpop.xlane.xlu0 %4464
        %v4466 = vrot.slane %v4465, 4
        %v4467 = vadd.f32 %v4465, %v4466
        %v4468 = vrot.slane %v4467, 2
        %v4469 = vadd.f32 %v4467, %v4468
        %v4470 = vrot.slane %v4469, 1
        %v4471 = vadd.f32 %v4469, %v4470
        %s4472 = vtos %v4471
        %v4473 = vstv %s4472
        %v4474 = vmul.f32 %v4473, 0.00390625
        %v4475 = vmul.f32 %v4462, %v4462
        %v4476 = vsel %vm579, %v4475, 0.0
        %4477 = vadd.xlane.f32.xlu0 %v4476
        %v4478 = vpop.xlane.xlu0 %4477
        %v4479 = vrot.slane %v4478, 4
        %v4480 = vadd.f32 %v4478, %v4479
        %v4481 = vrot.slane %v4480, 2
        %v4482 = vadd.f32 %v4480, %v4481
        %v4483 = vrot.slane %v4482, 1
        %v4484 = vadd.f32 %v4482, %v4483
        %s4485 = vtos %v4484
        %v4486 = vstv %s4485
        %v4487 = vmul.f32 %v4486, 0.00390625
        %v4488 = vmul.f32 %v4474, %v4474
        %v4489 = vsub.f32 %v4487, %v4488
        %v4490 = vsub.f32 %v4462, %v4474
        %v4491 = vadd.f32 %v4489, 1e-05
        %v4492 = vrsqrt.pop %v4491
        %v4493 = vmul.f32 %v4490, %v4492
        %4494 = vst.msk [vmem:[%s471] sm:$0xff] %vm579, %v4493
        %s4495 = sand.u32 %s340, 1
        %s4496 = scalar_lea.sflag [#allocation3], %s4495
        %s4497 = sand.u32 %s340, 1
        %s4498 = smul.addr %s4497, 8
        %s4499 = scalar_lea.vmem [#allocation2], %s4498
        // Predicated region
        $region77: #{tpu_custom_call.1} parent=75 // pred_check
          %p4500 = pneg %p350
        $region78: #{tpu_custom_call.1} parent=75 // pred_check_branch
          %4502 = sbr.rel (%p4500) target = $region80
        $region79: #{tpu_custom_call.1} parent=75 // pred_region
          %s4504 = ssub.s32 128, 128
          %4505 = vsyncadd %s4496, %s4504
          %s4506 = smul.addr %s28, 128
          %s4507 = scalar_lea.hbm %s14, %s4506
          %s4509 = sshll.u32 %s4499, 4
          %s4510 = int_to_ptr.vmem [resolvable:$true] %s4509
          %4512 = dma.vmem_to_hbm [thread:$0]  %s4510, 128, %s4507, %s4496
        $region80: #{tpu_custom_call.1} parent=75 // pred_fallthru
          _
      $region76: #{tpu_custom_call.1} parent=5 // pred_fallthru
        _
      %p4513 = scmp.le.s32.totalorder 2, %s23
      // Predicated region
      $region81: #{tpu_custom_call.1} parent=5 // pred_check
        %p4514 = pneg %p4513
      $region82: #{tpu_custom_call.1} parent=5 // pred_check_branch
        %4516 = sbr.rel (%p4514) target = $region84
      $region83: #{tpu_custom_call.1} parent=5 // pred_region
        %s4517 = ssub.s32 %s23, 2
        // Predicated region
        $region85: #{tpu_custom_call.1} parent=83 // pred_check
          %p4518 = pneg %p356
        $region86: #{tpu_custom_call.1} parent=83 // pred_check_branch
          %4520 = sbr.rel (%p4518) target = $region88
        $region87: #{tpu_custom_call.1} parent=83 // pred_region
          %s4521 = sand.u32 %s341, 1
          %s4522 = scalar_lea.sflag [#allocation3], %s4521
          %s4523 = sand.u32 %s341, 1
          %s4524 = smul.addr %s4523, 8
          %s4525 = scalar_lea.vmem [#allocation2], %s4524
          %4526 = dma.done %s4522, 128
        $region88: #{tpu_custom_call.1} parent=83 // pred_fallthru
          _
      $region84: #{tpu_custom_call.1} parent=5 // pred_fallthru
        _
    $region6: #{tpu_custom_call.1} parent=1 // loop_footer
      %s27 = sadd.s32 1, %s23
    $region7: #{tpu_custom_call.1} parent=1 // loop_footer_branch
      %22 = sbr.rel target = $region3
    $region8: #{tpu_custom_call.1} parent=1 // loop_exit
      _
    %4527 = vsyncpa [#allocation3], 1
    %s4528 = scalar_lea.sflag [#allocation3], 1
    %4529 = vsyncpa %s4528, 1

</llo_original>
